<compile_context>
chip_gen: v5e
topology: v5e:2x2
jax: 0.10.0
libtpu: 0.0.40
codegen_flags: <defaults>
</compile_context>

<pallas_src>
import functools

import jax
import jax.numpy as jnp
from jax import lax
from jax.experimental import pallas as pl
from jax.experimental.pallas import tpu as pltpu

NEG_SLOPE_ELU = 0.01   # AGAIN.elu = nn.LeakyReLU(0.01)
NEG_SLOPE_ATT = 0.2    # GAT-style leaky relu inside SparseConv attention
BN_EPS = 1e-5          # nn.BatchNorm1d default eps (training-mode batch stats)


def _vmem(n):
    return [pl.BlockSpec(memory_space=pltpu.MemorySpace.VMEM) for _ in range(n)]


# ---------------------------------------------------------------------------
# Single fused kernel: sparseConv1 -> fc1/elu/res/bn1 -> fc2/elu/res/bn2
#                      -> sparseConv2 -> fc3/elu/res/bn3 -> fc4/elu/res/bn4
#                      -> fc5 head.
# ---------------------------------------------------------------------------
def _again_kernel(x_ref, adj_ref,
                  wad1_ref, was1_ref, wf1_ref,
                  wad2_ref, was2_ref, wf2_ref,
                  fc2w_ref, fc4w_ref, fc5w_ref, b_ref,
                  y_ref,
                  *, heads, out_c, threshold, scale, sparse_train):
    x = x_ref[...]                           # [N, C]
    mask = adj_ref[...] > 0.0                # hoisted once, reused by both convs
    neg_big = jnp.float32(-1e30)

    def sparse_conv_fc(x_in, wad_ref, was_ref, wf_ref):
        """Folded multi-head attention + following linear layer.

        Returns fc(concat_h att_h @ (x_in @ w_h)) == sum_h att_h @ (x_in @ WF_h)
        with WF_h = w_h @ fc_w_h folded on the wrapper side, so neither z_h nor
        the [N, H*O] concat is ever materialized.
        """
        # Scores for every head at once (K = C matmuls on the MXU).
        s_dst = jnp.dot(x_in, wad_ref[...],
                        preferred_element_type=jnp.float32)            # [N, H]
        s_src = lax.dot_general(was_ref[...], x_in,
                                (((1,), (1,)), ((), ())),
                                preferred_element_type=jnp.float32)    # [H, N]
        # Folded (projection @ fc) features, independent of the softmax chain.
        xf = jnp.dot(x_in, wf_ref[...],
                     preferred_element_type=jnp.float32)               # [N, H*C]
        acc = None
        for h in range(heads):               # static unroll
            e = s_dst[:, h:h + 1] + s_src[h:h + 1, :]   # e[i,j] = dst_i + src_j
            e = jnp.where(e > 0, e, NEG_SLOPE_ATT * e) * scale
            e = jnp.where(mask, e, neg_big)
            e = e - jnp.max(e, axis=-1, keepdims=True)
            p = jnp.where(mask, jnp.exp(e), 0.0)
            denom = jnp.maximum(jnp.sum(p, axis=-1, keepdims=True), 1e-16)
            att = p / denom                              # softmax over neighbors
            if sparse_train:
                att = jnp.where(att < threshold, 0.0, att)   # sparsify small weights
            contrib = jnp.dot(att, xf[:, h * out_c:(h + 1) * out_c],
                              preferred_element_type=jnp.float32)      # [N, C]
            acc = contrib if acc is None else acc + contrib
        return acc

    def elu_res_bn(h, res):
        h = jnp.where(h > 0, h, NEG_SLOPE_ELU * h)       # LeakyReLU(0.01)
        h = h + res                                      # += x (residual)
        mean = jnp.mean(h, axis=0, keepdims=True)
        var = jnp.maximum(jnp.mean(h * h, axis=0, keepdims=True) - mean * mean,
                          0.0)                           # one-pass biased var
        return (h - mean) * lax.rsqrt(var + BN_EPS)

    # sparseConv1 -> fc1 -> elu -> +x -> bn1
    h1 = sparse_conv_fc(x, wad1_ref, was1_ref, wf1_ref) + b_ref[0:1, :]
    h1 = elu_res_bn(h1, x)
    # fc2 -> elu -> +x -> bn2
    h2 = jnp.dot(h1, fc2w_ref[...], preferred_element_type=jnp.float32) + b_ref[1:2, :]
    h2 = elu_res_bn(h2, x)
    # sparseConv2 -> fc3 -> elu -> +x -> bn3
    h3 = sparse_conv_fc(h2, wad2_ref, was2_ref, wf2_ref) + b_ref[2:3, :]
    h3 = elu_res_bn(h3, x)
    # fc4 -> elu -> +x -> bn4
    h4 = jnp.dot(h3, fc4w_ref[...], preferred_element_type=jnp.float32) + b_ref[3:4, :]
    h4 = elu_res_bn(h4, x)
    # fc5 head (folded into the same kernel — no separate launch)
    y_ref[...] = (jnp.dot(h4, fc5w_ref[...], preferred_element_type=jnp.float32)
                  + b_ref[4:5, 0:1])


def again_fused(x, adj, params, *, heads, h1_dim, h2_dim, threshold, scale,
                sparse_train):
    n, c = x.shape
    # --- Wrapper-side algebraic folding (layout plumbing, done once) ---------
    w1 = params["w1"].reshape(c, heads, h1_dim).transpose(1, 0, 2)    # [H,C,O1]
    w2 = params["w2"].reshape(c, heads, h2_dim).transpose(1, 0, 2)    # [H,C,O2]
    fc1w = params["fc1_w"].reshape(heads, h1_dim, c)                  # [H,O1,C]
    fc3w = params["fc3_w"].reshape(heads, h2_dim, c)                  # [H,O2,C]

    wad1 = jnp.einsum("hco,ho->ch", w1, params["a1_dst"])             # [C, H]
    was1 = jnp.einsum("hco,ho->hc", w1, params["a1_src"])             # [H, C]
    wf1 = jnp.einsum("hco,hod->chd", w1, fc1w).reshape(c, heads * c)  # [C, H*C]
    wad2 = jnp.einsum("hco,ho->ch", w2, params["a2_dst"])
    was2 = jnp.einsum("hco,ho->hc", w2, params["a2_src"])
    wf2 = jnp.einsum("hco,hod->chd", w2, fc3w).reshape(c, heads * c)

    b_all = jnp.concatenate(
        [params["fc1_b"], params["fc2_b"], params["fc3_b"], params["fc4_b"],
         jnp.broadcast_to(params["fc5_b"], (1, c))], axis=0)          # [5, C]

    kern = functools.partial(_again_kernel, heads=heads, out_c=c,
                             threshold=threshold, scale=scale,
                             sparse_train=sparse_train)
    y = pl.pallas_call(
        kern,
        out_shape=jax.ShapeDtypeStruct((n, 1), jnp.float32),
        in_specs=_vmem(12),
        out_specs=pl.BlockSpec(memory_space=pltpu.MemorySpace.VMEM),
    )(x, adj,
      wad1, was1, wf1,
      wad2, was2, wf2,
      params["fc2_w"], params["fc4_w"], params["fc5_w"], b_all)
    return y


# ---------------------------------------------------------------------------
# AGAIN forward
# ---------------------------------------------------------------------------
def again_forward(x, edge_index, edge_attr, params, *, heads, h1_dim, h2_dim,
                  threshold, scale, sparse_train=True):
    del edge_attr  # edge_dim=None in the module defaults -> edge features unused
    n = x.shape[0]
    # dense adjacency: adj[i, j] = 1 if there is an edge j -> i
    src, dst = edge_index[0], edge_index[1]
    adj = jnp.zeros((n, n), jnp.float32).at[dst, src].set(1.0)
    y = again_fused(x, adj, params, heads=heads, h1_dim=h1_dim, h2_dim=h2_dim,
                    threshold=threshold, scale=scale, sparse_train=sparse_train)
    return y.reshape(-1)                                              # .flatten()


def init_params(key, in_dim, h1_dim, h2_dim, heads):
    ks = jax.random.split(key, 16)
    s = 0.1
    p = {
        "w1":     s * jax.random.normal(ks[0], (in_dim, heads * h1_dim), jnp.float32),
        "a1_src": s * jax.random.normal(ks[1], (heads, h1_dim), jnp.float32),
        "a1_dst": s * jax.random.normal(ks[2], (heads, h1_dim), jnp.float32),
        "w2":     s * jax.random.normal(ks[3], (in_dim, heads * h2_dim), jnp.float32),
        "a2_src": s * jax.random.normal(ks[4], (heads, h2_dim), jnp.float32),
        "a2_dst": s * jax.random.normal(ks[5], (heads, h2_dim), jnp.float32),
        "fc1_w":  s * jax.random.normal(ks[6], (heads * h1_dim, in_dim), jnp.float32),
        "fc1_b":  jnp.zeros((1, in_dim), jnp.float32),
        "fc2_w":  s * jax.random.normal(ks[7], (in_dim, in_dim), jnp.float32),
        "fc2_b":  jnp.zeros((1, in_dim), jnp.float32),
        "fc3_w":  s * jax.random.normal(ks[8], (heads * h2_dim, in_dim), jnp.float32),
        "fc3_b":  jnp.zeros((1, in_dim), jnp.float32),
        "fc4_w":  s * jax.random.normal(ks[9], (in_dim, in_dim), jnp.float32),
        "fc4_b":  jnp.zeros((1, in_dim), jnp.float32),
        "fc5_w":  s * jax.random.normal(ks[10], (in_dim, 1), jnp.float32),
        "fc5_b":  jnp.zeros((1, 1), jnp.float32),
    }
    return p


if __name__ == "__main__":
    N = 16          # number of graph nodes
    IN_DIM = 8
    H1_DIM = 16
    H2_DIM = 25     # module default
    HEADS = 8       # module default
    THRESHOLD = 0.03
    SCALE = float(1.0 / jnp.log(jnp.float32(30.0)))   # 1 / log(scale)

    key = jax.random.PRNGKey(0)
    k_x, k_p = jax.random.split(key)
    x = jax.random.normal(k_x, (N, IN_DIM), jnp.float32)

    # deterministic graph: bidirectional ring + self loops
    idx = jnp.arange(N)
    src = jnp.concatenate([idx, (idx + 1) % N, idx])
    dst = jnp.concatenate([(idx + 1) % N, idx, idx])
    edge_index = jnp.stack([src, dst]).astype(jnp.int32)      # [2, E]
    edge_attr = jnp.zeros((src.shape[0], 4), jnp.float32)     # unused (edge_dim=None)

    params = init_params(k_p, IN_DIM, H1_DIM, H2_DIM, HEADS)

    y = again_forward(x, edge_index, edge_attr, params, heads=HEADS,
                      h1_dim=H1_DIM, h2_dim=H2_DIM, threshold=THRESHOLD,
                      scale=SCALE, sparse_train=True)
    y = jax.block_until_ready(y)
    assert y.shape == (N,)
    print("KERNEL_OK")
</pallas_src>

<mosaic_0001>
module attributes {stable_mosaic.version = 11 : i64} {
  func.func @_again_kernel(%arg0: memref<16x8xf32, #tpu.memory_space<vmem>>, %arg1: memref<16x16xf32, #tpu.memory_space<vmem>>, %arg2: memref<8x8xf32, #tpu.memory_space<vmem>>, %arg3: memref<8x8xf32, #tpu.memory_space<vmem>>, %arg4: memref<8x64xf32, #tpu.memory_space<vmem>>, %arg5: memref<8x8xf32, #tpu.memory_space<vmem>>, %arg6: memref<8x8xf32, #tpu.memory_space<vmem>>, %arg7: memref<8x64xf32, #tpu.memory_space<vmem>>, %arg8: memref<8x8xf32, #tpu.memory_space<vmem>>, %arg9: memref<8x8xf32, #tpu.memory_space<vmem>>, %arg10: memref<8x1xf32, #tpu.memory_space<vmem>>, %arg11: memref<5x8xf32, #tpu.memory_space<vmem>>, %arg12: memref<16x1xf32, #tpu.memory_space<vmem>>) attributes {dimension_semantics = [], scalar_prefetch = 0 : i64, scratch_operands = 0 : i64, tpu.core_type = #tpu.core_type<tc>} {
    %c0 = arith.constant 0 : index
    %c0_0 = arith.constant 0 : index
    %0 = vector.load %arg0[%c0, %c0_0] : memref<16x8xf32, #tpu.memory_space<vmem>>, vector<16x8xf32>
    %c0_1 = arith.constant 0 : index
    %c0_2 = arith.constant 0 : index
    %1 = vector.load %arg1[%c0_1, %c0_2] : memref<16x16xf32, #tpu.memory_space<vmem>>, vector<16x16xf32>
    %cst = arith.constant 0.000000e+00 : f32
    %2 = vector.broadcast %cst : f32 to vector<16x16xf32>
    %3 = arith.cmpf ogt, %1, %2 : vector<16x16xf32>
    %c0_3 = arith.constant 0 : index
    %c0_4 = arith.constant 0 : index
    %4 = vector.load %arg2[%c0_3, %c0_4] : memref<8x8xf32, #tpu.memory_space<vmem>>, vector<8x8xf32>
    %cst_5 = arith.constant dense<0.000000e+00> : vector<16x8xf32>
    %5 = tpu.matmul %0, %4, %cst_5 {dimension_numbers = #tpu.dot_dimension_numbers<[1], [0], [0], [1], [0, 0, 1, 1], [], []>} : vector<16x8xf32>, vector<8x8xf32>, vector<16x8xf32> -> vector<16x8xf32>
    %c0_6 = arith.constant 0 : index
    %c0_7 = arith.constant 0 : index
    %6 = vector.load %arg3[%c0_6, %c0_7] : memref<8x8xf32, #tpu.memory_space<vmem>>, vector<8x8xf32>
    %cst_8 = arith.constant dense<0.000000e+00> : vector<8x16xf32>
    %7 = tpu.matmul %6, %0, %cst_8 {dimension_numbers = #tpu.dot_dimension_numbers<[1], [1], [0], [0], [0, 0, 1, 0], [], []>} : vector<8x8xf32>, vector<16x8xf32>, vector<8x16xf32> -> vector<8x16xf32>
    %c0_9 = arith.constant 0 : index
    %c0_10 = arith.constant 0 : index
    %8 = vector.load %arg4[%c0_9, %c0_10] : memref<8x64xf32, #tpu.memory_space<vmem>>, vector<8x64xf32>
    %cst_11 = arith.constant dense<0.000000e+00> : vector<16x64xf32>
    %9 = tpu.matmul %0, %8, %cst_11 {dimension_numbers = #tpu.dot_dimension_numbers<[1], [0], [0], [1], [0, 0, 1, 1], [], []>} : vector<16x8xf32>, vector<8x64xf32>, vector<16x64xf32> -> vector<16x64xf32>
    %10 = vector.extract_strided_slice %5 {offsets = [0, 0], sizes = [16, 1], strides = [1, 1]} : vector<16x8xf32> to vector<16x1xf32>
    %11 = vector.extract_strided_slice %7 {offsets = [0, 0], sizes = [1, 16], strides = [1, 1]} : vector<8x16xf32> to vector<1x16xf32>
    %12 = vector.broadcast %10 : vector<16x1xf32> to vector<16x16xf32>
    %13 = vector.broadcast %11 : vector<1x16xf32> to vector<16x16xf32>
    %14 = arith.addf %12, %13 : vector<16x16xf32>
    %cst_12 = arith.constant 0.000000e+00 : f32
    %15 = vector.broadcast %cst_12 : f32 to vector<16x16xf32>
    %16 = arith.cmpf ogt, %14, %15 : vector<16x16xf32>
    %cst_13 = arith.constant 2.000000e-01 : f32
    %17 = vector.broadcast %cst_13 : f32 to vector<16x16xf32>
    %18 = arith.mulf %17, %14 : vector<16x16xf32>
    %19 = arith.select %16, %14, %18 : vector<16x16xi1>, vector<16x16xf32>
    %cst_14 = arith.constant 0.294014096 : f32
    %20 = vector.broadcast %cst_14 : f32 to vector<16x16xf32>
    %21 = arith.mulf %19, %20 : vector<16x16xf32>
    %cst_15 = arith.constant -1.000000e+30 : f32
    %22 = vector.broadcast %cst_15 : f32 to vector<16x16xf32>
    %23 = arith.select %3, %21, %22 : vector<16x16xi1>, vector<16x16xf32>
    %cst_16 = arith.constant dense<0xFF800000> : vector<16xf32>
    %24 = vector.multi_reduction <maximumf>, %23, %cst_16 [1] : vector<16x16xf32> to vector<16xf32>
    %25 = vector.shape_cast %24 : vector<16xf32> to vector<16x1xf32>
    %26 = vector.broadcast %25 : vector<16x1xf32> to vector<16x16xf32>
    %27 = arith.subf %23, %26 : vector<16x16xf32>
    %28 = math.exp %27 : vector<16x16xf32>
    %cst_17 = arith.constant 0.000000e+00 : f32
    %29 = vector.broadcast %cst_17 : f32 to vector<16x16xf32>
    %30 = arith.select %3, %28, %29 : vector<16x16xi1>, vector<16x16xf32>
    %cst_18 = arith.constant dense<0.000000e+00> : vector<16xf32>
    %31 = vector.multi_reduction <add>, %30, %cst_18 [1] : vector<16x16xf32> to vector<16xf32>
    %32 = vector.shape_cast %31 : vector<16xf32> to vector<16x1xf32>
    %cst_19 = arith.constant 1.000000e-16 : f32
    %33 = vector.broadcast %cst_19 : f32 to vector<16x1xf32>
    %34 = arith.maximumf %32, %33 : vector<16x1xf32>
    %35 = vector.broadcast %34 : vector<16x1xf32> to vector<16x16xf32>
    %36 = arith.divf %30, %35 : vector<16x16xf32>
    %cst_20 = arith.constant 3.000000e-02 : f32
    %37 = vector.broadcast %cst_20 : f32 to vector<16x16xf32>
    %38 = arith.cmpf olt, %36, %37 : vector<16x16xf32>
    %cst_21 = arith.constant 0.000000e+00 : f32
    %39 = vector.broadcast %cst_21 : f32 to vector<16x16xf32>
    %40 = arith.select %38, %39, %36 : vector<16x16xi1>, vector<16x16xf32>
    %41 = vector.extract_strided_slice %9 {offsets = [0, 0], sizes = [16, 8], strides = [1, 1]} : vector<16x64xf32> to vector<16x8xf32>
    %cst_22 = arith.constant dense<0.000000e+00> : vector<16x8xf32>
    %42 = tpu.matmul %40, %41, %cst_22 {dimension_numbers = #tpu.dot_dimension_numbers<[1], [0], [0], [1], [0, 0, 1, 1], [], []>} : vector<16x16xf32>, vector<16x8xf32>, vector<16x8xf32> -> vector<16x8xf32>
    %43 = vector.extract_strided_slice %5 {offsets = [0, 1], sizes = [16, 1], strides = [1, 1]} : vector<16x8xf32> to vector<16x1xf32>
    %44 = vector.extract_strided_slice %7 {offsets = [1, 0], sizes = [1, 16], strides = [1, 1]} : vector<8x16xf32> to vector<1x16xf32>
    %45 = vector.broadcast %43 : vector<16x1xf32> to vector<16x16xf32>
    %46 = vector.broadcast %44 : vector<1x16xf32> to vector<16x16xf32>
    %47 = arith.addf %45, %46 : vector<16x16xf32>
    %cst_23 = arith.constant 0.000000e+00 : f32
    %48 = vector.broadcast %cst_23 : f32 to vector<16x16xf32>
    %49 = arith.cmpf ogt, %47, %48 : vector<16x16xf32>
    %cst_24 = arith.constant 2.000000e-01 : f32
    %50 = vector.broadcast %cst_24 : f32 to vector<16x16xf32>
    %51 = arith.mulf %50, %47 : vector<16x16xf32>
    %52 = arith.select %49, %47, %51 : vector<16x16xi1>, vector<16x16xf32>
    %cst_25 = arith.constant 0.294014096 : f32
    %53 = vector.broadcast %cst_25 : f32 to vector<16x16xf32>
    %54 = arith.mulf %52, %53 : vector<16x16xf32>
    %cst_26 = arith.constant -1.000000e+30 : f32
    %55 = vector.broadcast %cst_26 : f32 to vector<16x16xf32>
    %56 = arith.select %3, %54, %55 : vector<16x16xi1>, vector<16x16xf32>
    %cst_27 = arith.constant dense<0xFF800000> : vector<16xf32>
    %57 = vector.multi_reduction <maximumf>, %56, %cst_27 [1] : vector<16x16xf32> to vector<16xf32>
    %58 = vector.shape_cast %57 : vector<16xf32> to vector<16x1xf32>
    %59 = vector.broadcast %58 : vector<16x1xf32> to vector<16x16xf32>
    %60 = arith.subf %56, %59 : vector<16x16xf32>
    %61 = math.exp %60 : vector<16x16xf32>
    %cst_28 = arith.constant 0.000000e+00 : f32
    %62 = vector.broadcast %cst_28 : f32 to vector<16x16xf32>
    %63 = arith.select %3, %61, %62 : vector<16x16xi1>, vector<16x16xf32>
    %cst_29 = arith.constant dense<0.000000e+00> : vector<16xf32>
    %64 = vector.multi_reduction <add>, %63, %cst_29 [1] : vector<16x16xf32> to vector<16xf32>
    %65 = vector.shape_cast %64 : vector<16xf32> to vector<16x1xf32>
    %cst_30 = arith.constant 1.000000e-16 : f32
    %66 = vector.broadcast %cst_30 : f32 to vector<16x1xf32>
    %67 = arith.maximumf %65, %66 : vector<16x1xf32>
    %68 = vector.broadcast %67 : vector<16x1xf32> to vector<16x16xf32>
    %69 = arith.divf %63, %68 : vector<16x16xf32>
    %cst_31 = arith.constant 3.000000e-02 : f32
    %70 = vector.broadcast %cst_31 : f32 to vector<16x16xf32>
    %71 = arith.cmpf olt, %69, %70 : vector<16x16xf32>
    %cst_32 = arith.constant 0.000000e+00 : f32
    %72 = vector.broadcast %cst_32 : f32 to vector<16x16xf32>
    %73 = arith.select %71, %72, %69 : vector<16x16xi1>, vector<16x16xf32>
    %74 = vector.extract_strided_slice %9 {offsets = [0, 8], sizes = [16, 8], strides = [1, 1]} : vector<16x64xf32> to vector<16x8xf32>
    %cst_33 = arith.constant dense<0.000000e+00> : vector<16x8xf32>
    %75 = tpu.matmul %73, %74, %cst_33 {dimension_numbers = #tpu.dot_dimension_numbers<[1], [0], [0], [1], [0, 0, 1, 1], [], []>} : vector<16x16xf32>, vector<16x8xf32>, vector<16x8xf32> -> vector<16x8xf32>
    %76 = arith.addf %42, %75 : vector<16x8xf32>
    %77 = vector.extract_strided_slice %5 {offsets = [0, 2], sizes = [16, 1], strides = [1, 1]} : vector<16x8xf32> to vector<16x1xf32>
    %78 = vector.extract_strided_slice %7 {offsets = [2, 0], sizes = [1, 16], strides = [1, 1]} : vector<8x16xf32> to vector<1x16xf32>
    %79 = vector.broadcast %77 : vector<16x1xf32> to vector<16x16xf32>
    %80 = vector.broadcast %78 : vector<1x16xf32> to vector<16x16xf32>
    %81 = arith.addf %79, %80 : vector<16x16xf32>
    %cst_34 = arith.constant 0.000000e+00 : f32
    %82 = vector.broadcast %cst_34 : f32 to vector<16x16xf32>
    %83 = arith.cmpf ogt, %81, %82 : vector<16x16xf32>
    %cst_35 = arith.constant 2.000000e-01 : f32
    %84 = vector.broadcast %cst_35 : f32 to vector<16x16xf32>
    %85 = arith.mulf %84, %81 : vector<16x16xf32>
    %86 = arith.select %83, %81, %85 : vector<16x16xi1>, vector<16x16xf32>
    %cst_36 = arith.constant 0.294014096 : f32
    %87 = vector.broadcast %cst_36 : f32 to vector<16x16xf32>
    %88 = arith.mulf %86, %87 : vector<16x16xf32>
    %cst_37 = arith.constant -1.000000e+30 : f32
    %89 = vector.broadcast %cst_37 : f32 to vector<16x16xf32>
    %90 = arith.select %3, %88, %89 : vector<16x16xi1>, vector<16x16xf32>
    %cst_38 = arith.constant dense<0xFF800000> : vector<16xf32>
    %91 = vector.multi_reduction <maximumf>, %90, %cst_38 [1] : vector<16x16xf32> to vector<16xf32>
    %92 = vector.shape_cast %91 : vector<16xf32> to vector<16x1xf32>
    %93 = vector.broadcast %92 : vector<16x1xf32> to vector<16x16xf32>
    %94 = arith.subf %90, %93 : vector<16x16xf32>
    %95 = math.exp %94 : vector<16x16xf32>
    %cst_39 = arith.constant 0.000000e+00 : f32
    %96 = vector.broadcast %cst_39 : f32 to vector<16x16xf32>
    %97 = arith.select %3, %95, %96 : vector<16x16xi1>, vector<16x16xf32>
    %cst_40 = arith.constant dense<0.000000e+00> : vector<16xf32>
    %98 = vector.multi_reduction <add>, %97, %cst_40 [1] : vector<16x16xf32> to vector<16xf32>
    %99 = vector.shape_cast %98 : vector<16xf32> to vector<16x1xf32>
    %cst_41 = arith.constant 1.000000e-16 : f32
    %100 = vector.broadcast %cst_41 : f32 to vector<16x1xf32>
    %101 = arith.maximumf %99, %100 : vector<16x1xf32>
    %102 = vector.broadcast %101 : vector<16x1xf32> to vector<16x16xf32>
    %103 = arith.divf %97, %102 : vector<16x16xf32>
    %cst_42 = arith.constant 3.000000e-02 : f32
    %104 = vector.broadcast %cst_42 : f32 to vector<16x16xf32>
    %105 = arith.cmpf olt, %103, %104 : vector<16x16xf32>
    %cst_43 = arith.constant 0.000000e+00 : f32
    %106 = vector.broadcast %cst_43 : f32 to vector<16x16xf32>
    %107 = arith.select %105, %106, %103 : vector<16x16xi1>, vector<16x16xf32>
    %108 = vector.extract_strided_slice %9 {offsets = [0, 16], sizes = [16, 8], strides = [1, 1]} : vector<16x64xf32> to vector<16x8xf32>
    %cst_44 = arith.constant dense<0.000000e+00> : vector<16x8xf32>
    %109 = tpu.matmul %107, %108, %cst_44 {dimension_numbers = #tpu.dot_dimension_numbers<[1], [0], [0], [1], [0, 0, 1, 1], [], []>} : vector<16x16xf32>, vector<16x8xf32>, vector<16x8xf32> -> vector<16x8xf32>
    %110 = arith.addf %76, %109 : vector<16x8xf32>
    %111 = vector.extract_strided_slice %5 {offsets = [0, 3], sizes = [16, 1], strides = [1, 1]} : vector<16x8xf32> to vector<16x1xf32>
    %112 = vector.extract_strided_slice %7 {offsets = [3, 0], sizes = [1, 16], strides = [1, 1]} : vector<8x16xf32> to vector<1x16xf32>
    %113 = vector.broadcast %111 : vector<16x1xf32> to vector<16x16xf32>
    %114 = vector.broadcast %112 : vector<1x16xf32> to vector<16x16xf32>
    %115 = arith.addf %113, %114 : vector<16x16xf32>
    %cst_45 = arith.constant 0.000000e+00 : f32
    %116 = vector.broadcast %cst_45 : f32 to vector<16x16xf32>
    %117 = arith.cmpf ogt, %115, %116 : vector<16x16xf32>
    %cst_46 = arith.constant 2.000000e-01 : f32
    %118 = vector.broadcast %cst_46 : f32 to vector<16x16xf32>
    %119 = arith.mulf %118, %115 : vector<16x16xf32>
    %120 = arith.select %117, %115, %119 : vector<16x16xi1>, vector<16x16xf32>
    %cst_47 = arith.constant 0.294014096 : f32
    %121 = vector.broadcast %cst_47 : f32 to vector<16x16xf32>
    %122 = arith.mulf %120, %121 : vector<16x16xf32>
    %cst_48 = arith.constant -1.000000e+30 : f32
    %123 = vector.broadcast %cst_48 : f32 to vector<16x16xf32>
    %124 = arith.select %3, %122, %123 : vector<16x16xi1>, vector<16x16xf32>
    %cst_49 = arith.constant dense<0xFF800000> : vector<16xf32>
    %125 = vector.multi_reduction <maximumf>, %124, %cst_49 [1] : vector<16x16xf32> to vector<16xf32>
    %126 = vector.shape_cast %125 : vector<16xf32> to vector<16x1xf32>
    %127 = vector.broadcast %126 : vector<16x1xf32> to vector<16x16xf32>
    %128 = arith.subf %124, %127 : vector<16x16xf32>
    %129 = math.exp %128 : vector<16x16xf32>
    %cst_50 = arith.constant 0.000000e+00 : f32
    %130 = vector.broadcast %cst_50 : f32 to vector<16x16xf32>
    %131 = arith.select %3, %129, %130 : vector<16x16xi1>, vector<16x16xf32>
    %cst_51 = arith.constant dense<0.000000e+00> : vector<16xf32>
    %132 = vector.multi_reduction <add>, %131, %cst_51 [1] : vector<16x16xf32> to vector<16xf32>
    %133 = vector.shape_cast %132 : vector<16xf32> to vector<16x1xf32>
    %cst_52 = arith.constant 1.000000e-16 : f32
    %134 = vector.broadcast %cst_52 : f32 to vector<16x1xf32>
    %135 = arith.maximumf %133, %134 : vector<16x1xf32>
    %136 = vector.broadcast %135 : vector<16x1xf32> to vector<16x16xf32>
    %137 = arith.divf %131, %136 : vector<16x16xf32>
    %cst_53 = arith.constant 3.000000e-02 : f32
    %138 = vector.broadcast %cst_53 : f32 to vector<16x16xf32>
    %139 = arith.cmpf olt, %137, %138 : vector<16x16xf32>
    %cst_54 = arith.constant 0.000000e+00 : f32
    %140 = vector.broadcast %cst_54 : f32 to vector<16x16xf32>
    %141 = arith.select %139, %140, %137 : vector<16x16xi1>, vector<16x16xf32>
    %142 = vector.extract_strided_slice %9 {offsets = [0, 24], sizes = [16, 8], strides = [1, 1]} : vector<16x64xf32> to vector<16x8xf32>
    %cst_55 = arith.constant dense<0.000000e+00> : vector<16x8xf32>
    %143 = tpu.matmul %141, %142, %cst_55 {dimension_numbers = #tpu.dot_dimension_numbers<[1], [0], [0], [1], [0, 0, 1, 1], [], []>} : vector<16x16xf32>, vector<16x8xf32>, vector<16x8xf32> -> vector<16x8xf32>
    %144 = arith.addf %110, %143 : vector<16x8xf32>
    %145 = vector.extract_strided_slice %5 {offsets = [0, 4], sizes = [16, 1], strides = [1, 1]} : vector<16x8xf32> to vector<16x1xf32>
    %146 = vector.extract_strided_slice %7 {offsets = [4, 0], sizes = [1, 16], strides = [1, 1]} : vector<8x16xf32> to vector<1x16xf32>
    %147 = vector.broadcast %145 : vector<16x1xf32> to vector<16x16xf32>
    %148 = vector.broadcast %146 : vector<1x16xf32> to vector<16x16xf32>
    %149 = arith.addf %147, %148 : vector<16x16xf32>
    %cst_56 = arith.constant 0.000000e+00 : f32
    %150 = vector.broadcast %cst_56 : f32 to vector<16x16xf32>
    %151 = arith.cmpf ogt, %149, %150 : vector<16x16xf32>
    %cst_57 = arith.constant 2.000000e-01 : f32
    %152 = vector.broadcast %cst_57 : f32 to vector<16x16xf32>
    %153 = arith.mulf %152, %149 : vector<16x16xf32>
    %154 = arith.select %151, %149, %153 : vector<16x16xi1>, vector<16x16xf32>
    %cst_58 = arith.constant 0.294014096 : f32
    %155 = vector.broadcast %cst_58 : f32 to vector<16x16xf32>
    %156 = arith.mulf %154, %155 : vector<16x16xf32>
    %cst_59 = arith.constant -1.000000e+30 : f32
    %157 = vector.broadcast %cst_59 : f32 to vector<16x16xf32>
    %158 = arith.select %3, %156, %157 : vector<16x16xi1>, vector<16x16xf32>
    %cst_60 = arith.constant dense<0xFF800000> : vector<16xf32>
    %159 = vector.multi_reduction <maximumf>, %158, %cst_60 [1] : vector<16x16xf32> to vector<16xf32>
    %160 = vector.shape_cast %159 : vector<16xf32> to vector<16x1xf32>
    %161 = vector.broadcast %160 : vector<16x1xf32> to vector<16x16xf32>
    %162 = arith.subf %158, %161 : vector<16x16xf32>
    %163 = math.exp %162 : vector<16x16xf32>
    %cst_61 = arith.constant 0.000000e+00 : f32
    %164 = vector.broadcast %cst_61 : f32 to vector<16x16xf32>
    %165 = arith.select %3, %163, %164 : vector<16x16xi1>, vector<16x16xf32>
    %cst_62 = arith.constant dense<0.000000e+00> : vector<16xf32>
    %166 = vector.multi_reduction <add>, %165, %cst_62 [1] : vector<16x16xf32> to vector<16xf32>
    %167 = vector.shape_cast %166 : vector<16xf32> to vector<16x1xf32>
    %cst_63 = arith.constant 1.000000e-16 : f32
    %168 = vector.broadcast %cst_63 : f32 to vector<16x1xf32>
    %169 = arith.maximumf %167, %168 : vector<16x1xf32>
    %170 = vector.broadcast %169 : vector<16x1xf32> to vector<16x16xf32>
    %171 = arith.divf %165, %170 : vector<16x16xf32>
    %cst_64 = arith.constant 3.000000e-02 : f32
    %172 = vector.broadcast %cst_64 : f32 to vector<16x16xf32>
    %173 = arith.cmpf olt, %171, %172 : vector<16x16xf32>
    %cst_65 = arith.constant 0.000000e+00 : f32
    %174 = vector.broadcast %cst_65 : f32 to vector<16x16xf32>
    %175 = arith.select %173, %174, %171 : vector<16x16xi1>, vector<16x16xf32>
    %176 = vector.extract_strided_slice %9 {offsets = [0, 32], sizes = [16, 8], strides = [1, 1]} : vector<16x64xf32> to vector<16x8xf32>
    %cst_66 = arith.constant dense<0.000000e+00> : vector<16x8xf32>
    %177 = tpu.matmul %175, %176, %cst_66 {dimension_numbers = #tpu.dot_dimension_numbers<[1], [0], [0], [1], [0, 0, 1, 1], [], []>} : vector<16x16xf32>, vector<16x8xf32>, vector<16x8xf32> -> vector<16x8xf32>
    %178 = arith.addf %144, %177 : vector<16x8xf32>
    %179 = vector.extract_strided_slice %5 {offsets = [0, 5], sizes = [16, 1], strides = [1, 1]} : vector<16x8xf32> to vector<16x1xf32>
    %180 = vector.extract_strided_slice %7 {offsets = [5, 0], sizes = [1, 16], strides = [1, 1]} : vector<8x16xf32> to vector<1x16xf32>
    %181 = vector.broadcast %179 : vector<16x1xf32> to vector<16x16xf32>
    %182 = vector.broadcast %180 : vector<1x16xf32> to vector<16x16xf32>
    %183 = arith.addf %181, %182 : vector<16x16xf32>
    %cst_67 = arith.constant 0.000000e+00 : f32
    %184 = vector.broadcast %cst_67 : f32 to vector<16x16xf32>
    %185 = arith.cmpf ogt, %183, %184 : vector<16x16xf32>
    %cst_68 = arith.constant 2.000000e-01 : f32
    %186 = vector.broadcast %cst_68 : f32 to vector<16x16xf32>
    %187 = arith.mulf %186, %183 : vector<16x16xf32>
    %188 = arith.select %185, %183, %187 : vector<16x16xi1>, vector<16x16xf32>
    %cst_69 = arith.constant 0.294014096 : f32
    %189 = vector.broadcast %cst_69 : f32 to vector<16x16xf32>
    %190 = arith.mulf %188, %189 : vector<16x16xf32>
    %cst_70 = arith.constant -1.000000e+30 : f32
    %191 = vector.broadcast %cst_70 : f32 to vector<16x16xf32>
    %192 = arith.select %3, %190, %191 : vector<16x16xi1>, vector<16x16xf32>
    %cst_71 = arith.constant dense<0xFF800000> : vector<16xf32>
    %193 = vector.multi_reduction <maximumf>, %192, %cst_71 [1] : vector<16x16xf32> to vector<16xf32>
    %194 = vector.shape_cast %193 : vector<16xf32> to vector<16x1xf32>
    %195 = vector.broadcast %194 : vector<16x1xf32> to vector<16x16xf32>
    %196 = arith.subf %192, %195 : vector<16x16xf32>
    %197 = math.exp %196 : vector<16x16xf32>
    %cst_72 = arith.constant 0.000000e+00 : f32
    %198 = vector.broadcast %cst_72 : f32 to vector<16x16xf32>
    %199 = arith.select %3, %197, %198 : vector<16x16xi1>, vector<16x16xf32>
    %cst_73 = arith.constant dense<0.000000e+00> : vector<16xf32>
    %200 = vector.multi_reduction <add>, %199, %cst_73 [1] : vector<16x16xf32> to vector<16xf32>
    %201 = vector.shape_cast %200 : vector<16xf32> to vector<16x1xf32>
    %cst_74 = arith.constant 1.000000e-16 : f32
    %202 = vector.broadcast %cst_74 : f32 to vector<16x1xf32>
    %203 = arith.maximumf %201, %202 : vector<16x1xf32>
    %204 = vector.broadcast %203 : vector<16x1xf32> to vector<16x16xf32>
    %205 = arith.divf %199, %204 : vector<16x16xf32>
    %cst_75 = arith.constant 3.000000e-02 : f32
    %206 = vector.broadcast %cst_75 : f32 to vector<16x16xf32>
    %207 = arith.cmpf olt, %205, %206 : vector<16x16xf32>
    %cst_76 = arith.constant 0.000000e+00 : f32
    %208 = vector.broadcast %cst_76 : f32 to vector<16x16xf32>
    %209 = arith.select %207, %208, %205 : vector<16x16xi1>, vector<16x16xf32>
    %210 = vector.extract_strided_slice %9 {offsets = [0, 40], sizes = [16, 8], strides = [1, 1]} : vector<16x64xf32> to vector<16x8xf32>
    %cst_77 = arith.constant dense<0.000000e+00> : vector<16x8xf32>
    %211 = tpu.matmul %209, %210, %cst_77 {dimension_numbers = #tpu.dot_dimension_numbers<[1], [0], [0], [1], [0, 0, 1, 1], [], []>} : vector<16x16xf32>, vector<16x8xf32>, vector<16x8xf32> -> vector<16x8xf32>
    %212 = arith.addf %178, %211 : vector<16x8xf32>
    %213 = vector.extract_strided_slice %5 {offsets = [0, 6], sizes = [16, 1], strides = [1, 1]} : vector<16x8xf32> to vector<16x1xf32>
    %214 = vector.extract_strided_slice %7 {offsets = [6, 0], sizes = [1, 16], strides = [1, 1]} : vector<8x16xf32> to vector<1x16xf32>
    %215 = vector.broadcast %213 : vector<16x1xf32> to vector<16x16xf32>
    %216 = vector.broadcast %214 : vector<1x16xf32> to vector<16x16xf32>
    %217 = arith.addf %215, %216 : vector<16x16xf32>
    %cst_78 = arith.constant 0.000000e+00 : f32
    %218 = vector.broadcast %cst_78 : f32 to vector<16x16xf32>
    %219 = arith.cmpf ogt, %217, %218 : vector<16x16xf32>
    %cst_79 = arith.constant 2.000000e-01 : f32
    %220 = vector.broadcast %cst_79 : f32 to vector<16x16xf32>
    %221 = arith.mulf %220, %217 : vector<16x16xf32>
    %222 = arith.select %219, %217, %221 : vector<16x16xi1>, vector<16x16xf32>
    %cst_80 = arith.constant 0.294014096 : f32
    %223 = vector.broadcast %cst_80 : f32 to vector<16x16xf32>
    %224 = arith.mulf %222, %223 : vector<16x16xf32>
    %cst_81 = arith.constant -1.000000e+30 : f32
    %225 = vector.broadcast %cst_81 : f32 to vector<16x16xf32>
    %226 = arith.select %3, %224, %225 : vector<16x16xi1>, vector<16x16xf32>
    %cst_82 = arith.constant dense<0xFF800000> : vector<16xf32>
    %227 = vector.multi_reduction <maximumf>, %226, %cst_82 [1] : vector<16x16xf32> to vector<16xf32>
    %228 = vector.shape_cast %227 : vector<16xf32> to vector<16x1xf32>
    %229 = vector.broadcast %228 : vector<16x1xf32> to vector<16x16xf32>
    %230 = arith.subf %226, %229 : vector<16x16xf32>
    %231 = math.exp %230 : vector<16x16xf32>
    %cst_83 = arith.constant 0.000000e+00 : f32
    %232 = vector.broadcast %cst_83 : f32 to vector<16x16xf32>
    %233 = arith.select %3, %231, %232 : vector<16x16xi1>, vector<16x16xf32>
    %cst_84 = arith.constant dense<0.000000e+00> : vector<16xf32>
    %234 = vector.multi_reduction <add>, %233, %cst_84 [1] : vector<16x16xf32> to vector<16xf32>
    %235 = vector.shape_cast %234 : vector<16xf32> to vector<16x1xf32>
    %cst_85 = arith.constant 1.000000e-16 : f32
    %236 = vector.broadcast %cst_85 : f32 to vector<16x1xf32>
    %237 = arith.maximumf %235, %236 : vector<16x1xf32>
    %238 = vector.broadcast %237 : vector<16x1xf32> to vector<16x16xf32>
    %239 = arith.divf %233, %238 : vector<16x16xf32>
    %cst_86 = arith.constant 3.000000e-02 : f32
    %240 = vector.broadcast %cst_86 : f32 to vector<16x16xf32>
    %241 = arith.cmpf olt, %239, %240 : vector<16x16xf32>
    %cst_87 = arith.constant 0.000000e+00 : f32
    %242 = vector.broadcast %cst_87 : f32 to vector<16x16xf32>
    %243 = arith.select %241, %242, %239 : vector<16x16xi1>, vector<16x16xf32>
    %244 = vector.extract_strided_slice %9 {offsets = [0, 48], sizes = [16, 8], strides = [1, 1]} : vector<16x64xf32> to vector<16x8xf32>
    %cst_88 = arith.constant dense<0.000000e+00> : vector<16x8xf32>
    %245 = tpu.matmul %243, %244, %cst_88 {dimension_numbers = #tpu.dot_dimension_numbers<[1], [0], [0], [1], [0, 0, 1, 1], [], []>} : vector<16x16xf32>, vector<16x8xf32>, vector<16x8xf32> -> vector<16x8xf32>
    %246 = arith.addf %212, %245 : vector<16x8xf32>
    %247 = vector.extract_strided_slice %5 {offsets = [0, 7], sizes = [16, 1], strides = [1, 1]} : vector<16x8xf32> to vector<16x1xf32>
    %248 = vector.extract_strided_slice %7 {offsets = [7, 0], sizes = [1, 16], strides = [1, 1]} : vector<8x16xf32> to vector<1x16xf32>
    %249 = vector.broadcast %247 : vector<16x1xf32> to vector<16x16xf32>
    %250 = vector.broadcast %248 : vector<1x16xf32> to vector<16x16xf32>
    %251 = arith.addf %249, %250 : vector<16x16xf32>
    %cst_89 = arith.constant 0.000000e+00 : f32
    %252 = vector.broadcast %cst_89 : f32 to vector<16x16xf32>
    %253 = arith.cmpf ogt, %251, %252 : vector<16x16xf32>
    %cst_90 = arith.constant 2.000000e-01 : f32
    %254 = vector.broadcast %cst_90 : f32 to vector<16x16xf32>
    %255 = arith.mulf %254, %251 : vector<16x16xf32>
    %256 = arith.select %253, %251, %255 : vector<16x16xi1>, vector<16x16xf32>
    %cst_91 = arith.constant 0.294014096 : f32
    %257 = vector.broadcast %cst_91 : f32 to vector<16x16xf32>
    %258 = arith.mulf %256, %257 : vector<16x16xf32>
    %cst_92 = arith.constant -1.000000e+30 : f32
    %259 = vector.broadcast %cst_92 : f32 to vector<16x16xf32>
    %260 = arith.select %3, %258, %259 : vector<16x16xi1>, vector<16x16xf32>
    %cst_93 = arith.constant dense<0xFF800000> : vector<16xf32>
    %261 = vector.multi_reduction <maximumf>, %260, %cst_93 [1] : vector<16x16xf32> to vector<16xf32>
    %262 = vector.shape_cast %261 : vector<16xf32> to vector<16x1xf32>
    %263 = vector.broadcast %262 : vector<16x1xf32> to vector<16x16xf32>
    %264 = arith.subf %260, %263 : vector<16x16xf32>
    %265 = math.exp %264 : vector<16x16xf32>
    %cst_94 = arith.constant 0.000000e+00 : f32
    %266 = vector.broadcast %cst_94 : f32 to vector<16x16xf32>
    %267 = arith.select %3, %265, %266 : vector<16x16xi1>, vector<16x16xf32>
    %cst_95 = arith.constant dense<0.000000e+00> : vector<16xf32>
    %268 = vector.multi_reduction <add>, %267, %cst_95 [1] : vector<16x16xf32> to vector<16xf32>
    %269 = vector.shape_cast %268 : vector<16xf32> to vector<16x1xf32>
    %cst_96 = arith.constant 1.000000e-16 : f32
    %270 = vector.broadcast %cst_96 : f32 to vector<16x1xf32>
    %271 = arith.maximumf %269, %270 : vector<16x1xf32>
    %272 = vector.broadcast %271 : vector<16x1xf32> to vector<16x16xf32>
    %273 = arith.divf %267, %272 : vector<16x16xf32>
    %cst_97 = arith.constant 3.000000e-02 : f32
    %274 = vector.broadcast %cst_97 : f32 to vector<16x16xf32>
    %275 = arith.cmpf olt, %273, %274 : vector<16x16xf32>
    %cst_98 = arith.constant 0.000000e+00 : f32
    %276 = vector.broadcast %cst_98 : f32 to vector<16x16xf32>
    %277 = arith.select %275, %276, %273 : vector<16x16xi1>, vector<16x16xf32>
    %278 = vector.extract_strided_slice %9 {offsets = [0, 56], sizes = [16, 8], strides = [1, 1]} : vector<16x64xf32> to vector<16x8xf32>
    %cst_99 = arith.constant dense<0.000000e+00> : vector<16x8xf32>
    %279 = tpu.matmul %277, %278, %cst_99 {dimension_numbers = #tpu.dot_dimension_numbers<[1], [0], [0], [1], [0, 0, 1, 1], [], []>} : vector<16x16xf32>, vector<16x8xf32>, vector<16x8xf32> -> vector<16x8xf32>
    %280 = arith.addf %246, %279 : vector<16x8xf32>
    %c0_100 = arith.constant 0 : index
    %c0_101 = arith.constant 0 : index
    %281 = vector.load %arg11[%c0_100, %c0_101] : memref<5x8xf32, #tpu.memory_space<vmem>>, vector<1x8xf32>
    %282 = vector.broadcast %281 : vector<1x8xf32> to vector<16x8xf32>
    %283 = arith.addf %280, %282 : vector<16x8xf32>
    %cst_102 = arith.constant 0.000000e+00 : f32
    %284 = vector.broadcast %cst_102 : f32 to vector<16x8xf32>
    %285 = arith.cmpf ogt, %283, %284 : vector<16x8xf32>
    %cst_103 = arith.constant 0.00999999977 : f32
    %286 = vector.broadcast %cst_103 : f32 to vector<16x8xf32>
    %287 = arith.mulf %286, %283 : vector<16x8xf32>
    %288 = arith.select %285, %283, %287 : vector<16x8xi1>, vector<16x8xf32>
    %289 = arith.addf %288, %0 : vector<16x8xf32>
    %cst_104 = arith.constant dense<0.000000e+00> : vector<8xf32>
    %290 = vector.multi_reduction <add>, %289, %cst_104 [0] : vector<16x8xf32> to vector<8xf32>
    %291 = vector.shape_cast %290 : vector<8xf32> to vector<1x8xf32>
    %cst_105 = arith.constant 1.600000e+01 : f32
    %292 = vector.broadcast %cst_105 : f32 to vector<1x8xf32>
    %293 = arith.divf %291, %292 : vector<1x8xf32>
    %294 = arith.mulf %289, %289 : vector<16x8xf32>
    %cst_106 = arith.constant dense<0.000000e+00> : vector<8xf32>
    %295 = vector.multi_reduction <add>, %294, %cst_106 [0] : vector<16x8xf32> to vector<8xf32>
    %296 = vector.shape_cast %295 : vector<8xf32> to vector<1x8xf32>
    %cst_107 = arith.constant 1.600000e+01 : f32
    %297 = vector.broadcast %cst_107 : f32 to vector<1x8xf32>
    %298 = arith.divf %296, %297 : vector<1x8xf32>
    %299 = arith.mulf %293, %293 : vector<1x8xf32>
    %300 = arith.subf %298, %299 : vector<1x8xf32>
    %cst_108 = arith.constant 0.000000e+00 : f32
    %301 = vector.broadcast %cst_108 : f32 to vector<1x8xf32>
    %302 = arith.maximumf %300, %301 : vector<1x8xf32>
    %303 = vector.broadcast %293 : vector<1x8xf32> to vector<16x8xf32>
    %304 = arith.subf %289, %303 : vector<16x8xf32>
    %cst_109 = arith.constant 9.99999974E-6 : f32
    %305 = vector.broadcast %cst_109 : f32 to vector<1x8xf32>
    %306 = arith.addf %302, %305 : vector<1x8xf32>
    %307 = math.rsqrt %306 : vector<1x8xf32>
    %308 = vector.broadcast %307 : vector<1x8xf32> to vector<16x8xf32>
    %309 = arith.mulf %304, %308 : vector<16x8xf32>
    %c0_110 = arith.constant 0 : index
    %c0_111 = arith.constant 0 : index
    %310 = vector.load %arg8[%c0_110, %c0_111] : memref<8x8xf32, #tpu.memory_space<vmem>>, vector<8x8xf32>
    %cst_112 = arith.constant dense<0.000000e+00> : vector<16x8xf32>
    %311 = tpu.matmul %309, %310, %cst_112 {dimension_numbers = #tpu.dot_dimension_numbers<[1], [0], [0], [1], [0, 0, 1, 1], [], []>} : vector<16x8xf32>, vector<8x8xf32>, vector<16x8xf32> -> vector<16x8xf32>
    %c1 = arith.constant 1 : index
    %c0_113 = arith.constant 0 : index
    %312 = vector.load %arg11[%c1, %c0_113] : memref<5x8xf32, #tpu.memory_space<vmem>>, vector<1x8xf32>
    %313 = vector.broadcast %312 : vector<1x8xf32> to vector<16x8xf32>
    %314 = arith.addf %311, %313 : vector<16x8xf32>
    %cst_114 = arith.constant 0.000000e+00 : f32
    %315 = vector.broadcast %cst_114 : f32 to vector<16x8xf32>
    %316 = arith.cmpf ogt, %314, %315 : vector<16x8xf32>
    %cst_115 = arith.constant 0.00999999977 : f32
    %317 = vector.broadcast %cst_115 : f32 to vector<16x8xf32>
    %318 = arith.mulf %317, %314 : vector<16x8xf32>
    %319 = arith.select %316, %314, %318 : vector<16x8xi1>, vector<16x8xf32>
    %320 = arith.addf %319, %0 : vector<16x8xf32>
    %cst_116 = arith.constant dense<0.000000e+00> : vector<8xf32>
    %321 = vector.multi_reduction <add>, %320, %cst_116 [0] : vector<16x8xf32> to vector<8xf32>
    %322 = vector.shape_cast %321 : vector<8xf32> to vector<1x8xf32>
    %cst_117 = arith.constant 1.600000e+01 : f32
    %323 = vector.broadcast %cst_117 : f32 to vector<1x8xf32>
    %324 = arith.divf %322, %323 : vector<1x8xf32>
    %325 = arith.mulf %320, %320 : vector<16x8xf32>
    %cst_118 = arith.constant dense<0.000000e+00> : vector<8xf32>
    %326 = vector.multi_reduction <add>, %325, %cst_118 [0] : vector<16x8xf32> to vector<8xf32>
    %327 = vector.shape_cast %326 : vector<8xf32> to vector<1x8xf32>
    %cst_119 = arith.constant 1.600000e+01 : f32
    %328 = vector.broadcast %cst_119 : f32 to vector<1x8xf32>
    %329 = arith.divf %327, %328 : vector<1x8xf32>
    %330 = arith.mulf %324, %324 : vector<1x8xf32>
    %331 = arith.subf %329, %330 : vector<1x8xf32>
    %cst_120 = arith.constant 0.000000e+00 : f32
    %332 = vector.broadcast %cst_120 : f32 to vector<1x8xf32>
    %333 = arith.maximumf %331, %332 : vector<1x8xf32>
    %334 = vector.broadcast %324 : vector<1x8xf32> to vector<16x8xf32>
    %335 = arith.subf %320, %334 : vector<16x8xf32>
    %cst_121 = arith.constant 9.99999974E-6 : f32
    %336 = vector.broadcast %cst_121 : f32 to vector<1x8xf32>
    %337 = arith.addf %333, %336 : vector<1x8xf32>
    %338 = math.rsqrt %337 : vector<1x8xf32>
    %339 = vector.broadcast %338 : vector<1x8xf32> to vector<16x8xf32>
    %340 = arith.mulf %335, %339 : vector<16x8xf32>
    %c0_122 = arith.constant 0 : index
    %c0_123 = arith.constant 0 : index
    %341 = vector.load %arg5[%c0_122, %c0_123] : memref<8x8xf32, #tpu.memory_space<vmem>>, vector<8x8xf32>
    %cst_124 = arith.constant dense<0.000000e+00> : vector<16x8xf32>
    %342 = tpu.matmul %340, %341, %cst_124 {dimension_numbers = #tpu.dot_dimension_numbers<[1], [0], [0], [1], [0, 0, 1, 1], [], []>} : vector<16x8xf32>, vector<8x8xf32>, vector<16x8xf32> -> vector<16x8xf32>
    %c0_125 = arith.constant 0 : index
    %c0_126 = arith.constant 0 : index
    %343 = vector.load %arg6[%c0_125, %c0_126] : memref<8x8xf32, #tpu.memory_space<vmem>>, vector<8x8xf32>
    %cst_127 = arith.constant dense<0.000000e+00> : vector<8x16xf32>
    %344 = tpu.matmul %343, %340, %cst_127 {dimension_numbers = #tpu.dot_dimension_numbers<[1], [1], [0], [0], [0, 0, 1, 0], [], []>} : vector<8x8xf32>, vector<16x8xf32>, vector<8x16xf32> -> vector<8x16xf32>
    %c0_128 = arith.constant 0 : index
    %c0_129 = arith.constant 0 : index
    %345 = vector.load %arg7[%c0_128, %c0_129] : memref<8x64xf32, #tpu.memory_space<vmem>>, vector<8x64xf32>
    %cst_130 = arith.constant dense<0.000000e+00> : vector<16x64xf32>
    %346 = tpu.matmul %340, %345, %cst_130 {dimension_numbers = #tpu.dot_dimension_numbers<[1], [0], [0], [1], [0, 0, 1, 1], [], []>} : vector<16x8xf32>, vector<8x64xf32>, vector<16x64xf32> -> vector<16x64xf32>
    %347 = vector.extract_strided_slice %342 {offsets = [0, 0], sizes = [16, 1], strides = [1, 1]} : vector<16x8xf32> to vector<16x1xf32>
    %348 = vector.extract_strided_slice %344 {offsets = [0, 0], sizes = [1, 16], strides = [1, 1]} : vector<8x16xf32> to vector<1x16xf32>
    %349 = vector.broadcast %347 : vector<16x1xf32> to vector<16x16xf32>
    %350 = vector.broadcast %348 : vector<1x16xf32> to vector<16x16xf32>
    %351 = arith.addf %349, %350 : vector<16x16xf32>
    %cst_131 = arith.constant 0.000000e+00 : f32
    %352 = vector.broadcast %cst_131 : f32 to vector<16x16xf32>
    %353 = arith.cmpf ogt, %351, %352 : vector<16x16xf32>
    %cst_132 = arith.constant 2.000000e-01 : f32
    %354 = vector.broadcast %cst_132 : f32 to vector<16x16xf32>
    %355 = arith.mulf %354, %351 : vector<16x16xf32>
    %356 = arith.select %353, %351, %355 : vector<16x16xi1>, vector<16x16xf32>
    %cst_133 = arith.constant 0.294014096 : f32
    %357 = vector.broadcast %cst_133 : f32 to vector<16x16xf32>
    %358 = arith.mulf %356, %357 : vector<16x16xf32>
    %cst_134 = arith.constant -1.000000e+30 : f32
    %359 = vector.broadcast %cst_134 : f32 to vector<16x16xf32>
    %360 = arith.select %3, %358, %359 : vector<16x16xi1>, vector<16x16xf32>
    %cst_135 = arith.constant dense<0xFF800000> : vector<16xf32>
    %361 = vector.multi_reduction <maximumf>, %360, %cst_135 [1] : vector<16x16xf32> to vector<16xf32>
    %362 = vector.shape_cast %361 : vector<16xf32> to vector<16x1xf32>
    %363 = vector.broadcast %362 : vector<16x1xf32> to vector<16x16xf32>
    %364 = arith.subf %360, %363 : vector<16x16xf32>
    %365 = math.exp %364 : vector<16x16xf32>
    %cst_136 = arith.constant 0.000000e+00 : f32
    %366 = vector.broadcast %cst_136 : f32 to vector<16x16xf32>
    %367 = arith.select %3, %365, %366 : vector<16x16xi1>, vector<16x16xf32>
    %cst_137 = arith.constant dense<0.000000e+00> : vector<16xf32>
    %368 = vector.multi_reduction <add>, %367, %cst_137 [1] : vector<16x16xf32> to vector<16xf32>
    %369 = vector.shape_cast %368 : vector<16xf32> to vector<16x1xf32>
    %cst_138 = arith.constant 1.000000e-16 : f32
    %370 = vector.broadcast %cst_138 : f32 to vector<16x1xf32>
    %371 = arith.maximumf %369, %370 : vector<16x1xf32>
    %372 = vector.broadcast %371 : vector<16x1xf32> to vector<16x16xf32>
    %373 = arith.divf %367, %372 : vector<16x16xf32>
    %cst_139 = arith.constant 3.000000e-02 : f32
    %374 = vector.broadcast %cst_139 : f32 to vector<16x16xf32>
    %375 = arith.cmpf olt, %373, %374 : vector<16x16xf32>
    %cst_140 = arith.constant 0.000000e+00 : f32
    %376 = vector.broadcast %cst_140 : f32 to vector<16x16xf32>
    %377 = arith.select %375, %376, %373 : vector<16x16xi1>, vector<16x16xf32>
    %378 = vector.extract_strided_slice %346 {offsets = [0, 0], sizes = [16, 8], strides = [1, 1]} : vector<16x64xf32> to vector<16x8xf32>
    %cst_141 = arith.constant dense<0.000000e+00> : vector<16x8xf32>
    %379 = tpu.matmul %377, %378, %cst_141 {dimension_numbers = #tpu.dot_dimension_numbers<[1], [0], [0], [1], [0, 0, 1, 1], [], []>} : vector<16x16xf32>, vector<16x8xf32>, vector<16x8xf32> -> vector<16x8xf32>
    %380 = vector.extract_strided_slice %342 {offsets = [0, 1], sizes = [16, 1], strides = [1, 1]} : vector<16x8xf32> to vector<16x1xf32>
    %381 = vector.extract_strided_slice %344 {offsets = [1, 0], sizes = [1, 16], strides = [1, 1]} : vector<8x16xf32> to vector<1x16xf32>
    %382 = vector.broadcast %380 : vector<16x1xf32> to vector<16x16xf32>
    %383 = vector.broadcast %381 : vector<1x16xf32> to vector<16x16xf32>
    %384 = arith.addf %382, %383 : vector<16x16xf32>
    %cst_142 = arith.constant 0.000000e+00 : f32
    %385 = vector.broadcast %cst_142 : f32 to vector<16x16xf32>
    %386 = arith.cmpf ogt, %384, %385 : vector<16x16xf32>
    %cst_143 = arith.constant 2.000000e-01 : f32
    %387 = vector.broadcast %cst_143 : f32 to vector<16x16xf32>
    %388 = arith.mulf %387, %384 : vector<16x16xf32>
    %389 = arith.select %386, %384, %388 : vector<16x16xi1>, vector<16x16xf32>
    %cst_144 = arith.constant 0.294014096 : f32
    %390 = vector.broadcast %cst_144 : f32 to vector<16x16xf32>
    %391 = arith.mulf %389, %390 : vector<16x16xf32>
    %cst_145 = arith.constant -1.000000e+30 : f32
    %392 = vector.broadcast %cst_145 : f32 to vector<16x16xf32>
    %393 = arith.select %3, %391, %392 : vector<16x16xi1>, vector<16x16xf32>
    %cst_146 = arith.constant dense<0xFF800000> : vector<16xf32>
    %394 = vector.multi_reduction <maximumf>, %393, %cst_146 [1] : vector<16x16xf32> to vector<16xf32>
    %395 = vector.shape_cast %394 : vector<16xf32> to vector<16x1xf32>
    %396 = vector.broadcast %395 : vector<16x1xf32> to vector<16x16xf32>
    %397 = arith.subf %393, %396 : vector<16x16xf32>
    %398 = math.exp %397 : vector<16x16xf32>
    %cst_147 = arith.constant 0.000000e+00 : f32
    %399 = vector.broadcast %cst_147 : f32 to vector<16x16xf32>
    %400 = arith.select %3, %398, %399 : vector<16x16xi1>, vector<16x16xf32>
    %cst_148 = arith.constant dense<0.000000e+00> : vector<16xf32>
    %401 = vector.multi_reduction <add>, %400, %cst_148 [1] : vector<16x16xf32> to vector<16xf32>
    %402 = vector.shape_cast %401 : vector<16xf32> to vector<16x1xf32>
    %cst_149 = arith.constant 1.000000e-16 : f32
    %403 = vector.broadcast %cst_149 : f32 to vector<16x1xf32>
    %404 = arith.maximumf %402, %403 : vector<16x1xf32>
    %405 = vector.broadcast %404 : vector<16x1xf32> to vector<16x16xf32>
    %406 = arith.divf %400, %405 : vector<16x16xf32>
    %cst_150 = arith.constant 3.000000e-02 : f32
    %407 = vector.broadcast %cst_150 : f32 to vector<16x16xf32>
    %408 = arith.cmpf olt, %406, %407 : vector<16x16xf32>
    %cst_151 = arith.constant 0.000000e+00 : f32
    %409 = vector.broadcast %cst_151 : f32 to vector<16x16xf32>
    %410 = arith.select %408, %409, %406 : vector<16x16xi1>, vector<16x16xf32>
    %411 = vector.extract_strided_slice %346 {offsets = [0, 8], sizes = [16, 8], strides = [1, 1]} : vector<16x64xf32> to vector<16x8xf32>
    %cst_152 = arith.constant dense<0.000000e+00> : vector<16x8xf32>
    %412 = tpu.matmul %410, %411, %cst_152 {dimension_numbers = #tpu.dot_dimension_numbers<[1], [0], [0], [1], [0, 0, 1, 1], [], []>} : vector<16x16xf32>, vector<16x8xf32>, vector<16x8xf32> -> vector<16x8xf32>
    %413 = arith.addf %379, %412 : vector<16x8xf32>
    %414 = vector.extract_strided_slice %342 {offsets = [0, 2], sizes = [16, 1], strides = [1, 1]} : vector<16x8xf32> to vector<16x1xf32>
    %415 = vector.extract_strided_slice %344 {offsets = [2, 0], sizes = [1, 16], strides = [1, 1]} : vector<8x16xf32> to vector<1x16xf32>
    %416 = vector.broadcast %414 : vector<16x1xf32> to vector<16x16xf32>
    %417 = vector.broadcast %415 : vector<1x16xf32> to vector<16x16xf32>
    %418 = arith.addf %416, %417 : vector<16x16xf32>
    %cst_153 = arith.constant 0.000000e+00 : f32
    %419 = vector.broadcast %cst_153 : f32 to vector<16x16xf32>
    %420 = arith.cmpf ogt, %418, %419 : vector<16x16xf32>
    %cst_154 = arith.constant 2.000000e-01 : f32
    %421 = vector.broadcast %cst_154 : f32 to vector<16x16xf32>
    %422 = arith.mulf %421, %418 : vector<16x16xf32>
    %423 = arith.select %420, %418, %422 : vector<16x16xi1>, vector<16x16xf32>
    %cst_155 = arith.constant 0.294014096 : f32
    %424 = vector.broadcast %cst_155 : f32 to vector<16x16xf32>
    %425 = arith.mulf %423, %424 : vector<16x16xf32>
    %cst_156 = arith.constant -1.000000e+30 : f32
    %426 = vector.broadcast %cst_156 : f32 to vector<16x16xf32>
    %427 = arith.select %3, %425, %426 : vector<16x16xi1>, vector<16x16xf32>
    %cst_157 = arith.constant dense<0xFF800000> : vector<16xf32>
    %428 = vector.multi_reduction <maximumf>, %427, %cst_157 [1] : vector<16x16xf32> to vector<16xf32>
    %429 = vector.shape_cast %428 : vector<16xf32> to vector<16x1xf32>
    %430 = vector.broadcast %429 : vector<16x1xf32> to vector<16x16xf32>
    %431 = arith.subf %427, %430 : vector<16x16xf32>
    %432 = math.exp %431 : vector<16x16xf32>
    %cst_158 = arith.constant 0.000000e+00 : f32
    %433 = vector.broadcast %cst_158 : f32 to vector<16x16xf32>
    %434 = arith.select %3, %432, %433 : vector<16x16xi1>, vector<16x16xf32>
    %cst_159 = arith.constant dense<0.000000e+00> : vector<16xf32>
    %435 = vector.multi_reduction <add>, %434, %cst_159 [1] : vector<16x16xf32> to vector<16xf32>
    %436 = vector.shape_cast %435 : vector<16xf32> to vector<16x1xf32>
    %cst_160 = arith.constant 1.000000e-16 : f32
    %437 = vector.broadcast %cst_160 : f32 to vector<16x1xf32>
    %438 = arith.maximumf %436, %437 : vector<16x1xf32>
    %439 = vector.broadcast %438 : vector<16x1xf32> to vector<16x16xf32>
    %440 = arith.divf %434, %439 : vector<16x16xf32>
    %cst_161 = arith.constant 3.000000e-02 : f32
    %441 = vector.broadcast %cst_161 : f32 to vector<16x16xf32>
    %442 = arith.cmpf olt, %440, %441 : vector<16x16xf32>
    %cst_162 = arith.constant 0.000000e+00 : f32
    %443 = vector.broadcast %cst_162 : f32 to vector<16x16xf32>
    %444 = arith.select %442, %443, %440 : vector<16x16xi1>, vector<16x16xf32>
    %445 = vector.extract_strided_slice %346 {offsets = [0, 16], sizes = [16, 8], strides = [1, 1]} : vector<16x64xf32> to vector<16x8xf32>
    %cst_163 = arith.constant dense<0.000000e+00> : vector<16x8xf32>
    %446 = tpu.matmul %444, %445, %cst_163 {dimension_numbers = #tpu.dot_dimension_numbers<[1], [0], [0], [1], [0, 0, 1, 1], [], []>} : vector<16x16xf32>, vector<16x8xf32>, vector<16x8xf32> -> vector<16x8xf32>
    %447 = arith.addf %413, %446 : vector<16x8xf32>
    %448 = vector.extract_strided_slice %342 {offsets = [0, 3], sizes = [16, 1], strides = [1, 1]} : vector<16x8xf32> to vector<16x1xf32>
    %449 = vector.extract_strided_slice %344 {offsets = [3, 0], sizes = [1, 16], strides = [1, 1]} : vector<8x16xf32> to vector<1x16xf32>
    %450 = vector.broadcast %448 : vector<16x1xf32> to vector<16x16xf32>
    %451 = vector.broadcast %449 : vector<1x16xf32> to vector<16x16xf32>
    %452 = arith.addf %450, %451 : vector<16x16xf32>
    %cst_164 = arith.constant 0.000000e+00 : f32
    %453 = vector.broadcast %cst_164 : f32 to vector<16x16xf32>
    %454 = arith.cmpf ogt, %452, %453 : vector<16x16xf32>
    %cst_165 = arith.constant 2.000000e-01 : f32
    %455 = vector.broadcast %cst_165 : f32 to vector<16x16xf32>
    %456 = arith.mulf %455, %452 : vector<16x16xf32>
    %457 = arith.select %454, %452, %456 : vector<16x16xi1>, vector<16x16xf32>
    %cst_166 = arith.constant 0.294014096 : f32
    %458 = vector.broadcast %cst_166 : f32 to vector<16x16xf32>
    %459 = arith.mulf %457, %458 : vector<16x16xf32>
    %cst_167 = arith.constant -1.000000e+30 : f32
    %460 = vector.broadcast %cst_167 : f32 to vector<16x16xf32>
    %461 = arith.select %3, %459, %460 : vector<16x16xi1>, vector<16x16xf32>
    %cst_168 = arith.constant dense<0xFF800000> : vector<16xf32>
    %462 = vector.multi_reduction <maximumf>, %461, %cst_168 [1] : vector<16x16xf32> to vector<16xf32>
    %463 = vector.shape_cast %462 : vector<16xf32> to vector<16x1xf32>
    %464 = vector.broadcast %463 : vector<16x1xf32> to vector<16x16xf32>
    %465 = arith.subf %461, %464 : vector<16x16xf32>
    %466 = math.exp %465 : vector<16x16xf32>
    %cst_169 = arith.constant 0.000000e+00 : f32
    %467 = vector.broadcast %cst_169 : f32 to vector<16x16xf32>
    %468 = arith.select %3, %466, %467 : vector<16x16xi1>, vector<16x16xf32>
    %cst_170 = arith.constant dense<0.000000e+00> : vector<16xf32>
    %469 = vector.multi_reduction <add>, %468, %cst_170 [1] : vector<16x16xf32> to vector<16xf32>
    %470 = vector.shape_cast %469 : vector<16xf32> to vector<16x1xf32>
    %cst_171 = arith.constant 1.000000e-16 : f32
    %471 = vector.broadcast %cst_171 : f32 to vector<16x1xf32>
    %472 = arith.maximumf %470, %471 : vector<16x1xf32>
    %473 = vector.broadcast %472 : vector<16x1xf32> to vector<16x16xf32>
    %474 = arith.divf %468, %473 : vector<16x16xf32>
    %cst_172 = arith.constant 3.000000e-02 : f32
    %475 = vector.broadcast %cst_172 : f32 to vector<16x16xf32>
    %476 = arith.cmpf olt, %474, %475 : vector<16x16xf32>
    %cst_173 = arith.constant 0.000000e+00 : f32
    %477 = vector.broadcast %cst_173 : f32 to vector<16x16xf32>
    %478 = arith.select %476, %477, %474 : vector<16x16xi1>, vector<16x16xf32>
    %479 = vector.extract_strided_slice %346 {offsets = [0, 24], sizes = [16, 8], strides = [1, 1]} : vector<16x64xf32> to vector<16x8xf32>
    %cst_174 = arith.constant dense<0.000000e+00> : vector<16x8xf32>
    %480 = tpu.matmul %478, %479, %cst_174 {dimension_numbers = #tpu.dot_dimension_numbers<[1], [0], [0], [1], [0, 0, 1, 1], [], []>} : vector<16x16xf32>, vector<16x8xf32>, vector<16x8xf32> -> vector<16x8xf32>
    %481 = arith.addf %447, %480 : vector<16x8xf32>
    %482 = vector.extract_strided_slice %342 {offsets = [0, 4], sizes = [16, 1], strides = [1, 1]} : vector<16x8xf32> to vector<16x1xf32>
    %483 = vector.extract_strided_slice %344 {offsets = [4, 0], sizes = [1, 16], strides = [1, 1]} : vector<8x16xf32> to vector<1x16xf32>
    %484 = vector.broadcast %482 : vector<16x1xf32> to vector<16x16xf32>
    %485 = vector.broadcast %483 : vector<1x16xf32> to vector<16x16xf32>
    %486 = arith.addf %484, %485 : vector<16x16xf32>
    %cst_175 = arith.constant 0.000000e+00 : f32
    %487 = vector.broadcast %cst_175 : f32 to vector<16x16xf32>
    %488 = arith.cmpf ogt, %486, %487 : vector<16x16xf32>
    %cst_176 = arith.constant 2.000000e-01 : f32
    %489 = vector.broadcast %cst_176 : f32 to vector<16x16xf32>
    %490 = arith.mulf %489, %486 : vector<16x16xf32>
    %491 = arith.select %488, %486, %490 : vector<16x16xi1>, vector<16x16xf32>
    %cst_177 = arith.constant 0.294014096 : f32
    %492 = vector.broadcast %cst_177 : f32 to vector<16x16xf32>
    %493 = arith.mulf %491, %492 : vector<16x16xf32>
    %cst_178 = arith.constant -1.000000e+30 : f32
    %494 = vector.broadcast %cst_178 : f32 to vector<16x16xf32>
    %495 = arith.select %3, %493, %494 : vector<16x16xi1>, vector<16x16xf32>
    %cst_179 = arith.constant dense<0xFF800000> : vector<16xf32>
    %496 = vector.multi_reduction <maximumf>, %495, %cst_179 [1] : vector<16x16xf32> to vector<16xf32>
    %497 = vector.shape_cast %496 : vector<16xf32> to vector<16x1xf32>
    %498 = vector.broadcast %497 : vector<16x1xf32> to vector<16x16xf32>
    %499 = arith.subf %495, %498 : vector<16x16xf32>
    %500 = math.exp %499 : vector<16x16xf32>
    %cst_180 = arith.constant 0.000000e+00 : f32
    %501 = vector.broadcast %cst_180 : f32 to vector<16x16xf32>
    %502 = arith.select %3, %500, %501 : vector<16x16xi1>, vector<16x16xf32>
    %cst_181 = arith.constant dense<0.000000e+00> : vector<16xf32>
    %503 = vector.multi_reduction <add>, %502, %cst_181 [1] : vector<16x16xf32> to vector<16xf32>
    %504 = vector.shape_cast %503 : vector<16xf32> to vector<16x1xf32>
    %cst_182 = arith.constant 1.000000e-16 : f32
    %505 = vector.broadcast %cst_182 : f32 to vector<16x1xf32>
    %506 = arith.maximumf %504, %505 : vector<16x1xf32>
    %507 = vector.broadcast %506 : vector<16x1xf32> to vector<16x16xf32>
    %508 = arith.divf %502, %507 : vector<16x16xf32>
    %cst_183 = arith.constant 3.000000e-02 : f32
    %509 = vector.broadcast %cst_183 : f32 to vector<16x16xf32>
    %510 = arith.cmpf olt, %508, %509 : vector<16x16xf32>
    %cst_184 = arith.constant 0.000000e+00 : f32
    %511 = vector.broadcast %cst_184 : f32 to vector<16x16xf32>
    %512 = arith.select %510, %511, %508 : vector<16x16xi1>, vector<16x16xf32>
    %513 = vector.extract_strided_slice %346 {offsets = [0, 32], sizes = [16, 8], strides = [1, 1]} : vector<16x64xf32> to vector<16x8xf32>
    %cst_185 = arith.constant dense<0.000000e+00> : vector<16x8xf32>
    %514 = tpu.matmul %512, %513, %cst_185 {dimension_numbers = #tpu.dot_dimension_numbers<[1], [0], [0], [1], [0, 0, 1, 1], [], []>} : vector<16x16xf32>, vector<16x8xf32>, vector<16x8xf32> -> vector<16x8xf32>
    %515 = arith.addf %481, %514 : vector<16x8xf32>
    %516 = vector.extract_strided_slice %342 {offsets = [0, 5], sizes = [16, 1], strides = [1, 1]} : vector<16x8xf32> to vector<16x1xf32>
    %517 = vector.extract_strided_slice %344 {offsets = [5, 0], sizes = [1, 16], strides = [1, 1]} : vector<8x16xf32> to vector<1x16xf32>
    %518 = vector.broadcast %516 : vector<16x1xf32> to vector<16x16xf32>
    %519 = vector.broadcast %517 : vector<1x16xf32> to vector<16x16xf32>
    %520 = arith.addf %518, %519 : vector<16x16xf32>
    %cst_186 = arith.constant 0.000000e+00 : f32
    %521 = vector.broadcast %cst_186 : f32 to vector<16x16xf32>
    %522 = arith.cmpf ogt, %520, %521 : vector<16x16xf32>
    %cst_187 = arith.constant 2.000000e-01 : f32
    %523 = vector.broadcast %cst_187 : f32 to vector<16x16xf32>
    %524 = arith.mulf %523, %520 : vector<16x16xf32>
    %525 = arith.select %522, %520, %524 : vector<16x16xi1>, vector<16x16xf32>
    %cst_188 = arith.constant 0.294014096 : f32
    %526 = vector.broadcast %cst_188 : f32 to vector<16x16xf32>
    %527 = arith.mulf %525, %526 : vector<16x16xf32>
    %cst_189 = arith.constant -1.000000e+30 : f32
    %528 = vector.broadcast %cst_189 : f32 to vector<16x16xf32>
    %529 = arith.select %3, %527, %528 : vector<16x16xi1>, vector<16x16xf32>
    %cst_190 = arith.constant dense<0xFF800000> : vector<16xf32>
    %530 = vector.multi_reduction <maximumf>, %529, %cst_190 [1] : vector<16x16xf32> to vector<16xf32>
    %531 = vector.shape_cast %530 : vector<16xf32> to vector<16x1xf32>
    %532 = vector.broadcast %531 : vector<16x1xf32> to vector<16x16xf32>
    %533 = arith.subf %529, %532 : vector<16x16xf32>
    %534 = math.exp %533 : vector<16x16xf32>
    %cst_191 = arith.constant 0.000000e+00 : f32
    %535 = vector.broadcast %cst_191 : f32 to vector<16x16xf32>
    %536 = arith.select %3, %534, %535 : vector<16x16xi1>, vector<16x16xf32>
    %cst_192 = arith.constant dense<0.000000e+00> : vector<16xf32>
    %537 = vector.multi_reduction <add>, %536, %cst_192 [1] : vector<16x16xf32> to vector<16xf32>
    %538 = vector.shape_cast %537 : vector<16xf32> to vector<16x1xf32>
    %cst_193 = arith.constant 1.000000e-16 : f32
    %539 = vector.broadcast %cst_193 : f32 to vector<16x1xf32>
    %540 = arith.maximumf %538, %539 : vector<16x1xf32>
    %541 = vector.broadcast %540 : vector<16x1xf32> to vector<16x16xf32>
    %542 = arith.divf %536, %541 : vector<16x16xf32>
    %cst_194 = arith.constant 3.000000e-02 : f32
    %543 = vector.broadcast %cst_194 : f32 to vector<16x16xf32>
    %544 = arith.cmpf olt, %542, %543 : vector<16x16xf32>
    %cst_195 = arith.constant 0.000000e+00 : f32
    %545 = vector.broadcast %cst_195 : f32 to vector<16x16xf32>
    %546 = arith.select %544, %545, %542 : vector<16x16xi1>, vector<16x16xf32>
    %547 = vector.extract_strided_slice %346 {offsets = [0, 40], sizes = [16, 8], strides = [1, 1]} : vector<16x64xf32> to vector<16x8xf32>
    %cst_196 = arith.constant dense<0.000000e+00> : vector<16x8xf32>
    %548 = tpu.matmul %546, %547, %cst_196 {dimension_numbers = #tpu.dot_dimension_numbers<[1], [0], [0], [1], [0, 0, 1, 1], [], []>} : vector<16x16xf32>, vector<16x8xf32>, vector<16x8xf32> -> vector<16x8xf32>
    %549 = arith.addf %515, %548 : vector<16x8xf32>
    %550 = vector.extract_strided_slice %342 {offsets = [0, 6], sizes = [16, 1], strides = [1, 1]} : vector<16x8xf32> to vector<16x1xf32>
    %551 = vector.extract_strided_slice %344 {offsets = [6, 0], sizes = [1, 16], strides = [1, 1]} : vector<8x16xf32> to vector<1x16xf32>
    %552 = vector.broadcast %550 : vector<16x1xf32> to vector<16x16xf32>
    %553 = vector.broadcast %551 : vector<1x16xf32> to vector<16x16xf32>
    %554 = arith.addf %552, %553 : vector<16x16xf32>
    %cst_197 = arith.constant 0.000000e+00 : f32
    %555 = vector.broadcast %cst_197 : f32 to vector<16x16xf32>
    %556 = arith.cmpf ogt, %554, %555 : vector<16x16xf32>
    %cst_198 = arith.constant 2.000000e-01 : f32
    %557 = vector.broadcast %cst_198 : f32 to vector<16x16xf32>
    %558 = arith.mulf %557, %554 : vector<16x16xf32>
    %559 = arith.select %556, %554, %558 : vector<16x16xi1>, vector<16x16xf32>
    %cst_199 = arith.constant 0.294014096 : f32
    %560 = vector.broadcast %cst_199 : f32 to vector<16x16xf32>
    %561 = arith.mulf %559, %560 : vector<16x16xf32>
    %cst_200 = arith.constant -1.000000e+30 : f32
    %562 = vector.broadcast %cst_200 : f32 to vector<16x16xf32>
    %563 = arith.select %3, %561, %562 : vector<16x16xi1>, vector<16x16xf32>
    %cst_201 = arith.constant dense<0xFF800000> : vector<16xf32>
    %564 = vector.multi_reduction <maximumf>, %563, %cst_201 [1] : vector<16x16xf32> to vector<16xf32>
    %565 = vector.shape_cast %564 : vector<16xf32> to vector<16x1xf32>
    %566 = vector.broadcast %565 : vector<16x1xf32> to vector<16x16xf32>
    %567 = arith.subf %563, %566 : vector<16x16xf32>
    %568 = math.exp %567 : vector<16x16xf32>
    %cst_202 = arith.constant 0.000000e+00 : f32
    %569 = vector.broadcast %cst_202 : f32 to vector<16x16xf32>
    %570 = arith.select %3, %568, %569 : vector<16x16xi1>, vector<16x16xf32>
    %cst_203 = arith.constant dense<0.000000e+00> : vector<16xf32>
    %571 = vector.multi_reduction <add>, %570, %cst_203 [1] : vector<16x16xf32> to vector<16xf32>
    %572 = vector.shape_cast %571 : vector<16xf32> to vector<16x1xf32>
    %cst_204 = arith.constant 1.000000e-16 : f32
    %573 = vector.broadcast %cst_204 : f32 to vector<16x1xf32>
    %574 = arith.maximumf %572, %573 : vector<16x1xf32>
    %575 = vector.broadcast %574 : vector<16x1xf32> to vector<16x16xf32>
    %576 = arith.divf %570, %575 : vector<16x16xf32>
    %cst_205 = arith.constant 3.000000e-02 : f32
    %577 = vector.broadcast %cst_205 : f32 to vector<16x16xf32>
    %578 = arith.cmpf olt, %576, %577 : vector<16x16xf32>
    %cst_206 = arith.constant 0.000000e+00 : f32
    %579 = vector.broadcast %cst_206 : f32 to vector<16x16xf32>
    %580 = arith.select %578, %579, %576 : vector<16x16xi1>, vector<16x16xf32>
    %581 = vector.extract_strided_slice %346 {offsets = [0, 48], sizes = [16, 8], strides = [1, 1]} : vector<16x64xf32> to vector<16x8xf32>
    %cst_207 = arith.constant dense<0.000000e+00> : vector<16x8xf32>
    %582 = tpu.matmul %580, %581, %cst_207 {dimension_numbers = #tpu.dot_dimension_numbers<[1], [0], [0], [1], [0, 0, 1, 1], [], []>} : vector<16x16xf32>, vector<16x8xf32>, vector<16x8xf32> -> vector<16x8xf32>
    %583 = arith.addf %549, %582 : vector<16x8xf32>
    %584 = vector.extract_strided_slice %342 {offsets = [0, 7], sizes = [16, 1], strides = [1, 1]} : vector<16x8xf32> to vector<16x1xf32>
    %585 = vector.extract_strided_slice %344 {offsets = [7, 0], sizes = [1, 16], strides = [1, 1]} : vector<8x16xf32> to vector<1x16xf32>
    %586 = vector.broadcast %584 : vector<16x1xf32> to vector<16x16xf32>
    %587 = vector.broadcast %585 : vector<1x16xf32> to vector<16x16xf32>
    %588 = arith.addf %586, %587 : vector<16x16xf32>
    %cst_208 = arith.constant 0.000000e+00 : f32
    %589 = vector.broadcast %cst_208 : f32 to vector<16x16xf32>
    %590 = arith.cmpf ogt, %588, %589 : vector<16x16xf32>
    %cst_209 = arith.constant 2.000000e-01 : f32
    %591 = vector.broadcast %cst_209 : f32 to vector<16x16xf32>
    %592 = arith.mulf %591, %588 : vector<16x16xf32>
    %593 = arith.select %590, %588, %592 : vector<16x16xi1>, vector<16x16xf32>
    %cst_210 = arith.constant 0.294014096 : f32
    %594 = vector.broadcast %cst_210 : f32 to vector<16x16xf32>
    %595 = arith.mulf %593, %594 : vector<16x16xf32>
    %cst_211 = arith.constant -1.000000e+30 : f32
    %596 = vector.broadcast %cst_211 : f32 to vector<16x16xf32>
    %597 = arith.select %3, %595, %596 : vector<16x16xi1>, vector<16x16xf32>
    %cst_212 = arith.constant dense<0xFF800000> : vector<16xf32>
    %598 = vector.multi_reduction <maximumf>, %597, %cst_212 [1] : vector<16x16xf32> to vector<16xf32>
    %599 = vector.shape_cast %598 : vector<16xf32> to vector<16x1xf32>
    %600 = vector.broadcast %599 : vector<16x1xf32> to vector<16x16xf32>
    %601 = arith.subf %597, %600 : vector<16x16xf32>
    %602 = math.exp %601 : vector<16x16xf32>
    %cst_213 = arith.constant 0.000000e+00 : f32
    %603 = vector.broadcast %cst_213 : f32 to vector<16x16xf32>
    %604 = arith.select %3, %602, %603 : vector<16x16xi1>, vector<16x16xf32>
    %cst_214 = arith.constant dense<0.000000e+00> : vector<16xf32>
    %605 = vector.multi_reduction <add>, %604, %cst_214 [1] : vector<16x16xf32> to vector<16xf32>
    %606 = vector.shape_cast %605 : vector<16xf32> to vector<16x1xf32>
    %cst_215 = arith.constant 1.000000e-16 : f32
    %607 = vector.broadcast %cst_215 : f32 to vector<16x1xf32>
    %608 = arith.maximumf %606, %607 : vector<16x1xf32>
    %609 = vector.broadcast %608 : vector<16x1xf32> to vector<16x16xf32>
    %610 = arith.divf %604, %609 : vector<16x16xf32>
    %cst_216 = arith.constant 3.000000e-02 : f32
    %611 = vector.broadcast %cst_216 : f32 to vector<16x16xf32>
    %612 = arith.cmpf olt, %610, %611 : vector<16x16xf32>
    %cst_217 = arith.constant 0.000000e+00 : f32
    %613 = vector.broadcast %cst_217 : f32 to vector<16x16xf32>
    %614 = arith.select %612, %613, %610 : vector<16x16xi1>, vector<16x16xf32>
    %615 = vector.extract_strided_slice %346 {offsets = [0, 56], sizes = [16, 8], strides = [1, 1]} : vector<16x64xf32> to vector<16x8xf32>
    %cst_218 = arith.constant dense<0.000000e+00> : vector<16x8xf32>
    %616 = tpu.matmul %614, %615, %cst_218 {dimension_numbers = #tpu.dot_dimension_numbers<[1], [0], [0], [1], [0, 0, 1, 1], [], []>} : vector<16x16xf32>, vector<16x8xf32>, vector<16x8xf32> -> vector<16x8xf32>
    %617 = arith.addf %583, %616 : vector<16x8xf32>
    %c2 = arith.constant 2 : index
    %c0_219 = arith.constant 0 : index
    %618 = vector.load %arg11[%c2, %c0_219] : memref<5x8xf32, #tpu.memory_space<vmem>>, vector<1x8xf32>
    %619 = vector.broadcast %618 : vector<1x8xf32> to vector<16x8xf32>
    %620 = arith.addf %617, %619 : vector<16x8xf32>
    %cst_220 = arith.constant 0.000000e+00 : f32
    %621 = vector.broadcast %cst_220 : f32 to vector<16x8xf32>
    %622 = arith.cmpf ogt, %620, %621 : vector<16x8xf32>
    %cst_221 = arith.constant 0.00999999977 : f32
    %623 = vector.broadcast %cst_221 : f32 to vector<16x8xf32>
    %624 = arith.mulf %623, %620 : vector<16x8xf32>
    %625 = arith.select %622, %620, %624 : vector<16x8xi1>, vector<16x8xf32>
    %626 = arith.addf %625, %0 : vector<16x8xf32>
    %cst_222 = arith.constant dense<0.000000e+00> : vector<8xf32>
    %627 = vector.multi_reduction <add>, %626, %cst_222 [0] : vector<16x8xf32> to vector<8xf32>
    %628 = vector.shape_cast %627 : vector<8xf32> to vector<1x8xf32>
    %cst_223 = arith.constant 1.600000e+01 : f32
    %629 = vector.broadcast %cst_223 : f32 to vector<1x8xf32>
    %630 = arith.divf %628, %629 : vector<1x8xf32>
    %631 = arith.mulf %626, %626 : vector<16x8xf32>
    %cst_224 = arith.constant dense<0.000000e+00> : vector<8xf32>
    %632 = vector.multi_reduction <add>, %631, %cst_224 [0] : vector<16x8xf32> to vector<8xf32>
    %633 = vector.shape_cast %632 : vector<8xf32> to vector<1x8xf32>
    %cst_225 = arith.constant 1.600000e+01 : f32
    %634 = vector.broadcast %cst_225 : f32 to vector<1x8xf32>
    %635 = arith.divf %633, %634 : vector<1x8xf32>
    %636 = arith.mulf %630, %630 : vector<1x8xf32>
    %637 = arith.subf %635, %636 : vector<1x8xf32>
    %cst_226 = arith.constant 0.000000e+00 : f32
    %638 = vector.broadcast %cst_226 : f32 to vector<1x8xf32>
    %639 = arith.maximumf %637, %638 : vector<1x8xf32>
    %640 = vector.broadcast %630 : vector<1x8xf32> to vector<16x8xf32>
    %641 = arith.subf %626, %640 : vector<16x8xf32>
    %cst_227 = arith.constant 9.99999974E-6 : f32
    %642 = vector.broadcast %cst_227 : f32 to vector<1x8xf32>
    %643 = arith.addf %639, %642 : vector<1x8xf32>
    %644 = math.rsqrt %643 : vector<1x8xf32>
    %645 = vector.broadcast %644 : vector<1x8xf32> to vector<16x8xf32>
    %646 = arith.mulf %641, %645 : vector<16x8xf32>
    %c0_228 = arith.constant 0 : index
    %c0_229 = arith.constant 0 : index
    %647 = vector.load %arg9[%c0_228, %c0_229] : memref<8x8xf32, #tpu.memory_space<vmem>>, vector<8x8xf32>
    %cst_230 = arith.constant dense<0.000000e+00> : vector<16x8xf32>
    %648 = tpu.matmul %646, %647, %cst_230 {dimension_numbers = #tpu.dot_dimension_numbers<[1], [0], [0], [1], [0, 0, 1, 1], [], []>} : vector<16x8xf32>, vector<8x8xf32>, vector<16x8xf32> -> vector<16x8xf32>
    %c3 = arith.constant 3 : index
    %c0_231 = arith.constant 0 : index
    %649 = vector.load %arg11[%c3, %c0_231] : memref<5x8xf32, #tpu.memory_space<vmem>>, vector<1x8xf32>
    %650 = vector.broadcast %649 : vector<1x8xf32> to vector<16x8xf32>
    %651 = arith.addf %648, %650 : vector<16x8xf32>
    %cst_232 = arith.constant 0.000000e+00 : f32
    %652 = vector.broadcast %cst_232 : f32 to vector<16x8xf32>
    %653 = arith.cmpf ogt, %651, %652 : vector<16x8xf32>
    %cst_233 = arith.constant 0.00999999977 : f32
    %654 = vector.broadcast %cst_233 : f32 to vector<16x8xf32>
    %655 = arith.mulf %654, %651 : vector<16x8xf32>
    %656 = arith.select %653, %651, %655 : vector<16x8xi1>, vector<16x8xf32>
    %657 = arith.addf %656, %0 : vector<16x8xf32>
    %cst_234 = arith.constant dense<0.000000e+00> : vector<8xf32>
    %658 = vector.multi_reduction <add>, %657, %cst_234 [0] : vector<16x8xf32> to vector<8xf32>
    %659 = vector.shape_cast %658 : vector<8xf32> to vector<1x8xf32>
    %cst_235 = arith.constant 1.600000e+01 : f32
    %660 = vector.broadcast %cst_235 : f32 to vector<1x8xf32>
    %661 = arith.divf %659, %660 : vector<1x8xf32>
    %662 = arith.mulf %657, %657 : vector<16x8xf32>
    %cst_236 = arith.constant dense<0.000000e+00> : vector<8xf32>
    %663 = vector.multi_reduction <add>, %662, %cst_236 [0] : vector<16x8xf32> to vector<8xf32>
    %664 = vector.shape_cast %663 : vector<8xf32> to vector<1x8xf32>
    %cst_237 = arith.constant 1.600000e+01 : f32
    %665 = vector.broadcast %cst_237 : f32 to vector<1x8xf32>
    %666 = arith.divf %664, %665 : vector<1x8xf32>
    %667 = arith.mulf %661, %661 : vector<1x8xf32>
    %668 = arith.subf %666, %667 : vector<1x8xf32>
    %cst_238 = arith.constant 0.000000e+00 : f32
    %669 = vector.broadcast %cst_238 : f32 to vector<1x8xf32>
    %670 = arith.maximumf %668, %669 : vector<1x8xf32>
    %671 = vector.broadcast %661 : vector<1x8xf32> to vector<16x8xf32>
    %672 = arith.subf %657, %671 : vector<16x8xf32>
    %cst_239 = arith.constant 9.99999974E-6 : f32
    %673 = vector.broadcast %cst_239 : f32 to vector<1x8xf32>
    %674 = arith.addf %670, %673 : vector<1x8xf32>
    %675 = math.rsqrt %674 : vector<1x8xf32>
    %676 = vector.broadcast %675 : vector<1x8xf32> to vector<16x8xf32>
    %677 = arith.mulf %672, %676 : vector<16x8xf32>
    %c0_240 = arith.constant 0 : index
    %c0_241 = arith.constant 0 : index
    %678 = vector.load %arg10[%c0_240, %c0_241] : memref<8x1xf32, #tpu.memory_space<vmem>>, vector<8x1xf32>
    %cst_242 = arith.constant dense<0.000000e+00> : vector<16x1xf32>
    %679 = tpu.matmul %677, %678, %cst_242 {dimension_numbers = #tpu.dot_dimension_numbers<[1], [0], [0], [1], [0, 0, 1, 1], [], []>} : vector<16x8xf32>, vector<8x1xf32>, vector<16x1xf32> -> vector<16x1xf32>
    %c4 = arith.constant 4 : index
    %c0_243 = arith.constant 0 : index
    %680 = vector.load %arg11[%c4, %c0_243] : memref<5x8xf32, #tpu.memory_space<vmem>>, vector<1x1xf32>
    %681 = vector.broadcast %680 : vector<1x1xf32> to vector<16x1xf32>
    %682 = arith.addf %679, %681 : vector<16x1xf32>
    %c0_244 = arith.constant 0 : index
    %c0_245 = arith.constant 0 : index
    %683 = vector.load %arg12[%c0_244, %c0_245] : memref<16x1xf32, #tpu.memory_space<vmem>>, vector<16x1xf32>
    tpu.vector_store %arg12[%c0_244, %c0_245], %682 {strides = array<i32>} : memref<16x1xf32, #tpu.memory_space<vmem>>, vector<16x1xf32>,
    return
  }
}

</mosaic_0001>

<llo_original>
// kernel: tpu_custom_call.1
$region0: #{tpu_custom_call.1}
  #allocation0 [shape = 'u32[]', space=smem, size = 0x4, offset = 0x4, fixed_abs, tag = 'smem constant byte address 0x4 - core index']
  #allocation1 [shape = 'u32[72,128]{1,0:T(1,128)}', space=vmem, size = 0x9000, scoped, tag = 'internal scratch']
  %s0 = inlined_call_operand.vmem [shape: f32[16,8], index: 0, kind: input, shape index: {}]
  %s1 = inlined_call_operand.vmem [shape: f32[16,16], index: 1, kind: input, shape index: {}]
  %s2 = inlined_call_operand.vmem [shape: f32[8,8], index: 2, kind: input, shape index: {}]
  %s3 = inlined_call_operand.hbm [shape: f32[8,8], index: 3, kind: input, shape index: {}]
  %s4 = inlined_call_operand.hbm [shape: f32[8,64], index: 4, kind: input, shape index: {}]
  %s5 = inlined_call_operand.hbm [shape: f32[8,8], index: 5, kind: input, shape index: {}]
  %s6 = inlined_call_operand.hbm [shape: f32[8,8], index: 6, kind: input, shape index: {}]
  %s7 = inlined_call_operand.hbm [shape: f32[8,64], index: 7, kind: input, shape index: {}]
  %s8 = inlined_call_operand.hbm [shape: f32[8,8], index: 8, kind: input, shape index: {}]
  %s9 = inlined_call_operand.hbm [shape: f32[8,8], index: 9, kind: input, shape index: {}]
  %s10 = inlined_call_operand.vmem [shape: f32[8,1], index: 10, kind: input, shape index: {}]
  %s11 = inlined_call_operand.vmem [shape: f32[5,8], index: 11, kind: input, shape index: {}]
  %s12 = inlined_call_operand.vmem [shape: f32[16,1], index: 12, kind: output, shape index: {}]
  %s13 = sld [smem:[#allocation0]]
  $region86: #{tpu_custom_call.1} parent=0
    _
  %s15 = ssub.s32 1, %s13
  %s16 = scalar_select 0, %s15, %s13
  $region1: #{tpu_custom_call.1} parent=0
    #allocation2 [shape = 'u8[4096]{0}', space=vmem, size = 0x1000, scoped, tag = 'input window, operand 3, single buffered']
    #allocation3 [shape = 's32[1]{0}', space=sflag, size = 0x4, scoped, tag = 'scoped memory for tpu_custom_call.1']
    #allocation4 [shape = 'u8[4096]{0}', space=vmem, size = 0x1000, scoped, tag = 'input window, operand 4, single buffered']
    #allocation5 [shape = 's32[1]{0}', space=sflag, size = 0x4, scoped, tag = 'scoped memory for tpu_custom_call.1']
    #allocation6 [shape = 'u8[4096]{0}', space=vmem, size = 0x1000, scoped, tag = 'input window, operand 5, single buffered']
    #allocation7 [shape = 'u8[4096]{0}', space=vmem, size = 0x1000, scoped, tag = 'input window, operand 6, single buffered']
    #allocation8 [shape = 's32[1]{0}', space=sflag, size = 0x4, scoped, tag = 'scoped memory for tpu_custom_call.1']
    #allocation9 [shape = 'u8[4096]{0}', space=vmem, size = 0x1000, scoped, tag = 'input window, operand 7, single buffered']
    #allocation10 [shape = 'u8[4096]{0}', space=vmem, size = 0x1000, scoped, tag = 'input window, operand 8, single buffered']
    #allocation11 [shape = 's32[1]{0}', space=sflag, size = 0x4, scoped, tag = 'scoped memory for tpu_custom_call.1']
    #allocation12 [shape = 'u8[4096]{0}', space=vmem, size = 0x1000, scoped, tag = 'input window, operand 9, single buffered']
    %17 = vsyncpa [#allocation3], 0
    %18 = vsyncpa [#allocation5], 0
    %19 = vsyncpa [#allocation8], 0
    %20 = vsyncpa [#allocation11], 0
    // Predicated region
    $region2: #{tpu_custom_call.1} parent=1 // pred_check
      _
    $region3: #{tpu_custom_call.1} parent=1 // pred_check_branch
      %22 = sbr.rel (0) target = $region5
    $region4: #{tpu_custom_call.1} parent=1 // pred_region
      _
    $region5: #{tpu_custom_call.1} parent=1 // pred_fallthru
      _
    // Predicated region
    $region6: #{tpu_custom_call.1} parent=1 // pred_check
      _
    $region7: #{tpu_custom_call.1} parent=1 // pred_check_branch
      %24 = sbr.rel (0) target = $region9
    $region8: #{tpu_custom_call.1} parent=1 // pred_region
      _
    $region9: #{tpu_custom_call.1} parent=1 // pred_fallthru
      _
    // Predicated region
    $region10: #{tpu_custom_call.1} parent=1 // pred_check
      _
    $region11: #{tpu_custom_call.1} parent=1 // pred_check_branch
      %26 = sbr.rel (0) target = $region13
    $region12: #{tpu_custom_call.1} parent=1 // pred_region
      _
    $region13: #{tpu_custom_call.1} parent=1 // pred_fallthru
      _
    // Predicated region
    $region14: #{tpu_custom_call.1} parent=1 // pred_check
      _
    $region15: #{tpu_custom_call.1} parent=1 // pred_check_branch
      %28 = sbr.rel (0) target = $region17
    $region16: #{tpu_custom_call.1} parent=1 // pred_region
      %30 = vsyncadd [#allocation3], 0
      %s32 = sshll.u32 %s3, 4
      %s33 = int_to_ptr.hbm [resolvable:$true] %s32
      %s34 = sshll.u32 [#allocation2], 4
      %s35 = int_to_ptr.vmem [resolvable:$true] %s34
      %37 = dma.hbm_to_vmem [thread:$0]  %s33, 128, %s35, [#allocation3]
    $region17: #{tpu_custom_call.1} parent=1 // pred_fallthru
      _
    // Predicated region
    $region18: #{tpu_custom_call.1} parent=1 // pred_check
      _
    $region19: #{tpu_custom_call.1} parent=1 // pred_check_branch
      %39 = sbr.rel (0) target = $region21
    $region20: #{tpu_custom_call.1} parent=1 // pred_region
      %41 = vsyncadd [#allocation5], 0
      %s43 = sshll.u32 %s4, 4
      %s44 = int_to_ptr.hbm [resolvable:$true] %s43
      %s45 = sshll.u32 [#allocation4], 4
      %s46 = int_to_ptr.vmem [resolvable:$true] %s45
      %48 = dma.hbm_to_vmem [thread:$0]  %s44, 128, %s46, [#allocation5]
    $region21: #{tpu_custom_call.1} parent=1 // pred_fallthru
      _
    // Predicated region
    $region22: #{tpu_custom_call.1} parent=1 // pred_check
      _
    $region23: #{tpu_custom_call.1} parent=1 // pred_check_branch
      %50 = sbr.rel (0) target = $region25
    $region24: #{tpu_custom_call.1} parent=1 // pred_region
      %52 = vsyncadd [#allocation5], 0
      %s54 = sshll.u32 %s5, 4
      %s55 = int_to_ptr.hbm [resolvable:$true] %s54
      %s56 = sshll.u32 [#allocation6], 4
      %s57 = int_to_ptr.vmem [resolvable:$true] %s56
      %59 = dma.hbm_to_vmem [thread:$0]  %s55, 128, %s57, [#allocation5]
    $region25: #{tpu_custom_call.1} parent=1 // pred_fallthru
      _
    // Predicated region
    $region26: #{tpu_custom_call.1} parent=1 // pred_check
      _
    $region27: #{tpu_custom_call.1} parent=1 // pred_check_branch
      %61 = sbr.rel (0) target = $region29
    $region28: #{tpu_custom_call.1} parent=1 // pred_region
      %63 = vsyncadd [#allocation8], 0
      %s65 = sshll.u32 %s6, 4
      %s66 = int_to_ptr.hbm [resolvable:$true] %s65
      %s67 = sshll.u32 [#allocation7], 4
      %s68 = int_to_ptr.vmem [resolvable:$true] %s67
      %70 = dma.hbm_to_vmem [thread:$0]  %s66, 128, %s68, [#allocation8]
    $region29: #{tpu_custom_call.1} parent=1 // pred_fallthru
      _
    // Predicated region
    $region30: #{tpu_custom_call.1} parent=1 // pred_check
      _
    $region31: #{tpu_custom_call.1} parent=1 // pred_check_branch
      %72 = sbr.rel (0) target = $region33
    $region32: #{tpu_custom_call.1} parent=1 // pred_region
      %74 = vsyncadd [#allocation8], 0
      %s76 = sshll.u32 %s7, 4
      %s77 = int_to_ptr.hbm [resolvable:$true] %s76
      %s78 = sshll.u32 [#allocation9], 4
      %s79 = int_to_ptr.vmem [resolvable:$true] %s78
      %81 = dma.hbm_to_vmem [thread:$0]  %s77, 128, %s79, [#allocation8]
    $region33: #{tpu_custom_call.1} parent=1 // pred_fallthru
      _
    // Predicated region
    $region34: #{tpu_custom_call.1} parent=1 // pred_check
      _
    $region35: #{tpu_custom_call.1} parent=1 // pred_check_branch
      %83 = sbr.rel (0) target = $region37
    $region36: #{tpu_custom_call.1} parent=1 // pred_region
      %85 = vsyncadd [#allocation11], 0
      %s87 = sshll.u32 %s8, 4
      %s88 = int_to_ptr.hbm [resolvable:$true] %s87
      %s89 = sshll.u32 [#allocation10], 4
      %s90 = int_to_ptr.vmem [resolvable:$true] %s89
      %92 = dma.hbm_to_vmem [thread:$0]  %s88, 128, %s90, [#allocation11]
    $region37: #{tpu_custom_call.1} parent=1 // pred_fallthru
      _
    // Predicated region
    $region38: #{tpu_custom_call.1} parent=1 // pred_check
      _
    $region39: #{tpu_custom_call.1} parent=1 // pred_check_branch
      %94 = sbr.rel (0) target = $region41
    $region40: #{tpu_custom_call.1} parent=1 // pred_region
      %96 = vsyncadd [#allocation11], 0
      %s98 = sshll.u32 %s9, 4
      %s99 = int_to_ptr.hbm [resolvable:$true] %s98
      %s100 = sshll.u32 [#allocation12], 4
      %s101 = int_to_ptr.vmem [resolvable:$true] %s100
      %103 = dma.hbm_to_vmem [thread:$0]  %s99, 128, %s101, [#allocation11]
    $region41: #{tpu_custom_call.1} parent=1 // pred_fallthru
      _
    // Predicated region
    $region42: #{tpu_custom_call.1} parent=1 // pred_check
      _
    $region43: #{tpu_custom_call.1} parent=1 // pred_check_branch
      %105 = sbr.rel (0) target = $region45
    $region44: #{tpu_custom_call.1} parent=1 // pred_region
      _
    $region45: #{tpu_custom_call.1} parent=1 // pred_fallthru
      _
    // Predicated region
    $region46: #{tpu_custom_call.1} parent=1 // pred_check
      _
    $region47: #{tpu_custom_call.1} parent=1 // pred_check_branch
      %107 = sbr.rel (0) target = $region49
    $region48: #{tpu_custom_call.1} parent=1 // pred_region
      _
    $region49: #{tpu_custom_call.1} parent=1 // pred_fallthru
      _
    // Predicated region
    $region50: #{tpu_custom_call.1} parent=1 // pred_check
      _
    $region51: #{tpu_custom_call.1} parent=1 // pred_check_branch
      %109 = sbr.rel (0) target = $region53
    $region52: #{tpu_custom_call.1} parent=1 // pred_region
      %111 = dma.done [#allocation3], 128
    $region53: #{tpu_custom_call.1} parent=1 // pred_fallthru
      _
    // Predicated region
    $region54: #{tpu_custom_call.1} parent=1 // pred_check
      _
    $region55: #{tpu_custom_call.1} parent=1 // pred_check_branch
      %113 = sbr.rel (0) target = $region57
    $region56: #{tpu_custom_call.1} parent=1 // pred_region
      %115 = dma.done [#allocation5], 128
    $region57: #{tpu_custom_call.1} parent=1 // pred_fallthru
      _
    // Predicated region
    $region58: #{tpu_custom_call.1} parent=1 // pred_check
      _
    $region59: #{tpu_custom_call.1} parent=1 // pred_check_branch
      %117 = sbr.rel (0) target = $region61
    $region60: #{tpu_custom_call.1} parent=1 // pred_region
      %119 = dma.done [#allocation5], 128
    $region61: #{tpu_custom_call.1} parent=1 // pred_fallthru
      _
    // Predicated region
    $region62: #{tpu_custom_call.1} parent=1 // pred_check
      _
    $region63: #{tpu_custom_call.1} parent=1 // pred_check_branch
      %121 = sbr.rel (0) target = $region65
    $region64: #{tpu_custom_call.1} parent=1 // pred_region
      %123 = dma.done [#allocation8], 128
    $region65: #{tpu_custom_call.1} parent=1 // pred_fallthru
      _
    // Predicated region
    $region66: #{tpu_custom_call.1} parent=1 // pred_check
      _
    $region67: #{tpu_custom_call.1} parent=1 // pred_check_branch
      %125 = sbr.rel (0) target = $region69
    $region68: #{tpu_custom_call.1} parent=1 // pred_region
      %127 = dma.done [#allocation8], 128
    $region69: #{tpu_custom_call.1} parent=1 // pred_fallthru
      _
    // Predicated region
    $region70: #{tpu_custom_call.1} parent=1 // pred_check
      _
    $region71: #{tpu_custom_call.1} parent=1 // pred_check_branch
      %129 = sbr.rel (0) target = $region73
    $region72: #{tpu_custom_call.1} parent=1 // pred_region
      %131 = dma.done [#allocation11], 128
    $region73: #{tpu_custom_call.1} parent=1 // pred_fallthru
      _
    // Predicated region
    $region74: #{tpu_custom_call.1} parent=1 // pred_check
      _
    $region75: #{tpu_custom_call.1} parent=1 // pred_check_branch
      %133 = sbr.rel (0) target = $region77
    $region76: #{tpu_custom_call.1} parent=1 // pred_region
      %135 = dma.done [#allocation11], 128
    $region77: #{tpu_custom_call.1} parent=1 // pred_fallthru
      _
    %v136 = vld [vmem:[%s0] sm:$0xff]
    %v137 = vld [vmem:[%s0 + $0x8] sm:$0xff]
    %v138 = vld [vmem:[%s1] sm:$0xff]
    %v139 = vld [vmem:[%s1 + $0x8] sm:$0xff]
    %vm140 = vcmp.gt.f32.partialorder %v138, 0.0
    %vm141 = vcmp.gt.f32.partialorder %v139, 0.0
    %v142 = vld [vmem:[%s2] sm:$0xff]
    %vm143 = vcmask 64512
    %v145 = vsel %vm143, %v136, 0
    %v148 = vsel %vm143, %v137, 0
    %150 = vmatpush.msra.mxu0 0.0
    %151 = vmatpush.msra.mxu0 0.0
    %152 = vmatpush.msra.mxu0 0.0
    %153 = vmatpush.msra.mxu0 0.0
    %154 = vmatpush.msra.mxu0 0.0
    %155 = vmatpush.msra.mxu0 0.0
    %156 = vmatpush.msra.mxu0 0.0
    %157 = vmatpush.msra.mxu0 0.0
    %158 = vmatpush.msra.mxu0 0.0
    %159 = vmatpush.msra.mxu0 0.0
    %160 = vmatpush.msra.mxu0 0.0
    %161 = vmatpush.msra.mxu0 0.0
    %162 = vmatpush.msra.mxu0 0.0
    %163 = vmatpush.msra.mxu0 0.0
    %164 = vmatpush.msra.mxu0 0.0
    %165 = vmatpush.msra.mxu0 %v142
    %166 = vmatmul.f32.gmra.mxu0 %v145
    %v167 = vpop.f32.mrf.mxu0
    %v168 = vadd.f32 0.0, %v167
    %169 = vmatmul.f32.gmra.mxu0 %v148
    %v170 = vpop.f32.mrf.mxu0
    %v171 = vadd.f32 0.0, %v170
    %172 = vdwg.mxu0
    %v173 = vld [vmem:[#allocation2] sm:$0xff]
    %v175 = vsel %vm143, %v173, 0
    %177 = vmatpush.xpose.msra.mxu0 0.0
    %178 = vmatpush.xpose.msra.mxu0 0.0
    %179 = vmatpush.xpose.msra.mxu0 0.0
    %180 = vmatpush.xpose.msra.mxu0 0.0
    %181 = vmatpush.xpose.msra.mxu0 0.0
    %182 = vmatpush.xpose.msra.mxu0 0.0
    %183 = vmatpush.xpose.msra.mxu0 0.0
    %184 = vmatpush.xpose.msra.mxu0 0.0
    %185 = vmatpush.xpose.msra.mxu0 0.0
    %186 = vmatpush.xpose.msra.mxu0 0.0
    %187 = vmatpush.xpose.msra.mxu0 0.0
    %188 = vmatpush.xpose.msra.mxu0 0.0
    %189 = vmatpush.xpose.msra.mxu0 0.0
    %190 = vmatpush.xpose.msra.mxu0 0.0
    %191 = vmatpush.xpose.msra.mxu0 %v148
    %192 = vmatpush.xpose.msra.mxu0 %v145
    %193 = vmatmul.f32.gmra.mxu0 %v175
    %v194 = vpop.f32.mrf.mxu0
    %v195 = vadd.f32 0.0, %v194
    %196 = vdwg.mxu0
    %v197 = vld [vmem:[#allocation4] sm:$0xff]
    %198 = vmatpush.msra.mxu0 0.0
    %199 = vmatpush.msra.mxu0 0.0
    %200 = vmatpush.msra.mxu0 0.0
    %201 = vmatpush.msra.mxu0 0.0
    %202 = vmatpush.msra.mxu0 0.0
    %203 = vmatpush.msra.mxu0 0.0
    %204 = vmatpush.msra.mxu0 0.0
    %205 = vmatpush.msra.mxu0 0.0
    %206 = vmatpush.msra.mxu0 0.0
    %207 = vmatpush.msra.mxu0 0.0
    %208 = vmatpush.msra.mxu0 0.0
    %209 = vmatpush.msra.mxu0 0.0
    %210 = vmatpush.msra.mxu0 0.0
    %211 = vmatpush.msra.mxu0 0.0
    %212 = vmatpush.msra.mxu0 0.0
    %213 = vmatpush.msra.mxu0 %v197
    %214 = vmatmul.f32.gmra.mxu0 %v145
    %v215 = vpop.f32.mrf.mxu0
    %v216 = vadd.f32 0.0, %v215
    %217 = vmatmul.f32.gmra.mxu0 %v148
    %v218 = vpop.f32.mrf.mxu0
    %v219 = vadd.f32 0.0, %v218
    %220 = vdwg.mxu0
    %222 = vset.pattern.permute.xlu0 0
    %223 = vperm.xlu0 %222, %v168
    %v224 = vpop.permute.xlu0 %223
    %227 = vset.pattern.permute.xlu0 0
    %228 = vperm.xlu0 %227, %v171
    %v229 = vpop.permute.xlu0 %228
    %v231 = vperm.slane %v195, 0
    %v232 = vadd.f32 %v224, %v231
    %v233 = vadd.f32 %v229, %v231
    %vm234 = vcmp.gt.f32.partialorder %v232, 0.0
    %vm235 = vcmp.gt.f32.partialorder %v233, 0.0
    %v236 = vmul.f32 %v232, 0.2
    %v237 = vmul.f32 %v233, 0.2
    %v238 = vsel %vm234, %v232, %v236
    %v239 = vsel %vm235, %v233, %v237
    %v240 = vmul.f32 %v238, 0.2940141
    %v241 = vmul.f32 %v239, 0.2940141
    %v242 = vsel %vm140, %v240, -1e+30
    %v243 = vsel %vm141, %v241, -1e+30
    %vm244 = vcmask 130048
    %v245 = vsel %vm244, %v242, -inf
    %246 = vmax.xlane.f32.xlu0 %v245
    %v247 = vpop.xlane.xlu0 %246
    %v248 = vsel %vm244, %v243, -inf
    %249 = vmax.xlane.f32.xlu0 %v248
    %v250 = vpop.xlane.xlu0 %249
    %v251 = vsub.f32 %v242, %v247
    %v252 = vsub.f32 %v243, %v250
    %v253 = vmul.f32 %v251, 1.442695
    %v254 = vpow.pop %v253
    %v255 = vmul.f32 %v252, 1.442695
    %v256 = vpow.pop %v255
    %v257 = vsel %vm140, %v254, 0.0
    %v258 = vsel %vm141, %v256, 0.0
    %v259 = vsel %vm244, %v257, 0.0
    %260 = vadd.xlane.f32.xlu0 %v259
    %v261 = vpop.xlane.xlu0 %260
    %v262 = vsel %vm244, %v258, 0.0
    %263 = vadd.xlane.f32.xlu0 %v262
    %v264 = vpop.xlane.xlu0 %263
    %v265 = vmax.f32 %v261, 1e-16
    %v266 = vmax.f32 %v264, 1e-16
    %v267 = vrcp.pop %v265
    %v268 = vmul.f32 %v265, %v267
    %v269 = vsub.f32 1.0, %v268
    %v270 = vmul.f32 %v267, %v269
    %v271 = vadd.f32 %v267, %v270
    %vm272 = vweird.f32 %v265
    %vm273 = vweird.f32 %v267
    %vm274 = vmor %vm272, %vm273
    %v275 = vsel %vm274, %v267, %v271
    %v276 = vand.u32 2147483647, %v265
    %vm277 = vcmp.eq.f32.partialorder %v276, 8.507059e+37
    %v278 = vand.u32 %v265, 2147483648
    %v279 = vor.u32 1.1754944e-38, %v278
    %v280 = vsel %vm277, %v279, %v275
    %v281 = vmul.f32 %v257, %v280
    %v282 = vrcp.pop %v266
    %v283 = vmul.f32 %v266, %v282
    %v284 = vsub.f32 1.0, %v283
    %v285 = vmul.f32 %v282, %v284
    %v286 = vadd.f32 %v282, %v285
    %vm287 = vweird.f32 %v266
    %vm288 = vweird.f32 %v282
    %vm289 = vmor %vm287, %vm288
    %v290 = vsel %vm289, %v282, %v286
    %v291 = vand.u32 2147483647, %v266
    %vm292 = vcmp.eq.f32.partialorder %v291, 8.507059e+37
    %v293 = vand.u32 %v266, 2147483648
    %v294 = vor.u32 1.1754944e-38, %v293
    %v295 = vsel %vm292, %v294, %v290
    %v296 = vmul.f32 %v258, %v295
    %vm297 = vcmp.lt.f32.partialorder %v281, 0.03
    %vm298 = vcmp.lt.f32.partialorder %v296, 0.03
    %v299 = vsel %vm297, 0.0, %v281
    %v300 = vsel %vm298, 0.0, %v296
    %301 = vset.pattern.permute.xlu0 1
    %302 = vperm.xlu0 %301, %v168
    %v303 = vpop.permute.xlu0 %302
    %305 = vset.pattern.permute.xlu0 1
    %306 = vperm.xlu0 %305, %v171
    %v307 = vpop.permute.xlu0 %306
    %v309 = vperm.slane %v195, 1
    %v310 = vadd.f32 %v303, %v309
    %v311 = vadd.f32 %v307, %v309
    %vm312 = vcmp.gt.f32.partialorder %v310, 0.0
    %vm313 = vcmp.gt.f32.partialorder %v311, 0.0
    %v314 = vmul.f32 %v310, 0.2
    %v315 = vmul.f32 %v311, 0.2
    %v316 = vsel %vm312, %v310, %v314
    %v317 = vsel %vm313, %v311, %v315
    %v318 = vmul.f32 %v316, 0.2940141
    %v319 = vmul.f32 %v317, 0.2940141
    %v320 = vsel %vm140, %v318, -1e+30
    %v321 = vsel %vm141, %v319, -1e+30
    %v322 = vsel %vm244, %v320, -inf
    %323 = vmax.xlane.f32.xlu0 %v322
    %v324 = vpop.xlane.xlu0 %323
    %v325 = vsel %vm244, %v321, -inf
    %326 = vmax.xlane.f32.xlu0 %v325
    %v327 = vpop.xlane.xlu0 %326
    %v328 = vsub.f32 %v320, %v324
    %v329 = vsub.f32 %v321, %v327
    %v330 = vmul.f32 %v328, 1.442695
    %v331 = vpow.pop %v330
    %v332 = vmul.f32 %v329, 1.442695
    %v333 = vpow.pop %v332
    %v334 = vsel %vm140, %v331, 0.0
    %v335 = vsel %vm141, %v333, 0.0
    %v336 = vsel %vm244, %v334, 0.0
    %337 = vadd.xlane.f32.xlu0 %v336
    %v338 = vpop.xlane.xlu0 %337
    %v339 = vsel %vm244, %v335, 0.0
    %340 = vadd.xlane.f32.xlu0 %v339
    %v341 = vpop.xlane.xlu0 %340
    %v342 = vmax.f32 %v338, 1e-16
    %v343 = vmax.f32 %v341, 1e-16
    %v344 = vrcp.pop %v342
    %v345 = vmul.f32 %v342, %v344
    %v346 = vsub.f32 1.0, %v345
    %v347 = vmul.f32 %v344, %v346
    %v348 = vadd.f32 %v344, %v347
    %vm349 = vweird.f32 %v342
    %vm350 = vweird.f32 %v344
    %vm351 = vmor %vm349, %vm350
    %v352 = vsel %vm351, %v344, %v348
    %v353 = vand.u32 2147483647, %v342
    %vm354 = vcmp.eq.f32.partialorder %v353, 8.507059e+37
    %v355 = vand.u32 %v342, 2147483648
    %v356 = vor.u32 1.1754944e-38, %v355
    %v357 = vsel %vm354, %v356, %v352
    %v358 = vmul.f32 %v334, %v357
    %v359 = vrcp.pop %v343
    %v360 = vmul.f32 %v343, %v359
    %v361 = vsub.f32 1.0, %v360
    %v362 = vmul.f32 %v359, %v361
    %v363 = vadd.f32 %v359, %v362
    %vm364 = vweird.f32 %v343
    %vm365 = vweird.f32 %v359
    %vm366 = vmor %vm364, %vm365
    %v367 = vsel %vm366, %v359, %v363
    %v368 = vand.u32 2147483647, %v343
    %vm369 = vcmp.eq.f32.partialorder %v368, 8.507059e+37
    %v370 = vand.u32 %v343, 2147483648
    %v371 = vor.u32 1.1754944e-38, %v370
    %v372 = vsel %vm369, %v371, %v367
    %v373 = vmul.f32 %v335, %v372
    %vm374 = vcmp.lt.f32.partialorder %v358, 0.03
    %vm375 = vcmp.lt.f32.partialorder %v373, 0.03
    %v376 = vsel %vm374, 0.0, %v358
    %v377 = vsel %vm375, 0.0, %v373
    %380 = vrot.lane.b32.xlu0 %v216, 120
    %v381 = vpop.permute.xlu0 %380
    %382 = vrot.lane.b32.xlu0 %v219, 120
    %v383 = vpop.permute.xlu0 %382
    %v387 = vsel %vm244, %v376, 0
    %v390 = vsel %vm244, %v377, 0
    %392 = vmatpush.msra.mxu0 0.0
    %393 = vmatpush.msra.mxu0 0.0
    %394 = vmatpush.msra.mxu0 0.0
    %395 = vmatpush.msra.mxu0 0.0
    %396 = vmatpush.msra.mxu0 0.0
    %397 = vmatpush.msra.mxu0 0.0
    %398 = vmatpush.msra.mxu0 0.0
    %399 = vmatpush.msra.mxu0 0.0
    %400 = vmatpush.msra.mxu0 0.0
    %401 = vmatpush.msra.mxu0 0.0
    %402 = vmatpush.msra.mxu0 0.0
    %403 = vmatpush.msra.mxu0 0.0
    %404 = vmatpush.msra.mxu0 0.0
    %405 = vmatpush.msra.mxu0 0.0
    %406 = vmatpush.msra.mxu0 %v383
    %407 = vmatpush.msra.mxu0 %v381
    %408 = vmatmul.f32.gmra.mxu0 %v387
    %v409 = vpop.f32.mrf.mxu0
    %v410 = vadd.f32 0.0, %v409
    %411 = vmatmul.f32.gmra.mxu0 %v390
    %v412 = vpop.f32.mrf.mxu0
    %v413 = vadd.f32 0.0, %v412
    %414 = vdwg.mxu0
    %v416 = vsel %vm244, %v299, 0
    %v419 = vsel %vm244, %v300, 0
    %421 = vmatpush.msra.mxu0 0.0
    %422 = vmatpush.msra.mxu0 0.0
    %423 = vmatpush.msra.mxu0 0.0
    %424 = vmatpush.msra.mxu0 0.0
    %425 = vmatpush.msra.mxu0 0.0
    %426 = vmatpush.msra.mxu0 0.0
    %427 = vmatpush.msra.mxu0 0.0
    %428 = vmatpush.msra.mxu0 0.0
    %429 = vmatpush.msra.mxu0 0.0
    %430 = vmatpush.msra.mxu0 0.0
    %431 = vmatpush.msra.mxu0 0.0
    %432 = vmatpush.msra.mxu0 0.0
    %433 = vmatpush.msra.mxu0 0.0
    %434 = vmatpush.msra.mxu0 0.0
    %435 = vmatpush.msra.mxu0 %v219
    %436 = vmatpush.msra.mxu0 %v216
    %437 = vmatmul.f32.gmra.mxu0 %v416
    %v438 = vpop.f32.mrf.mxu0
    %v439 = vadd.f32 %v410, %v438
    %440 = vmatmul.f32.gmra.mxu0 %v419
    %v441 = vpop.f32.mrf.mxu0
    %v442 = vadd.f32 %v413, %v441
    %443 = vdwg.mxu0
    %444 = vset.pattern.permute.xlu0 2
    %445 = vperm.xlu0 %444, %v168
    %v446 = vpop.permute.xlu0 %445
    %448 = vset.pattern.permute.xlu0 2
    %449 = vperm.xlu0 %448, %v171
    %v450 = vpop.permute.xlu0 %449
    %v452 = vperm.slane %v195, 2
    %v453 = vadd.f32 %v446, %v452
    %v454 = vadd.f32 %v450, %v452
    %vm455 = vcmp.gt.f32.partialorder %v453, 0.0
    %vm456 = vcmp.gt.f32.partialorder %v454, 0.0
    %v457 = vmul.f32 %v453, 0.2
    %v458 = vmul.f32 %v454, 0.2
    %v459 = vsel %vm455, %v453, %v457
    %v460 = vsel %vm456, %v454, %v458
    %v461 = vmul.f32 %v459, 0.2940141
    %v462 = vmul.f32 %v460, 0.2940141
    %v463 = vsel %vm140, %v461, -1e+30
    %v464 = vsel %vm141, %v462, -1e+30
    %v465 = vsel %vm244, %v463, -inf
    %466 = vmax.xlane.f32.xlu0 %v465
    %v467 = vpop.xlane.xlu0 %466
    %v468 = vsel %vm244, %v464, -inf
    %469 = vmax.xlane.f32.xlu0 %v468
    %v470 = vpop.xlane.xlu0 %469
    %v471 = vsub.f32 %v463, %v467
    %v472 = vsub.f32 %v464, %v470
    %v473 = vmul.f32 %v471, 1.442695
    %v474 = vpow.pop %v473
    %v475 = vmul.f32 %v472, 1.442695
    %v476 = vpow.pop %v475
    %v477 = vsel %vm140, %v474, 0.0
    %v478 = vsel %vm141, %v476, 0.0
    %v479 = vsel %vm244, %v477, 0.0
    %480 = vadd.xlane.f32.xlu0 %v479
    %v481 = vpop.xlane.xlu0 %480
    %v482 = vsel %vm244, %v478, 0.0
    %483 = vadd.xlane.f32.xlu0 %v482
    %v484 = vpop.xlane.xlu0 %483
    %v485 = vmax.f32 %v481, 1e-16
    %v486 = vmax.f32 %v484, 1e-16
    %v487 = vrcp.pop %v485
    %v488 = vmul.f32 %v485, %v487
    %v489 = vsub.f32 1.0, %v488
    %v490 = vmul.f32 %v487, %v489
    %v491 = vadd.f32 %v487, %v490
    %vm492 = vweird.f32 %v485
    %vm493 = vweird.f32 %v487
    %vm494 = vmor %vm492, %vm493
    %v495 = vsel %vm494, %v487, %v491
    %v496 = vand.u32 2147483647, %v485
    %vm497 = vcmp.eq.f32.partialorder %v496, 8.507059e+37
    %v498 = vand.u32 %v485, 2147483648
    %v499 = vor.u32 1.1754944e-38, %v498
    %v500 = vsel %vm497, %v499, %v495
    %v501 = vmul.f32 %v477, %v500
    %v502 = vrcp.pop %v486
    %v503 = vmul.f32 %v486, %v502
    %v504 = vsub.f32 1.0, %v503
    %v505 = vmul.f32 %v502, %v504
    %v506 = vadd.f32 %v502, %v505
    %vm507 = vweird.f32 %v486
    %vm508 = vweird.f32 %v502
    %vm509 = vmor %vm507, %vm508
    %v510 = vsel %vm509, %v502, %v506
    %v511 = vand.u32 2147483647, %v486
    %vm512 = vcmp.eq.f32.partialorder %v511, 8.507059e+37
    %v513 = vand.u32 %v486, 2147483648
    %v514 = vor.u32 1.1754944e-38, %v513
    %v515 = vsel %vm512, %v514, %v510
    %v516 = vmul.f32 %v478, %v515
    %vm517 = vcmp.lt.f32.partialorder %v501, 0.03
    %vm518 = vcmp.lt.f32.partialorder %v516, 0.03
    %v519 = vsel %vm517, 0.0, %v501
    %v520 = vsel %vm518, 0.0, %v516
    %521 = vrot.lane.b32.xlu0 %v216, 112
    %v522 = vpop.permute.xlu0 %521
    %523 = vrot.lane.b32.xlu0 %v219, 112
    %v524 = vpop.permute.xlu0 %523
    %v528 = vsel %vm244, %v519, 0
    %v531 = vsel %vm244, %v520, 0
    %533 = vmatpush.msra.mxu0 0.0
    %534 = vmatpush.msra.mxu0 0.0
    %535 = vmatpush.msra.mxu0 0.0
    %536 = vmatpush.msra.mxu0 0.0
    %537 = vmatpush.msra.mxu0 0.0
    %538 = vmatpush.msra.mxu0 0.0
    %539 = vmatpush.msra.mxu0 0.0
    %540 = vmatpush.msra.mxu0 0.0
    %541 = vmatpush.msra.mxu0 0.0
    %542 = vmatpush.msra.mxu0 0.0
    %543 = vmatpush.msra.mxu0 0.0
    %544 = vmatpush.msra.mxu0 0.0
    %545 = vmatpush.msra.mxu0 0.0
    %546 = vmatpush.msra.mxu0 0.0
    %547 = vmatpush.msra.mxu0 %v524
    %548 = vmatpush.msra.mxu0 %v522
    %549 = vmatmul.f32.gmra.mxu0 %v528
    %v550 = vpop.f32.mrf.mxu0
    %v551 = vadd.f32 0.0, %v550
    %552 = vmatmul.f32.gmra.mxu0 %v531
    %v553 = vpop.f32.mrf.mxu0
    %v554 = vadd.f32 0.0, %v553
    %555 = vdwg.mxu0
    %v556 = vadd.f32 %v439, %v551
    %v557 = vadd.f32 %v442, %v554
    %558 = vset.pattern.permute.xlu0 3
    %559 = vperm.xlu0 %558, %v168
    %v560 = vpop.permute.xlu0 %559
    %562 = vset.pattern.permute.xlu0 3
    %563 = vperm.xlu0 %562, %v171
    %v564 = vpop.permute.xlu0 %563
    %v566 = vperm.slane %v195, 3
    %v567 = vadd.f32 %v560, %v566
    %v568 = vadd.f32 %v564, %v566
    %vm569 = vcmp.gt.f32.partialorder %v567, 0.0
    %vm570 = vcmp.gt.f32.partialorder %v568, 0.0
    %v571 = vmul.f32 %v567, 0.2
    %v572 = vmul.f32 %v568, 0.2
    %v573 = vsel %vm569, %v567, %v571
    %v574 = vsel %vm570, %v568, %v572
    %v575 = vmul.f32 %v573, 0.2940141
    %v576 = vmul.f32 %v574, 0.2940141
    %v577 = vsel %vm140, %v575, -1e+30
    %v578 = vsel %vm141, %v576, -1e+30
    %v579 = vsel %vm244, %v577, -inf
    %580 = vmax.xlane.f32.xlu0 %v579
    %v581 = vpop.xlane.xlu0 %580
    %v582 = vsel %vm244, %v578, -inf
    %583 = vmax.xlane.f32.xlu0 %v582
    %v584 = vpop.xlane.xlu0 %583
    %v585 = vsub.f32 %v577, %v581
    %v586 = vsub.f32 %v578, %v584
    %v587 = vmul.f32 %v585, 1.442695
    %v588 = vpow.pop %v587
    %v589 = vmul.f32 %v586, 1.442695
    %v590 = vpow.pop %v589
    %v591 = vsel %vm140, %v588, 0.0
    %v592 = vsel %vm141, %v590, 0.0
    %v593 = vsel %vm244, %v591, 0.0
    %594 = vadd.xlane.f32.xlu0 %v593
    %v595 = vpop.xlane.xlu0 %594
    %v596 = vsel %vm244, %v592, 0.0
    %597 = vadd.xlane.f32.xlu0 %v596
    %v598 = vpop.xlane.xlu0 %597
    %v599 = vmax.f32 %v595, 1e-16
    %v600 = vmax.f32 %v598, 1e-16
    %v601 = vrcp.pop %v599
    %v602 = vmul.f32 %v599, %v601
    %v603 = vsub.f32 1.0, %v602
    %v604 = vmul.f32 %v601, %v603
    %v605 = vadd.f32 %v601, %v604
    %vm606 = vweird.f32 %v599
    %vm607 = vweird.f32 %v601
    %vm608 = vmor %vm606, %vm607
    %v609 = vsel %vm608, %v601, %v605
    %v610 = vand.u32 2147483647, %v599
    %vm611 = vcmp.eq.f32.partialorder %v610, 8.507059e+37
    %v612 = vand.u32 %v599, 2147483648
    %v613 = vor.u32 1.1754944e-38, %v612
    %v614 = vsel %vm611, %v613, %v609
    %v615 = vmul.f32 %v591, %v614
    %v616 = vrcp.pop %v600
    %v617 = vmul.f32 %v600, %v616
    %v618 = vsub.f32 1.0, %v617
    %v619 = vmul.f32 %v616, %v618
    %v620 = vadd.f32 %v616, %v619
    %vm621 = vweird.f32 %v600
    %vm622 = vweird.f32 %v616
    %vm623 = vmor %vm621, %vm622
    %v624 = vsel %vm623, %v616, %v620
    %v625 = vand.u32 2147483647, %v600
    %vm626 = vcmp.eq.f32.partialorder %v625, 8.507059e+37
    %v627 = vand.u32 %v600, 2147483648
    %v628 = vor.u32 1.1754944e-38, %v627
    %v629 = vsel %vm626, %v628, %v624
    %v630 = vmul.f32 %v592, %v629
    %vm631 = vcmp.lt.f32.partialorder %v615, 0.03
    %vm632 = vcmp.lt.f32.partialorder %v630, 0.03
    %v633 = vsel %vm631, 0.0, %v615
    %v634 = vsel %vm632, 0.0, %v630
    %635 = vrot.lane.b32.xlu0 %v216, 104
    %v636 = vpop.permute.xlu0 %635
    %637 = vrot.lane.b32.xlu0 %v219, 104
    %v638 = vpop.permute.xlu0 %637
    %v642 = vsel %vm244, %v633, 0
    %v645 = vsel %vm244, %v634, 0
    %647 = vmatpush.msra.mxu0 0.0
    %648 = vmatpush.msra.mxu0 0.0
    %649 = vmatpush.msra.mxu0 0.0
    %650 = vmatpush.msra.mxu0 0.0
    %651 = vmatpush.msra.mxu0 0.0
    %652 = vmatpush.msra.mxu0 0.0
    %653 = vmatpush.msra.mxu0 0.0
    %654 = vmatpush.msra.mxu0 0.0
    %655 = vmatpush.msra.mxu0 0.0
    %656 = vmatpush.msra.mxu0 0.0
    %657 = vmatpush.msra.mxu0 0.0
    %658 = vmatpush.msra.mxu0 0.0
    %659 = vmatpush.msra.mxu0 0.0
    %660 = vmatpush.msra.mxu0 0.0
    %661 = vmatpush.msra.mxu0 %v638
    %662 = vmatpush.msra.mxu0 %v636
    %663 = vmatmul.f32.gmra.mxu0 %v642
    %v664 = vpop.f32.mrf.mxu0
    %v665 = vadd.f32 0.0, %v664
    %666 = vmatmul.f32.gmra.mxu0 %v645
    %v667 = vpop.f32.mrf.mxu0
    %v668 = vadd.f32 0.0, %v667
    %669 = vdwg.mxu0
    %v670 = vadd.f32 %v556, %v665
    %v671 = vadd.f32 %v557, %v668
    %672 = vset.pattern.permute.xlu0 4
    %673 = vperm.xlu0 %672, %v168
    %v674 = vpop.permute.xlu0 %673
    %676 = vset.pattern.permute.xlu0 4
    %677 = vperm.xlu0 %676, %v171
    %v678 = vpop.permute.xlu0 %677
    %v680 = vperm.slane %v195, 4
    %v681 = vadd.f32 %v674, %v680
    %v682 = vadd.f32 %v678, %v680
    %vm683 = vcmp.gt.f32.partialorder %v681, 0.0
    %vm684 = vcmp.gt.f32.partialorder %v682, 0.0
    %v685 = vmul.f32 %v681, 0.2
    %v686 = vmul.f32 %v682, 0.2
    %v687 = vsel %vm683, %v681, %v685
    %v688 = vsel %vm684, %v682, %v686
    %v689 = vmul.f32 %v687, 0.2940141
    %v690 = vmul.f32 %v688, 0.2940141
    %v691 = vsel %vm140, %v689, -1e+30
    %v692 = vsel %vm141, %v690, -1e+30
    %v693 = vsel %vm244, %v691, -inf
    %694 = vmax.xlane.f32.xlu0 %v693
    %v695 = vpop.xlane.xlu0 %694
    %v696 = vsel %vm244, %v692, -inf
    %697 = vmax.xlane.f32.xlu0 %v696
    %v698 = vpop.xlane.xlu0 %697
    %v699 = vsub.f32 %v691, %v695
    %v700 = vsub.f32 %v692, %v698
    %v701 = vmul.f32 %v699, 1.442695
    %v702 = vpow.pop %v701
    %v703 = vmul.f32 %v700, 1.442695
    %v704 = vpow.pop %v703
    %v705 = vsel %vm140, %v702, 0.0
    %v706 = vsel %vm141, %v704, 0.0
    %v707 = vsel %vm244, %v705, 0.0
    %708 = vadd.xlane.f32.xlu0 %v707
    %v709 = vpop.xlane.xlu0 %708
    %v710 = vsel %vm244, %v706, 0.0
    %711 = vadd.xlane.f32.xlu0 %v710
    %v712 = vpop.xlane.xlu0 %711
    %v713 = vmax.f32 %v709, 1e-16
    %v714 = vmax.f32 %v712, 1e-16
    %v715 = vrcp.pop %v713
    %v716 = vmul.f32 %v713, %v715
    %v717 = vsub.f32 1.0, %v716
    %v718 = vmul.f32 %v715, %v717
    %v719 = vadd.f32 %v715, %v718
    %vm720 = vweird.f32 %v713
    %vm721 = vweird.f32 %v715
    %vm722 = vmor %vm720, %vm721
    %v723 = vsel %vm722, %v715, %v719
    %v724 = vand.u32 2147483647, %v713
    %vm725 = vcmp.eq.f32.partialorder %v724, 8.507059e+37
    %v726 = vand.u32 %v713, 2147483648
    %v727 = vor.u32 1.1754944e-38, %v726
    %v728 = vsel %vm725, %v727, %v723
    %v729 = vmul.f32 %v705, %v728
    %v730 = vrcp.pop %v714
    %v731 = vmul.f32 %v714, %v730
    %v732 = vsub.f32 1.0, %v731
    %v733 = vmul.f32 %v730, %v732
    %v734 = vadd.f32 %v730, %v733
    %vm735 = vweird.f32 %v714
    %vm736 = vweird.f32 %v730
    %vm737 = vmor %vm735, %vm736
    %v738 = vsel %vm737, %v730, %v734
    %v739 = vand.u32 2147483647, %v714
    %vm740 = vcmp.eq.f32.partialorder %v739, 8.507059e+37
    %v741 = vand.u32 %v714, 2147483648
    %v742 = vor.u32 1.1754944e-38, %v741
    %v743 = vsel %vm740, %v742, %v738
    %v744 = vmul.f32 %v706, %v743
    %vm745 = vcmp.lt.f32.partialorder %v729, 0.03
    %vm746 = vcmp.lt.f32.partialorder %v744, 0.03
    %v747 = vsel %vm745, 0.0, %v729
    %v748 = vsel %vm746, 0.0, %v744
    %749 = vrot.lane.b32.xlu0 %v216, 96
    %v750 = vpop.permute.xlu0 %749
    %751 = vrot.lane.b32.xlu0 %v219, 96
    %v752 = vpop.permute.xlu0 %751
    %v756 = vsel %vm244, %v747, 0
    %v759 = vsel %vm244, %v748, 0
    %761 = vmatpush.msra.mxu0 0.0
    %762 = vmatpush.msra.mxu0 0.0
    %763 = vmatpush.msra.mxu0 0.0
    %764 = vmatpush.msra.mxu0 0.0
    %765 = vmatpush.msra.mxu0 0.0
    %766 = vmatpush.msra.mxu0 0.0
    %767 = vmatpush.msra.mxu0 0.0
    %768 = vmatpush.msra.mxu0 0.0
    %769 = vmatpush.msra.mxu0 0.0
    %770 = vmatpush.msra.mxu0 0.0
    %771 = vmatpush.msra.mxu0 0.0
    %772 = vmatpush.msra.mxu0 0.0
    %773 = vmatpush.msra.mxu0 0.0
    %774 = vmatpush.msra.mxu0 0.0
    %775 = vmatpush.msra.mxu0 %v752
    %776 = vmatpush.msra.mxu0 %v750
    %777 = vmatmul.f32.gmra.mxu0 %v756
    %v778 = vpop.f32.mrf.mxu0
    %v779 = vadd.f32 0.0, %v778
    %780 = vmatmul.f32.gmra.mxu0 %v759
    %v781 = vpop.f32.mrf.mxu0
    %v782 = vadd.f32 0.0, %v781
    %783 = vdwg.mxu0
    %v784 = vadd.f32 %v670, %v779
    %v785 = vadd.f32 %v671, %v782
    %786 = vset.pattern.permute.xlu0 5
    %787 = vperm.xlu0 %786, %v168
    %v788 = vpop.permute.xlu0 %787
    %790 = vset.pattern.permute.xlu0 5
    %791 = vperm.xlu0 %790, %v171
    %v792 = vpop.permute.xlu0 %791
    %v794 = vperm.slane %v195, 5
    %v795 = vadd.f32 %v788, %v794
    %v796 = vadd.f32 %v792, %v794
    %vm797 = vcmp.gt.f32.partialorder %v795, 0.0
    %vm798 = vcmp.gt.f32.partialorder %v796, 0.0
    %v799 = vmul.f32 %v795, 0.2
    %v800 = vmul.f32 %v796, 0.2
    %v801 = vsel %vm797, %v795, %v799
    %v802 = vsel %vm798, %v796, %v800
    %v803 = vmul.f32 %v801, 0.2940141
    %v804 = vmul.f32 %v802, 0.2940141
    %v805 = vsel %vm140, %v803, -1e+30
    %v806 = vsel %vm141, %v804, -1e+30
    %v807 = vsel %vm244, %v805, -inf
    %808 = vmax.xlane.f32.xlu0 %v807
    %v809 = vpop.xlane.xlu0 %808
    %v810 = vsel %vm244, %v806, -inf
    %811 = vmax.xlane.f32.xlu0 %v810
    %v812 = vpop.xlane.xlu0 %811
    %v813 = vsub.f32 %v805, %v809
    %v814 = vsub.f32 %v806, %v812
    %v815 = vmul.f32 %v813, 1.442695
    %v816 = vpow.pop %v815
    %v817 = vmul.f32 %v814, 1.442695
    %v818 = vpow.pop %v817
    %v819 = vsel %vm140, %v816, 0.0
    %v820 = vsel %vm141, %v818, 0.0
    %v821 = vsel %vm244, %v819, 0.0
    %822 = vadd.xlane.f32.xlu0 %v821
    %v823 = vpop.xlane.xlu0 %822
    %v824 = vsel %vm244, %v820, 0.0
    %825 = vadd.xlane.f32.xlu0 %v824
    %v826 = vpop.xlane.xlu0 %825
    %v827 = vmax.f32 %v823, 1e-16
    %v828 = vmax.f32 %v826, 1e-16
    %v829 = vrcp.pop %v827
    %v830 = vmul.f32 %v827, %v829
    %v831 = vsub.f32 1.0, %v830
    %v832 = vmul.f32 %v829, %v831
    %v833 = vadd.f32 %v829, %v832
    %vm834 = vweird.f32 %v827
    %vm835 = vweird.f32 %v829
    %vm836 = vmor %vm834, %vm835
    %v837 = vsel %vm836, %v829, %v833
    %v838 = vand.u32 2147483647, %v827
    %vm839 = vcmp.eq.f32.partialorder %v838, 8.507059e+37
    %v840 = vand.u32 %v827, 2147483648
    %v841 = vor.u32 1.1754944e-38, %v840
    %v842 = vsel %vm839, %v841, %v837
    %v843 = vmul.f32 %v819, %v842
    %v844 = vrcp.pop %v828
    %v845 = vmul.f32 %v828, %v844
    %v846 = vsub.f32 1.0, %v845
    %v847 = vmul.f32 %v844, %v846
    %v848 = vadd.f32 %v844, %v847
    %vm849 = vweird.f32 %v828
    %vm850 = vweird.f32 %v844
    %vm851 = vmor %vm849, %vm850
    %v852 = vsel %vm851, %v844, %v848
    %v853 = vand.u32 2147483647, %v828
    %vm854 = vcmp.eq.f32.partialorder %v853, 8.507059e+37
    %v855 = vand.u32 %v828, 2147483648
    %v856 = vor.u32 1.1754944e-38, %v855
    %v857 = vsel %vm854, %v856, %v852
    %v858 = vmul.f32 %v820, %v857
    %vm859 = vcmp.lt.f32.partialorder %v843, 0.03
    %vm860 = vcmp.lt.f32.partialorder %v858, 0.03
    %v861 = vsel %vm859, 0.0, %v843
    %v862 = vsel %vm860, 0.0, %v858
    %863 = vrot.lane.b32.xlu0 %v216, 88
    %v864 = vpop.permute.xlu0 %863
    %865 = vrot.lane.b32.xlu0 %v219, 88
    %v866 = vpop.permute.xlu0 %865
    %v870 = vsel %vm244, %v861, 0
    %v873 = vsel %vm244, %v862, 0
    %875 = vmatpush.msra.mxu0 0.0
    %876 = vmatpush.msra.mxu0 0.0
    %877 = vmatpush.msra.mxu0 0.0
    %878 = vmatpush.msra.mxu0 0.0
    %879 = vmatpush.msra.mxu0 0.0
    %880 = vmatpush.msra.mxu0 0.0
    %881 = vmatpush.msra.mxu0 0.0
    %882 = vmatpush.msra.mxu0 0.0
    %883 = vmatpush.msra.mxu0 0.0
    %884 = vmatpush.msra.mxu0 0.0
    %885 = vmatpush.msra.mxu0 0.0
    %886 = vmatpush.msra.mxu0 0.0
    %887 = vmatpush.msra.mxu0 0.0
    %888 = vmatpush.msra.mxu0 0.0
    %889 = vmatpush.msra.mxu0 %v866
    %890 = vmatpush.msra.mxu0 %v864
    %891 = vmatmul.f32.gmra.mxu0 %v870
    %v892 = vpop.f32.mrf.mxu0
    %v893 = vadd.f32 0.0, %v892
    %894 = vmatmul.f32.gmra.mxu0 %v873
    %v895 = vpop.f32.mrf.mxu0
    %v896 = vadd.f32 0.0, %v895
    %897 = vdwg.mxu0
    %v898 = vadd.f32 %v784, %v893
    %v899 = vadd.f32 %v785, %v896
    %900 = vset.pattern.permute.xlu0 6
    %901 = vperm.xlu0 %900, %v168
    %v902 = vpop.permute.xlu0 %901
    %904 = vset.pattern.permute.xlu0 6
    %905 = vperm.xlu0 %904, %v171
    %v906 = vpop.permute.xlu0 %905
    %v908 = vperm.slane %v195, 6
    %v909 = vadd.f32 %v902, %v908
    %v910 = vadd.f32 %v906, %v908
    %vm911 = vcmp.gt.f32.partialorder %v909, 0.0
    %vm912 = vcmp.gt.f32.partialorder %v910, 0.0
    %v913 = vmul.f32 %v909, 0.2
    %v914 = vmul.f32 %v910, 0.2
    %v915 = vsel %vm911, %v909, %v913
    %v916 = vsel %vm912, %v910, %v914
    %v917 = vmul.f32 %v915, 0.2940141
    %v918 = vmul.f32 %v916, 0.2940141
    %v919 = vsel %vm140, %v917, -1e+30
    %v920 = vsel %vm141, %v918, -1e+30
    %v921 = vsel %vm244, %v919, -inf
    %922 = vmax.xlane.f32.xlu0 %v921
    %v923 = vpop.xlane.xlu0 %922
    %v924 = vsel %vm244, %v920, -inf
    %925 = vmax.xlane.f32.xlu0 %v924
    %v926 = vpop.xlane.xlu0 %925
    %v927 = vsub.f32 %v919, %v923
    %v928 = vsub.f32 %v920, %v926
    %v929 = vmul.f32 %v927, 1.442695
    %v930 = vpow.pop %v929
    %v931 = vmul.f32 %v928, 1.442695
    %v932 = vpow.pop %v931
    %v933 = vsel %vm140, %v930, 0.0
    %v934 = vsel %vm141, %v932, 0.0
    %v935 = vsel %vm244, %v933, 0.0
    %936 = vadd.xlane.f32.xlu0 %v935
    %v937 = vpop.xlane.xlu0 %936
    %v938 = vsel %vm244, %v934, 0.0
    %939 = vadd.xlane.f32.xlu0 %v938
    %v940 = vpop.xlane.xlu0 %939
    %v941 = vmax.f32 %v937, 1e-16
    %v942 = vmax.f32 %v940, 1e-16
    %v943 = vrcp.pop %v941
    %v944 = vmul.f32 %v941, %v943
    %v945 = vsub.f32 1.0, %v944
    %v946 = vmul.f32 %v943, %v945
    %v947 = vadd.f32 %v943, %v946
    %vm948 = vweird.f32 %v941
    %vm949 = vweird.f32 %v943
    %vm950 = vmor %vm948, %vm949
    %v951 = vsel %vm950, %v943, %v947
    %v952 = vand.u32 2147483647, %v941
    %vm953 = vcmp.eq.f32.partialorder %v952, 8.507059e+37
    %v954 = vand.u32 %v941, 2147483648
    %v955 = vor.u32 1.1754944e-38, %v954
    %v956 = vsel %vm953, %v955, %v951
    %v957 = vmul.f32 %v933, %v956
    %v958 = vrcp.pop %v942
    %v959 = vmul.f32 %v942, %v958
    %v960 = vsub.f32 1.0, %v959
    %v961 = vmul.f32 %v958, %v960
    %v962 = vadd.f32 %v958, %v961
    %vm963 = vweird.f32 %v942
    %vm964 = vweird.f32 %v958
    %vm965 = vmor %vm963, %vm964
    %v966 = vsel %vm965, %v958, %v962
    %v967 = vand.u32 2147483647, %v942
    %vm968 = vcmp.eq.f32.partialorder %v967, 8.507059e+37
    %v969 = vand.u32 %v942, 2147483648
    %v970 = vor.u32 1.1754944e-38, %v969
    %v971 = vsel %vm968, %v970, %v966
    %v972 = vmul.f32 %v934, %v971
    %vm973 = vcmp.lt.f32.partialorder %v957, 0.03
    %vm974 = vcmp.lt.f32.partialorder %v972, 0.03
    %v975 = vsel %vm973, 0.0, %v957
    %v976 = vsel %vm974, 0.0, %v972
    %977 = vrot.lane.b32.xlu0 %v216, 80
    %v978 = vpop.permute.xlu0 %977
    %979 = vrot.lane.b32.xlu0 %v219, 80
    %v980 = vpop.permute.xlu0 %979
    %v984 = vsel %vm244, %v975, 0
    %v987 = vsel %vm244, %v976, 0
    %989 = vmatpush.msra.mxu0 0.0
    %990 = vmatpush.msra.mxu0 0.0
    %991 = vmatpush.msra.mxu0 0.0
    %992 = vmatpush.msra.mxu0 0.0
    %993 = vmatpush.msra.mxu0 0.0
    %994 = vmatpush.msra.mxu0 0.0
    %995 = vmatpush.msra.mxu0 0.0
    %996 = vmatpush.msra.mxu0 0.0
    %997 = vmatpush.msra.mxu0 0.0
    %998 = vmatpush.msra.mxu0 0.0
    %999 = vmatpush.msra.mxu0 0.0
    %1000 = vmatpush.msra.mxu0 0.0
    %1001 = vmatpush.msra.mxu0 0.0
    %1002 = vmatpush.msra.mxu0 0.0
    %1003 = vmatpush.msra.mxu0 %v980
    %1004 = vmatpush.msra.mxu0 %v978
    %1005 = vmatmul.f32.gmra.mxu0 %v984
    %v1006 = vpop.f32.mrf.mxu0
    %v1007 = vadd.f32 0.0, %v1006
    %1008 = vmatmul.f32.gmra.mxu0 %v987
    %v1009 = vpop.f32.mrf.mxu0
    %v1010 = vadd.f32 0.0, %v1009
    %1011 = vdwg.mxu0
    %v1012 = vadd.f32 %v898, %v1007
    %v1013 = vadd.f32 %v899, %v1010
    %1014 = vset.pattern.permute.xlu0 7
    %1015 = vperm.xlu0 %1014, %v168
    %v1016 = vpop.permute.xlu0 %1015
    %1018 = vset.pattern.permute.xlu0 7
    %1019 = vperm.xlu0 %1018, %v171
    %v1020 = vpop.permute.xlu0 %1019
    %v1022 = vperm.slane %v195, 7
    %v1023 = vadd.f32 %v1016, %v1022
    %v1024 = vadd.f32 %v1020, %v1022
    %vm1025 = vcmp.gt.f32.partialorder %v1023, 0.0
    %vm1026 = vcmp.gt.f32.partialorder %v1024, 0.0
    %v1027 = vmul.f32 %v1023, 0.2
    %v1028 = vmul.f32 %v1024, 0.2
    %v1029 = vsel %vm1025, %v1023, %v1027
    %v1030 = vsel %vm1026, %v1024, %v1028
    %v1031 = vmul.f32 %v1029, 0.2940141
    %v1032 = vmul.f32 %v1030, 0.2940141
    %v1033 = vsel %vm140, %v1031, -1e+30
    %v1034 = vsel %vm141, %v1032, -1e+30
    %v1035 = vsel %vm244, %v1033, -inf
    %1036 = vmax.xlane.f32.xlu0 %v1035
    %v1037 = vpop.xlane.xlu0 %1036
    %v1038 = vsel %vm244, %v1034, -inf
    %1039 = vmax.xlane.f32.xlu0 %v1038
    %v1040 = vpop.xlane.xlu0 %1039
    %v1041 = vsub.f32 %v1033, %v1037
    %v1042 = vsub.f32 %v1034, %v1040
    %v1043 = vmul.f32 %v1041, 1.442695
    %v1044 = vpow.pop %v1043
    %v1045 = vmul.f32 %v1042, 1.442695
    %v1046 = vpow.pop %v1045
    %v1047 = vsel %vm140, %v1044, 0.0
    %v1048 = vsel %vm141, %v1046, 0.0
    %v1049 = vsel %vm244, %v1047, 0.0
    %1050 = vadd.xlane.f32.xlu0 %v1049
    %v1051 = vpop.xlane.xlu0 %1050
    %v1052 = vsel %vm244, %v1048, 0.0
    %1053 = vadd.xlane.f32.xlu0 %v1052
    %v1054 = vpop.xlane.xlu0 %1053
    %v1055 = vmax.f32 %v1051, 1e-16
    %v1056 = vmax.f32 %v1054, 1e-16
    %v1057 = vrcp.pop %v1055
    %v1058 = vmul.f32 %v1055, %v1057
    %v1059 = vsub.f32 1.0, %v1058
    %v1060 = vmul.f32 %v1057, %v1059
    %v1061 = vadd.f32 %v1057, %v1060
    %vm1062 = vweird.f32 %v1055
    %vm1063 = vweird.f32 %v1057
    %vm1064 = vmor %vm1062, %vm1063
    %v1065 = vsel %vm1064, %v1057, %v1061
    %v1066 = vand.u32 2147483647, %v1055
    %vm1067 = vcmp.eq.f32.partialorder %v1066, 8.507059e+37
    %v1068 = vand.u32 %v1055, 2147483648
    %v1069 = vor.u32 1.1754944e-38, %v1068
    %v1070 = vsel %vm1067, %v1069, %v1065
    %v1071 = vmul.f32 %v1047, %v1070
    %v1072 = vrcp.pop %v1056
    %v1073 = vmul.f32 %v1056, %v1072
    %v1074 = vsub.f32 1.0, %v1073
    %v1075 = vmul.f32 %v1072, %v1074
    %v1076 = vadd.f32 %v1072, %v1075
    %vm1077 = vweird.f32 %v1056
    %vm1078 = vweird.f32 %v1072
    %vm1079 = vmor %vm1077, %vm1078
    %v1080 = vsel %vm1079, %v1072, %v1076
    %v1081 = vand.u32 2147483647, %v1056
    %vm1082 = vcmp.eq.f32.partialorder %v1081, 8.507059e+37
    %v1083 = vand.u32 %v1056, 2147483648
    %v1084 = vor.u32 1.1754944e-38, %v1083
    %v1085 = vsel %vm1082, %v1084, %v1080
    %v1086 = vmul.f32 %v1048, %v1085
    %vm1087 = vcmp.lt.f32.partialorder %v1071, 0.03
    %vm1088 = vcmp.lt.f32.partialorder %v1086, 0.03
    %v1089 = vsel %vm1087, 0.0, %v1071
    %v1090 = vsel %vm1088, 0.0, %v1086
    %1091 = vrot.lane.b32.xlu0 %v216, 72
    %v1092 = vpop.permute.xlu0 %1091
    %1093 = vrot.lane.b32.xlu0 %v219, 72
    %v1094 = vpop.permute.xlu0 %1093
    %v1098 = vsel %vm244, %v1089, 0
    %v1101 = vsel %vm244, %v1090, 0
    %1103 = vmatpush.msra.mxu0 0.0
    %1104 = vmatpush.msra.mxu0 0.0
    %1105 = vmatpush.msra.mxu0 0.0
    %1106 = vmatpush.msra.mxu0 0.0
    %1107 = vmatpush.msra.mxu0 0.0
    %1108 = vmatpush.msra.mxu0 0.0
    %1109 = vmatpush.msra.mxu0 0.0
    %1110 = vmatpush.msra.mxu0 0.0
    %1111 = vmatpush.msra.mxu0 0.0
    %1112 = vmatpush.msra.mxu0 0.0
    %1113 = vmatpush.msra.mxu0 0.0
    %1114 = vmatpush.msra.mxu0 0.0
    %1115 = vmatpush.msra.mxu0 0.0
    %1116 = vmatpush.msra.mxu0 0.0
    %1117 = vmatpush.msra.mxu0 %v1094
    %1118 = vmatpush.msra.mxu0 %v1092
    %1119 = vmatmul.f32.gmra.mxu0 %v1098
    %v1120 = vpop.f32.mrf.mxu0
    %v1121 = vadd.f32 0.0, %v1120
    %1122 = vmatmul.f32.gmra.mxu0 %v1101
    %v1123 = vpop.f32.mrf.mxu0
    %v1124 = vadd.f32 0.0, %v1123
    %1125 = vdwg.mxu0
    %v1126 = vadd.f32 %v1012, %v1121
    %v1127 = vadd.f32 %v1013, %v1124
    %v1128 = vld [vmem:[%s11] sm:$0x1]
    %v1129 = vperm.slane %v1128, 0
    %v1130 = vadd.f32 %v1126, %v1129
    %v1131 = vadd.f32 %v1127, %v1129
    %vm1132 = vcmp.gt.f32.partialorder %v1130, 0.0
    %vm1133 = vcmp.gt.f32.partialorder %v1131, 0.0
    %v1134 = vmul.f32 %v1130, 0.01
    %v1135 = vmul.f32 %v1131, 0.01
    %v1136 = vsel %vm1132, %v1130, %v1134
    %v1137 = vsel %vm1133, %v1131, %v1135
    %v1138 = vadd.f32 %v1136, %v136
    %v1139 = vadd.f32 %v1137, %v137
    %v1140 = vsel %vm143, %v1138, 0.0
    %v1141 = vsel %vm143, %v1139, 0.0
    %v1142 = vadd.f32 %v1140, %v1141
    %v1143 = vrot.slane %v1142, 4
    %v1144 = vadd.f32 %v1142, %v1143
    %v1145 = vrot.slane %v1144, 2
    %v1146 = vadd.f32 %v1144, %v1145
    %v1147 = vrot.slane %v1146, 1
    %v1148 = vadd.f32 %v1146, %v1147
    %v1149 = vrcp.pop 16.0
    %v1150 = vmul.f32 16.0, %v1149
    %v1151 = vsub.f32 1.0, %v1150
    %v1152 = vmul.f32 %v1149, %v1151
    %v1153 = vadd.f32 %v1149, %v1152
    %vm1154 = vweird.f32 %v1149
    %v1155 = vsel %vm1154, %v1149, %v1153
    %v1156 = vmul.f32 %v1148, %v1155
    %v1157 = vmul.f32 %v1138, %v1138
    %v1158 = vmul.f32 %v1139, %v1139
    %v1159 = vsel %vm143, %v1157, 0.0
    %v1160 = vsel %vm143, %v1158, 0.0
    %v1161 = vadd.f32 %v1159, %v1160
    %v1162 = vrot.slane %v1161, 4
    %v1163 = vadd.f32 %v1161, %v1162
    %v1164 = vrot.slane %v1163, 2
    %v1165 = vadd.f32 %v1163, %v1164
    %v1166 = vrot.slane %v1165, 1
    %v1167 = vadd.f32 %v1165, %v1166
    %v1168 = vmul.f32 %v1167, %v1155
    %v1169 = vmul.f32 %v1156, %v1156
    %v1170 = vsub.f32 %v1168, %v1169
    %v1171 = vmax.f32 %v1170, 0.0
    %v1172 = vsub.f32 %v1138, %v1156
    %v1173 = vsub.f32 %v1139, %v1156
    %v1174 = vadd.f32 %v1171, 1e-05
    %v1175 = vrsqrt.pop %v1174
    %v1176 = vmul.f32 %v1175, %v1174
    %v1177 = vmul.f32 %v1176, %v1175
    %v1178 = vmul.f32 0.5, %v1177
    %v1179 = vsub.f32 1.5, %v1178
    %v1180 = vmul.f32 %v1175, %v1179
    %vm1181 = vweird.f32 %v1174
    %vm1182 = vweird.f32 %v1175
    %vm1183 = vmor %vm1181, %vm1182
    %v1184 = vsel %vm1183, %v1175, %v1180
    %v1185 = vmul.f32 %v1172, %v1184
    %v1186 = vmul.f32 %v1173, %v1184
    %v1187 = vld [vmem:[#allocation10] sm:$0xff]
    %v1188 = vld [vmem:[%s11 + $0x1] sm:$0x1]
    %v1189 = vperm.slane %v1188, 0
    %v1191 = vsel %vm143, %v1185, 0
    %v1194 = vsel %vm143, %v1186, 0
    %1196 = vmatpush.msra.mxu0 0.0
    %1197 = vmatpush.msra.mxu0 0.0
    %1198 = vmatpush.msra.mxu0 0.0
    %1199 = vmatpush.msra.mxu0 0.0
    %1200 = vmatpush.msra.mxu0 0.0
    %1201 = vmatpush.msra.mxu0 0.0
    %1202 = vmatpush.msra.mxu0 0.0
    %1203 = vmatpush.msra.mxu0 0.0
    %1204 = vmatpush.msra.mxu0 0.0
    %1205 = vmatpush.msra.mxu0 0.0
    %1206 = vmatpush.msra.mxu0 0.0
    %1207 = vmatpush.msra.mxu0 0.0
    %1208 = vmatpush.msra.mxu0 0.0
    %1209 = vmatpush.msra.mxu0 0.0
    %1210 = vmatpush.msra.mxu0 0.0
    %1211 = vmatpush.msra.mxu0 %v1187
    %1212 = vmatmul.f32.gmra.mxu0 %v1191
    %v1213 = vpop.f32.mrf.mxu0
    %v1214 = vadd.f32 %v1189, %v1213
    %1215 = vmatmul.f32.gmra.mxu0 %v1194
    %v1216 = vpop.f32.mrf.mxu0
    %v1217 = vadd.f32 %v1189, %v1216
    %1218 = vdwg.mxu0
    %vm1219 = vcmp.gt.f32.partialorder %v1214, 0.0
    %vm1220 = vcmp.gt.f32.partialorder %v1217, 0.0
    %v1221 = vmul.f32 %v1214, 0.01
    %v1222 = vmul.f32 %v1217, 0.01
    %v1223 = vsel %vm1219, %v1214, %v1221
    %v1224 = vsel %vm1220, %v1217, %v1222
    %v1225 = vadd.f32 %v1223, %v136
    %v1226 = vadd.f32 %v1224, %v137
    %v1227 = vsel %vm143, %v1225, 0.0
    %v1228 = vsel %vm143, %v1226, 0.0
    %v1229 = vadd.f32 %v1227, %v1228
    %v1230 = vrot.slane %v1229, 4
    %v1231 = vadd.f32 %v1229, %v1230
    %v1232 = vrot.slane %v1231, 2
    %v1233 = vadd.f32 %v1231, %v1232
    %v1234 = vrot.slane %v1233, 1
    %v1235 = vadd.f32 %v1233, %v1234
    %v1236 = vmul.f32 %v1235, %v1155
    %v1237 = vmul.f32 %v1225, %v1225
    %v1238 = vmul.f32 %v1226, %v1226
    %v1239 = vsel %vm143, %v1237, 0.0
    %v1240 = vsel %vm143, %v1238, 0.0
    %v1241 = vadd.f32 %v1239, %v1240
    %v1242 = vrot.slane %v1241, 4
    %v1243 = vadd.f32 %v1241, %v1242
    %v1244 = vrot.slane %v1243, 2
    %v1245 = vadd.f32 %v1243, %v1244
    %v1246 = vrot.slane %v1245, 1
    %v1247 = vadd.f32 %v1245, %v1246
    %v1248 = vmul.f32 %v1247, %v1155
    %v1249 = vmul.f32 %v1236, %v1236
    %v1250 = vsub.f32 %v1248, %v1249
    %v1251 = vmax.f32 %v1250, 0.0
    %v1252 = vsub.f32 %v1225, %v1236
    %v1253 = vsub.f32 %v1226, %v1236
    %v1254 = vadd.f32 %v1251, 1e-05
    %v1255 = vrsqrt.pop %v1254
    %v1256 = vmul.f32 %v1255, %v1254
    %v1257 = vmul.f32 %v1256, %v1255
    %v1258 = vmul.f32 0.5, %v1257
    %v1259 = vsub.f32 1.5, %v1258
    %v1260 = vmul.f32 %v1255, %v1259
    %vm1261 = vweird.f32 %v1254
    %vm1262 = vweird.f32 %v1255
    %vm1263 = vmor %vm1261, %vm1262
    %v1264 = vsel %vm1263, %v1255, %v1260
    %v1265 = vmul.f32 %v1252, %v1264
    %v1266 = vmul.f32 %v1253, %v1264
    %v1267 = vld [vmem:[#allocation6] sm:$0xff]
    %v1269 = vsel %vm143, %v1265, 0
    %v1272 = vsel %vm143, %v1266, 0
    %1274 = vmatpush.msra.mxu0 0.0
    %1275 = vmatpush.msra.mxu0 0.0
    %1276 = vmatpush.msra.mxu0 0.0
    %1277 = vmatpush.msra.mxu0 0.0
    %1278 = vmatpush.msra.mxu0 0.0
    %1279 = vmatpush.msra.mxu0 0.0
    %1280 = vmatpush.msra.mxu0 0.0
    %1281 = vmatpush.msra.mxu0 0.0
    %1282 = vmatpush.msra.mxu0 0.0
    %1283 = vmatpush.msra.mxu0 0.0
    %1284 = vmatpush.msra.mxu0 0.0
    %1285 = vmatpush.msra.mxu0 0.0
    %1286 = vmatpush.msra.mxu0 0.0
    %1287 = vmatpush.msra.mxu0 0.0
    %1288 = vmatpush.msra.mxu0 0.0
    %1289 = vmatpush.msra.mxu0 %v1267
    %1290 = vmatmul.f32.gmra.mxu0 %v1269
    %v1291 = vpop.f32.mrf.mxu0
    %v1292 = vadd.f32 0.0, %v1291
    %1293 = vmatmul.f32.gmra.mxu0 %v1272
    %v1294 = vpop.f32.mrf.mxu0
    %v1295 = vadd.f32 0.0, %v1294
    %1296 = vdwg.mxu0
    %v1297 = vld [vmem:[#allocation7] sm:$0xff]
    %v1299 = vsel %vm143, %v1297, 0
    %1301 = vmatpush.xpose.msra.mxu0 0.0
    %1302 = vmatpush.xpose.msra.mxu0 0.0
    %1303 = vmatpush.xpose.msra.mxu0 0.0
    %1304 = vmatpush.xpose.msra.mxu0 0.0
    %1305 = vmatpush.xpose.msra.mxu0 0.0
    %1306 = vmatpush.xpose.msra.mxu0 0.0
    %1307 = vmatpush.xpose.msra.mxu0 0.0
    %1308 = vmatpush.xpose.msra.mxu0 0.0
    %1309 = vmatpush.xpose.msra.mxu0 0.0
    %1310 = vmatpush.xpose.msra.mxu0 0.0
    %1311 = vmatpush.xpose.msra.mxu0 0.0
    %1312 = vmatpush.xpose.msra.mxu0 0.0
    %1313 = vmatpush.xpose.msra.mxu0 0.0
    %1314 = vmatpush.xpose.msra.mxu0 0.0
    %1315 = vmatpush.xpose.msra.mxu0 %v1272
    %1316 = vmatpush.xpose.msra.mxu0 %v1269
    %1317 = vmatmul.f32.gmra.mxu0 %v1299
    %v1318 = vpop.f32.mrf.mxu0
    %v1319 = vadd.f32 0.0, %v1318
    %1320 = vdwg.mxu0
    %v1321 = vld [vmem:[#allocation9] sm:$0xff]
    %1322 = vmatpush.msra.mxu0 0.0
    %1323 = vmatpush.msra.mxu0 0.0
    %1324 = vmatpush.msra.mxu0 0.0
    %1325 = vmatpush.msra.mxu0 0.0
    %1326 = vmatpush.msra.mxu0 0.0
    %1327 = vmatpush.msra.mxu0 0.0
    %1328 = vmatpush.msra.mxu0 0.0
    %1329 = vmatpush.msra.mxu0 0.0
    %1330 = vmatpush.msra.mxu0 0.0
    %1331 = vmatpush.msra.mxu0 0.0
    %1332 = vmatpush.msra.mxu0 0.0
    %1333 = vmatpush.msra.mxu0 0.0
    %1334 = vmatpush.msra.mxu0 0.0
    %1335 = vmatpush.msra.mxu0 0.0
    %1336 = vmatpush.msra.mxu0 0.0
    %1337 = vmatpush.msra.mxu0 %v1321
    %1338 = vmatmul.f32.gmra.mxu0 %v1269
    %v1339 = vpop.f32.mrf.mxu0
    %v1340 = vadd.f32 0.0, %v1339
    %1341 = vmatmul.f32.gmra.mxu0 %v1272
    %v1342 = vpop.f32.mrf.mxu0
    %v1343 = vadd.f32 0.0, %v1342
    %1344 = vdwg.mxu0
    %1346 = vset.pattern.permute.xlu0 0
    %1347 = vperm.xlu0 %1346, %v1292
    %v1348 = vpop.permute.xlu0 %1347
    %1351 = vset.pattern.permute.xlu0 0
    %1352 = vperm.xlu0 %1351, %v1295
    %v1353 = vpop.permute.xlu0 %1352
    %v1355 = vperm.slane %v1319, 0
    %v1356 = vadd.f32 %v1348, %v1355
    %v1357 = vadd.f32 %v1353, %v1355
    %vm1358 = vcmp.gt.f32.partialorder %v1356, 0.0
    %vm1359 = vcmp.gt.f32.partialorder %v1357, 0.0
    %v1360 = vmul.f32 %v1356, 0.2
    %v1361 = vmul.f32 %v1357, 0.2
    %v1362 = vsel %vm1358, %v1356, %v1360
    %v1363 = vsel %vm1359, %v1357, %v1361
    %v1364 = vmul.f32 %v1362, 0.2940141
    %v1365 = vmul.f32 %v1363, 0.2940141
    %v1366 = vsel %vm140, %v1364, -1e+30
    %v1367 = vsel %vm141, %v1365, -1e+30
    %v1368 = vsel %vm244, %v1366, -inf
    %1369 = vmax.xlane.f32.xlu0 %v1368
    %v1370 = vpop.xlane.xlu0 %1369
    %v1371 = vsel %vm244, %v1367, -inf
    %1372 = vmax.xlane.f32.xlu0 %v1371
    %v1373 = vpop.xlane.xlu0 %1372
    %v1374 = vsub.f32 %v1366, %v1370
    %v1375 = vsub.f32 %v1367, %v1373
    %v1376 = vmul.f32 %v1374, 1.442695
    %v1377 = vpow.pop %v1376
    %v1378 = vmul.f32 %v1375, 1.442695
    %v1379 = vpow.pop %v1378
    %v1380 = vsel %vm140, %v1377, 0.0
    %v1381 = vsel %vm141, %v1379, 0.0
    %v1382 = vsel %vm244, %v1380, 0.0
    %1383 = vadd.xlane.f32.xlu0 %v1382
    %v1384 = vpop.xlane.xlu0 %1383
    %v1385 = vsel %vm244, %v1381, 0.0
    %1386 = vadd.xlane.f32.xlu0 %v1385
    %v1387 = vpop.xlane.xlu0 %1386
    %v1388 = vmax.f32 %v1384, 1e-16
    %v1389 = vmax.f32 %v1387, 1e-16
    %v1390 = vrcp.pop %v1388
    %v1391 = vmul.f32 %v1388, %v1390
    %v1392 = vsub.f32 1.0, %v1391
    %v1393 = vmul.f32 %v1390, %v1392
    %v1394 = vadd.f32 %v1390, %v1393
    %vm1395 = vweird.f32 %v1388
    %vm1396 = vweird.f32 %v1390
    %vm1397 = vmor %vm1395, %vm1396
    %v1398 = vsel %vm1397, %v1390, %v1394
    %v1399 = vand.u32 2147483647, %v1388
    %vm1400 = vcmp.eq.f32.partialorder %v1399, 8.507059e+37
    %v1401 = vand.u32 %v1388, 2147483648
    %v1402 = vor.u32 1.1754944e-38, %v1401
    %v1403 = vsel %vm1400, %v1402, %v1398
    %v1404 = vmul.f32 %v1380, %v1403
    %v1405 = vrcp.pop %v1389
    %v1406 = vmul.f32 %v1389, %v1405
    %v1407 = vsub.f32 1.0, %v1406
    %v1408 = vmul.f32 %v1405, %v1407
    %v1409 = vadd.f32 %v1405, %v1408
    %vm1410 = vweird.f32 %v1389
    %vm1411 = vweird.f32 %v1405
    %vm1412 = vmor %vm1410, %vm1411
    %v1413 = vsel %vm1412, %v1405, %v1409
    %v1414 = vand.u32 2147483647, %v1389
    %vm1415 = vcmp.eq.f32.partialorder %v1414, 8.507059e+37
    %v1416 = vand.u32 %v1389, 2147483648
    %v1417 = vor.u32 1.1754944e-38, %v1416
    %v1418 = vsel %vm1415, %v1417, %v1413
    %v1419 = vmul.f32 %v1381, %v1418
    %vm1420 = vcmp.lt.f32.partialorder %v1404, 0.03
    %vm1421 = vcmp.lt.f32.partialorder %v1419, 0.03
    %v1422 = vsel %vm1420, 0.0, %v1404
    %v1423 = vsel %vm1421, 0.0, %v1419
    %1424 = vset.pattern.permute.xlu0 1
    %1425 = vperm.xlu0 %1424, %v1292
    %v1426 = vpop.permute.xlu0 %1425
    %1428 = vset.pattern.permute.xlu0 1
    %1429 = vperm.xlu0 %1428, %v1295
    %v1430 = vpop.permute.xlu0 %1429
    %v1432 = vperm.slane %v1319, 1
    %v1433 = vadd.f32 %v1426, %v1432
    %v1434 = vadd.f32 %v1430, %v1432
    %vm1435 = vcmp.gt.f32.partialorder %v1433, 0.0
    %vm1436 = vcmp.gt.f32.partialorder %v1434, 0.0
    %v1437 = vmul.f32 %v1433, 0.2
    %v1438 = vmul.f32 %v1434, 0.2
    %v1439 = vsel %vm1435, %v1433, %v1437
    %v1440 = vsel %vm1436, %v1434, %v1438
    %v1441 = vmul.f32 %v1439, 0.2940141
    %v1442 = vmul.f32 %v1440, 0.2940141
    %v1443 = vsel %vm140, %v1441, -1e+30
    %v1444 = vsel %vm141, %v1442, -1e+30
    %v1445 = vsel %vm244, %v1443, -inf
    %1446 = vmax.xlane.f32.xlu0 %v1445
    %v1447 = vpop.xlane.xlu0 %1446
    %v1448 = vsel %vm244, %v1444, -inf
    %1449 = vmax.xlane.f32.xlu0 %v1448
    %v1450 = vpop.xlane.xlu0 %1449
    %v1451 = vsub.f32 %v1443, %v1447
    %v1452 = vsub.f32 %v1444, %v1450
    %v1453 = vmul.f32 %v1451, 1.442695
    %v1454 = vpow.pop %v1453
    %v1455 = vmul.f32 %v1452, 1.442695
    %v1456 = vpow.pop %v1455
    %v1457 = vsel %vm140, %v1454, 0.0
    %v1458 = vsel %vm141, %v1456, 0.0
    %v1459 = vsel %vm244, %v1457, 0.0
    %1460 = vadd.xlane.f32.xlu0 %v1459
    %v1461 = vpop.xlane.xlu0 %1460
    %v1462 = vsel %vm244, %v1458, 0.0
    %1463 = vadd.xlane.f32.xlu0 %v1462
    %v1464 = vpop.xlane.xlu0 %1463
    %v1465 = vmax.f32 %v1461, 1e-16
    %v1466 = vmax.f32 %v1464, 1e-16
    %v1467 = vrcp.pop %v1465
    %v1468 = vmul.f32 %v1465, %v1467
    %v1469 = vsub.f32 1.0, %v1468
    %v1470 = vmul.f32 %v1467, %v1469
    %v1471 = vadd.f32 %v1467, %v1470
    %vm1472 = vweird.f32 %v1465
    %vm1473 = vweird.f32 %v1467
    %vm1474 = vmor %vm1472, %vm1473
    %v1475 = vsel %vm1474, %v1467, %v1471
    %v1476 = vand.u32 2147483647, %v1465
    %vm1477 = vcmp.eq.f32.partialorder %v1476, 8.507059e+37
    %v1478 = vand.u32 %v1465, 2147483648
    %v1479 = vor.u32 1.1754944e-38, %v1478
    %v1480 = vsel %vm1477, %v1479, %v1475
    %v1481 = vmul.f32 %v1457, %v1480
    %v1482 = vrcp.pop %v1466
    %v1483 = vmul.f32 %v1466, %v1482
    %v1484 = vsub.f32 1.0, %v1483
    %v1485 = vmul.f32 %v1482, %v1484
    %v1486 = vadd.f32 %v1482, %v1485
    %vm1487 = vweird.f32 %v1466
    %vm1488 = vweird.f32 %v1482
    %vm1489 = vmor %vm1487, %vm1488
    %v1490 = vsel %vm1489, %v1482, %v1486
    %v1491 = vand.u32 2147483647, %v1466
    %vm1492 = vcmp.eq.f32.partialorder %v1491, 8.507059e+37
    %v1493 = vand.u32 %v1466, 2147483648
    %v1494 = vor.u32 1.1754944e-38, %v1493
    %v1495 = vsel %vm1492, %v1494, %v1490
    %v1496 = vmul.f32 %v1458, %v1495
    %vm1497 = vcmp.lt.f32.partialorder %v1481, 0.03
    %vm1498 = vcmp.lt.f32.partialorder %v1496, 0.03
    %v1499 = vsel %vm1497, 0.0, %v1481
    %v1500 = vsel %vm1498, 0.0, %v1496
    %1503 = vrot.lane.b32.xlu0 %v1340, 120
    %v1504 = vpop.permute.xlu0 %1503
    %1505 = vrot.lane.b32.xlu0 %v1343, 120
    %v1506 = vpop.permute.xlu0 %1505
    %v1510 = vsel %vm244, %v1499, 0
    %v1513 = vsel %vm244, %v1500, 0
    %1515 = vmatpush.msra.mxu0 0.0
    %1516 = vmatpush.msra.mxu0 0.0
    %1517 = vmatpush.msra.mxu0 0.0
    %1518 = vmatpush.msra.mxu0 0.0
    %1519 = vmatpush.msra.mxu0 0.0
    %1520 = vmatpush.msra.mxu0 0.0
    %1521 = vmatpush.msra.mxu0 0.0
    %1522 = vmatpush.msra.mxu0 0.0
    %1523 = vmatpush.msra.mxu0 0.0
    %1524 = vmatpush.msra.mxu0 0.0
    %1525 = vmatpush.msra.mxu0 0.0
    %1526 = vmatpush.msra.mxu0 0.0
    %1527 = vmatpush.msra.mxu0 0.0
    %1528 = vmatpush.msra.mxu0 0.0
    %1529 = vmatpush.msra.mxu0 %v1506
    %1530 = vmatpush.msra.mxu0 %v1504
    %1531 = vmatmul.f32.gmra.mxu0 %v1510
    %v1532 = vpop.f32.mrf.mxu0
    %v1533 = vadd.f32 0.0, %v1532
    %1534 = vmatmul.f32.gmra.mxu0 %v1513
    %v1535 = vpop.f32.mrf.mxu0
    %v1536 = vadd.f32 0.0, %v1535
    %1537 = vdwg.mxu0
    %v1539 = vsel %vm244, %v1422, 0
    %v1542 = vsel %vm244, %v1423, 0
    %1544 = vmatpush.msra.mxu0 0.0
    %1545 = vmatpush.msra.mxu0 0.0
    %1546 = vmatpush.msra.mxu0 0.0
    %1547 = vmatpush.msra.mxu0 0.0
    %1548 = vmatpush.msra.mxu0 0.0
    %1549 = vmatpush.msra.mxu0 0.0
    %1550 = vmatpush.msra.mxu0 0.0
    %1551 = vmatpush.msra.mxu0 0.0
    %1552 = vmatpush.msra.mxu0 0.0
    %1553 = vmatpush.msra.mxu0 0.0
    %1554 = vmatpush.msra.mxu0 0.0
    %1555 = vmatpush.msra.mxu0 0.0
    %1556 = vmatpush.msra.mxu0 0.0
    %1557 = vmatpush.msra.mxu0 0.0
    %1558 = vmatpush.msra.mxu0 %v1343
    %1559 = vmatpush.msra.mxu0 %v1340
    %1560 = vmatmul.f32.gmra.mxu0 %v1539
    %v1561 = vpop.f32.mrf.mxu0
    %v1562 = vadd.f32 %v1533, %v1561
    %1563 = vmatmul.f32.gmra.mxu0 %v1542
    %v1564 = vpop.f32.mrf.mxu0
    %v1565 = vadd.f32 %v1536, %v1564
    %1566 = vdwg.mxu0
    %1567 = vset.pattern.permute.xlu0 2
    %1568 = vperm.xlu0 %1567, %v1292
    %v1569 = vpop.permute.xlu0 %1568
    %1571 = vset.pattern.permute.xlu0 2
    %1572 = vperm.xlu0 %1571, %v1295
    %v1573 = vpop.permute.xlu0 %1572
    %v1575 = vperm.slane %v1319, 2
    %v1576 = vadd.f32 %v1569, %v1575
    %v1577 = vadd.f32 %v1573, %v1575
    %vm1578 = vcmp.gt.f32.partialorder %v1576, 0.0
    %vm1579 = vcmp.gt.f32.partialorder %v1577, 0.0
    %v1580 = vmul.f32 %v1576, 0.2
    %v1581 = vmul.f32 %v1577, 0.2
    %v1582 = vsel %vm1578, %v1576, %v1580
    %v1583 = vsel %vm1579, %v1577, %v1581
    %v1584 = vmul.f32 %v1582, 0.2940141
    %v1585 = vmul.f32 %v1583, 0.2940141
    %v1586 = vsel %vm140, %v1584, -1e+30
    %v1587 = vsel %vm141, %v1585, -1e+30
    %v1588 = vsel %vm244, %v1586, -inf
    %1589 = vmax.xlane.f32.xlu0 %v1588
    %v1590 = vpop.xlane.xlu0 %1589
    %v1591 = vsel %vm244, %v1587, -inf
    %1592 = vmax.xlane.f32.xlu0 %v1591
    %v1593 = vpop.xlane.xlu0 %1592
    %v1594 = vsub.f32 %v1586, %v1590
    %v1595 = vsub.f32 %v1587, %v1593
    %v1596 = vmul.f32 %v1594, 1.442695
    %v1597 = vpow.pop %v1596
    %v1598 = vmul.f32 %v1595, 1.442695
    %v1599 = vpow.pop %v1598
    %v1600 = vsel %vm140, %v1597, 0.0
    %v1601 = vsel %vm141, %v1599, 0.0
    %v1602 = vsel %vm244, %v1600, 0.0
    %1603 = vadd.xlane.f32.xlu0 %v1602
    %v1604 = vpop.xlane.xlu0 %1603
    %v1605 = vsel %vm244, %v1601, 0.0
    %1606 = vadd.xlane.f32.xlu0 %v1605
    %v1607 = vpop.xlane.xlu0 %1606
    %v1608 = vmax.f32 %v1604, 1e-16
    %v1609 = vmax.f32 %v1607, 1e-16
    %v1610 = vrcp.pop %v1608
    %v1611 = vmul.f32 %v1608, %v1610
    %v1612 = vsub.f32 1.0, %v1611
    %v1613 = vmul.f32 %v1610, %v1612
    %v1614 = vadd.f32 %v1610, %v1613
    %vm1615 = vweird.f32 %v1608
    %vm1616 = vweird.f32 %v1610
    %vm1617 = vmor %vm1615, %vm1616
    %v1618 = vsel %vm1617, %v1610, %v1614
    %v1619 = vand.u32 2147483647, %v1608
    %vm1620 = vcmp.eq.f32.partialorder %v1619, 8.507059e+37
    %v1621 = vand.u32 %v1608, 2147483648
    %v1622 = vor.u32 1.1754944e-38, %v1621
    %v1623 = vsel %vm1620, %v1622, %v1618
    %v1624 = vmul.f32 %v1600, %v1623
    %v1625 = vrcp.pop %v1609
    %v1626 = vmul.f32 %v1609, %v1625
    %v1627 = vsub.f32 1.0, %v1626
    %v1628 = vmul.f32 %v1625, %v1627
    %v1629 = vadd.f32 %v1625, %v1628
    %vm1630 = vweird.f32 %v1609
    %vm1631 = vweird.f32 %v1625
    %vm1632 = vmor %vm1630, %vm1631
    %v1633 = vsel %vm1632, %v1625, %v1629
    %v1634 = vand.u32 2147483647, %v1609
    %vm1635 = vcmp.eq.f32.partialorder %v1634, 8.507059e+37
    %v1636 = vand.u32 %v1609, 2147483648
    %v1637 = vor.u32 1.1754944e-38, %v1636
    %v1638 = vsel %vm1635, %v1637, %v1633
    %v1639 = vmul.f32 %v1601, %v1638
    %vm1640 = vcmp.lt.f32.partialorder %v1624, 0.03
    %vm1641 = vcmp.lt.f32.partialorder %v1639, 0.03
    %v1642 = vsel %vm1640, 0.0, %v1624
    %v1643 = vsel %vm1641, 0.0, %v1639
    %1644 = vrot.lane.b32.xlu0 %v1340, 112
    %v1645 = vpop.permute.xlu0 %1644
    %1646 = vrot.lane.b32.xlu0 %v1343, 112
    %v1647 = vpop.permute.xlu0 %1646
    %v1651 = vsel %vm244, %v1642, 0
    %v1654 = vsel %vm244, %v1643, 0
    %1656 = vmatpush.msra.mxu0 0.0
    %1657 = vmatpush.msra.mxu0 0.0
    %1658 = vmatpush.msra.mxu0 0.0
    %1659 = vmatpush.msra.mxu0 0.0
    %1660 = vmatpush.msra.mxu0 0.0
    %1661 = vmatpush.msra.mxu0 0.0
    %1662 = vmatpush.msra.mxu0 0.0
    %1663 = vmatpush.msra.mxu0 0.0
    %1664 = vmatpush.msra.mxu0 0.0
    %1665 = vmatpush.msra.mxu0 0.0
    %1666 = vmatpush.msra.mxu0 0.0
    %1667 = vmatpush.msra.mxu0 0.0
    %1668 = vmatpush.msra.mxu0 0.0
    %1669 = vmatpush.msra.mxu0 0.0
    %1670 = vmatpush.msra.mxu0 %v1647
    %1671 = vmatpush.msra.mxu0 %v1645
    %1672 = vmatmul.f32.gmra.mxu0 %v1651
    %v1673 = vpop.f32.mrf.mxu0
    %v1674 = vadd.f32 0.0, %v1673
    %1675 = vmatmul.f32.gmra.mxu0 %v1654
    %v1676 = vpop.f32.mrf.mxu0
    %v1677 = vadd.f32 0.0, %v1676
    %1678 = vdwg.mxu0
    %v1679 = vadd.f32 %v1562, %v1674
    %v1680 = vadd.f32 %v1565, %v1677
    %1681 = vset.pattern.permute.xlu0 3
    %1682 = vperm.xlu0 %1681, %v1292
    %v1683 = vpop.permute.xlu0 %1682
    %1685 = vset.pattern.permute.xlu0 3
    %1686 = vperm.xlu0 %1685, %v1295
    %v1687 = vpop.permute.xlu0 %1686
    %v1689 = vperm.slane %v1319, 3
    %v1690 = vadd.f32 %v1683, %v1689
    %v1691 = vadd.f32 %v1687, %v1689
    %vm1692 = vcmp.gt.f32.partialorder %v1690, 0.0
    %vm1693 = vcmp.gt.f32.partialorder %v1691, 0.0
    %v1694 = vmul.f32 %v1690, 0.2
    %v1695 = vmul.f32 %v1691, 0.2
    %v1696 = vsel %vm1692, %v1690, %v1694
    %v1697 = vsel %vm1693, %v1691, %v1695
    %v1698 = vmul.f32 %v1696, 0.2940141
    %v1699 = vmul.f32 %v1697, 0.2940141
    %v1700 = vsel %vm140, %v1698, -1e+30
    %v1701 = vsel %vm141, %v1699, -1e+30
    %v1702 = vsel %vm244, %v1700, -inf
    %1703 = vmax.xlane.f32.xlu0 %v1702
    %v1704 = vpop.xlane.xlu0 %1703
    %v1705 = vsel %vm244, %v1701, -inf
    %1706 = vmax.xlane.f32.xlu0 %v1705
    %v1707 = vpop.xlane.xlu0 %1706
    %v1708 = vsub.f32 %v1700, %v1704
    %v1709 = vsub.f32 %v1701, %v1707
    %v1710 = vmul.f32 %v1708, 1.442695
    %v1711 = vpow.pop %v1710
    %v1712 = vmul.f32 %v1709, 1.442695
    %v1713 = vpow.pop %v1712
    %v1714 = vsel %vm140, %v1711, 0.0
    %v1715 = vsel %vm141, %v1713, 0.0
    %v1716 = vsel %vm244, %v1714, 0.0
    %1717 = vadd.xlane.f32.xlu0 %v1716
    %v1718 = vpop.xlane.xlu0 %1717
    %v1719 = vsel %vm244, %v1715, 0.0
    %1720 = vadd.xlane.f32.xlu0 %v1719
    %v1721 = vpop.xlane.xlu0 %1720
    %v1722 = vmax.f32 %v1718, 1e-16
    %v1723 = vmax.f32 %v1721, 1e-16
    %v1724 = vrcp.pop %v1722
    %v1725 = vmul.f32 %v1722, %v1724
    %v1726 = vsub.f32 1.0, %v1725
    %v1727 = vmul.f32 %v1724, %v1726
    %v1728 = vadd.f32 %v1724, %v1727
    %vm1729 = vweird.f32 %v1722
    %vm1730 = vweird.f32 %v1724
    %vm1731 = vmor %vm1729, %vm1730
    %v1732 = vsel %vm1731, %v1724, %v1728
    %v1733 = vand.u32 2147483647, %v1722
    %vm1734 = vcmp.eq.f32.partialorder %v1733, 8.507059e+37
    %v1735 = vand.u32 %v1722, 2147483648
    %v1736 = vor.u32 1.1754944e-38, %v1735
    %v1737 = vsel %vm1734, %v1736, %v1732
    %v1738 = vmul.f32 %v1714, %v1737
    %v1739 = vrcp.pop %v1723
    %v1740 = vmul.f32 %v1723, %v1739
    %v1741 = vsub.f32 1.0, %v1740
    %v1742 = vmul.f32 %v1739, %v1741
    %v1743 = vadd.f32 %v1739, %v1742
    %vm1744 = vweird.f32 %v1723
    %vm1745 = vweird.f32 %v1739
    %vm1746 = vmor %vm1744, %vm1745
    %v1747 = vsel %vm1746, %v1739, %v1743
    %v1748 = vand.u32 2147483647, %v1723
    %vm1749 = vcmp.eq.f32.partialorder %v1748, 8.507059e+37
    %v1750 = vand.u32 %v1723, 2147483648
    %v1751 = vor.u32 1.1754944e-38, %v1750
    %v1752 = vsel %vm1749, %v1751, %v1747
    %v1753 = vmul.f32 %v1715, %v1752
    %vm1754 = vcmp.lt.f32.partialorder %v1738, 0.03
    %vm1755 = vcmp.lt.f32.partialorder %v1753, 0.03
    %v1756 = vsel %vm1754, 0.0, %v1738
    %v1757 = vsel %vm1755, 0.0, %v1753
    %1758 = vrot.lane.b32.xlu0 %v1340, 104
    %v1759 = vpop.permute.xlu0 %1758
    %1760 = vrot.lane.b32.xlu0 %v1343, 104
    %v1761 = vpop.permute.xlu0 %1760
    %v1765 = vsel %vm244, %v1756, 0
    %v1768 = vsel %vm244, %v1757, 0
    %1770 = vmatpush.msra.mxu0 0.0
    %1771 = vmatpush.msra.mxu0 0.0
    %1772 = vmatpush.msra.mxu0 0.0
    %1773 = vmatpush.msra.mxu0 0.0
    %1774 = vmatpush.msra.mxu0 0.0
    %1775 = vmatpush.msra.mxu0 0.0
    %1776 = vmatpush.msra.mxu0 0.0
    %1777 = vmatpush.msra.mxu0 0.0
    %1778 = vmatpush.msra.mxu0 0.0
    %1779 = vmatpush.msra.mxu0 0.0
    %1780 = vmatpush.msra.mxu0 0.0
    %1781 = vmatpush.msra.mxu0 0.0
    %1782 = vmatpush.msra.mxu0 0.0
    %1783 = vmatpush.msra.mxu0 0.0
    %1784 = vmatpush.msra.mxu0 %v1761
    %1785 = vmatpush.msra.mxu0 %v1759
    %1786 = vmatmul.f32.gmra.mxu0 %v1765
    %v1787 = vpop.f32.mrf.mxu0
    %v1788 = vadd.f32 0.0, %v1787
    %1789 = vmatmul.f32.gmra.mxu0 %v1768
    %v1790 = vpop.f32.mrf.mxu0
    %v1791 = vadd.f32 0.0, %v1790
    %1792 = vdwg.mxu0
    %v1793 = vadd.f32 %v1679, %v1788
    %v1794 = vadd.f32 %v1680, %v1791
    %1795 = vset.pattern.permute.xlu0 4
    %1796 = vperm.xlu0 %1795, %v1292
    %v1797 = vpop.permute.xlu0 %1796
    %1799 = vset.pattern.permute.xlu0 4
    %1800 = vperm.xlu0 %1799, %v1295
    %v1801 = vpop.permute.xlu0 %1800
    %v1803 = vperm.slane %v1319, 4
    %v1804 = vadd.f32 %v1797, %v1803
    %v1805 = vadd.f32 %v1801, %v1803
    %vm1806 = vcmp.gt.f32.partialorder %v1804, 0.0
    %vm1807 = vcmp.gt.f32.partialorder %v1805, 0.0
    %v1808 = vmul.f32 %v1804, 0.2
    %v1809 = vmul.f32 %v1805, 0.2
    %v1810 = vsel %vm1806, %v1804, %v1808
    %v1811 = vsel %vm1807, %v1805, %v1809
    %v1812 = vmul.f32 %v1810, 0.2940141
    %v1813 = vmul.f32 %v1811, 0.2940141
    %v1814 = vsel %vm140, %v1812, -1e+30
    %v1815 = vsel %vm141, %v1813, -1e+30
    %v1816 = vsel %vm244, %v1814, -inf
    %1817 = vmax.xlane.f32.xlu0 %v1816
    %v1818 = vpop.xlane.xlu0 %1817
    %v1819 = vsel %vm244, %v1815, -inf
    %1820 = vmax.xlane.f32.xlu0 %v1819
    %v1821 = vpop.xlane.xlu0 %1820
    %v1822 = vsub.f32 %v1814, %v1818
    %v1823 = vsub.f32 %v1815, %v1821
    %v1824 = vmul.f32 %v1822, 1.442695
    %v1825 = vpow.pop %v1824
    %v1826 = vmul.f32 %v1823, 1.442695
    %v1827 = vpow.pop %v1826
    %v1828 = vsel %vm140, %v1825, 0.0
    %v1829 = vsel %vm141, %v1827, 0.0
    %v1830 = vsel %vm244, %v1828, 0.0
    %1831 = vadd.xlane.f32.xlu0 %v1830
    %v1832 = vpop.xlane.xlu0 %1831
    %v1833 = vsel %vm244, %v1829, 0.0
    %1834 = vadd.xlane.f32.xlu0 %v1833
    %v1835 = vpop.xlane.xlu0 %1834
    %v1836 = vmax.f32 %v1832, 1e-16
    %v1837 = vmax.f32 %v1835, 1e-16
    %v1838 = vrcp.pop %v1836
    %v1839 = vmul.f32 %v1836, %v1838
    %v1840 = vsub.f32 1.0, %v1839
    %v1841 = vmul.f32 %v1838, %v1840
    %v1842 = vadd.f32 %v1838, %v1841
    %vm1843 = vweird.f32 %v1836
    %vm1844 = vweird.f32 %v1838
    %vm1845 = vmor %vm1843, %vm1844
    %v1846 = vsel %vm1845, %v1838, %v1842
    %v1847 = vand.u32 2147483647, %v1836
    %vm1848 = vcmp.eq.f32.partialorder %v1847, 8.507059e+37
    %v1849 = vand.u32 %v1836, 2147483648
    %v1850 = vor.u32 1.1754944e-38, %v1849
    %v1851 = vsel %vm1848, %v1850, %v1846
    %v1852 = vmul.f32 %v1828, %v1851
    %v1853 = vrcp.pop %v1837
    %v1854 = vmul.f32 %v1837, %v1853
    %v1855 = vsub.f32 1.0, %v1854
    %v1856 = vmul.f32 %v1853, %v1855
    %v1857 = vadd.f32 %v1853, %v1856
    %vm1858 = vweird.f32 %v1837
    %vm1859 = vweird.f32 %v1853
    %vm1860 = vmor %vm1858, %vm1859
    %v1861 = vsel %vm1860, %v1853, %v1857
    %v1862 = vand.u32 2147483647, %v1837
    %vm1863 = vcmp.eq.f32.partialorder %v1862, 8.507059e+37
    %v1864 = vand.u32 %v1837, 2147483648
    %v1865 = vor.u32 1.1754944e-38, %v1864
    %v1866 = vsel %vm1863, %v1865, %v1861
    %v1867 = vmul.f32 %v1829, %v1866
    %vm1868 = vcmp.lt.f32.partialorder %v1852, 0.03
    %vm1869 = vcmp.lt.f32.partialorder %v1867, 0.03
    %v1870 = vsel %vm1868, 0.0, %v1852
    %v1871 = vsel %vm1869, 0.0, %v1867
    %1872 = vrot.lane.b32.xlu0 %v1340, 96
    %v1873 = vpop.permute.xlu0 %1872
    %1874 = vrot.lane.b32.xlu0 %v1343, 96
    %v1875 = vpop.permute.xlu0 %1874
    %v1879 = vsel %vm244, %v1870, 0
    %v1882 = vsel %vm244, %v1871, 0
    %1884 = vmatpush.msra.mxu0 0.0
    %1885 = vmatpush.msra.mxu0 0.0
    %1886 = vmatpush.msra.mxu0 0.0
    %1887 = vmatpush.msra.mxu0 0.0
    %1888 = vmatpush.msra.mxu0 0.0
    %1889 = vmatpush.msra.mxu0 0.0
    %1890 = vmatpush.msra.mxu0 0.0
    %1891 = vmatpush.msra.mxu0 0.0
    %1892 = vmatpush.msra.mxu0 0.0
    %1893 = vmatpush.msra.mxu0 0.0
    %1894 = vmatpush.msra.mxu0 0.0
    %1895 = vmatpush.msra.mxu0 0.0
    %1896 = vmatpush.msra.mxu0 0.0
    %1897 = vmatpush.msra.mxu0 0.0
    %1898 = vmatpush.msra.mxu0 %v1875
    %1899 = vmatpush.msra.mxu0 %v1873
    %1900 = vmatmul.f32.gmra.mxu0 %v1879
    %v1901 = vpop.f32.mrf.mxu0
    %v1902 = vadd.f32 0.0, %v1901
    %1903 = vmatmul.f32.gmra.mxu0 %v1882
    %v1904 = vpop.f32.mrf.mxu0
    %v1905 = vadd.f32 0.0, %v1904
    %1906 = vdwg.mxu0
    %v1907 = vadd.f32 %v1793, %v1902
    %v1908 = vadd.f32 %v1794, %v1905
    %1909 = vset.pattern.permute.xlu0 5
    %1910 = vperm.xlu0 %1909, %v1292
    %v1911 = vpop.permute.xlu0 %1910
    %1913 = vset.pattern.permute.xlu0 5
    %1914 = vperm.xlu0 %1913, %v1295
    %v1915 = vpop.permute.xlu0 %1914
    %v1917 = vperm.slane %v1319, 5
    %v1918 = vadd.f32 %v1911, %v1917
    %v1919 = vadd.f32 %v1915, %v1917
    %vm1920 = vcmp.gt.f32.partialorder %v1918, 0.0
    %vm1921 = vcmp.gt.f32.partialorder %v1919, 0.0
    %v1922 = vmul.f32 %v1918, 0.2
    %v1923 = vmul.f32 %v1919, 0.2
    %v1924 = vsel %vm1920, %v1918, %v1922
    %v1925 = vsel %vm1921, %v1919, %v1923
    %v1926 = vmul.f32 %v1924, 0.2940141
    %v1927 = vmul.f32 %v1925, 0.2940141
    %v1928 = vsel %vm140, %v1926, -1e+30
    %v1929 = vsel %vm141, %v1927, -1e+30
    %v1930 = vsel %vm244, %v1928, -inf
    %1931 = vmax.xlane.f32.xlu0 %v1930
    %v1932 = vpop.xlane.xlu0 %1931
    %v1933 = vsel %vm244, %v1929, -inf
    %1934 = vmax.xlane.f32.xlu0 %v1933
    %v1935 = vpop.xlane.xlu0 %1934
    %v1936 = vsub.f32 %v1928, %v1932
    %v1937 = vsub.f32 %v1929, %v1935
    %v1938 = vmul.f32 %v1936, 1.442695
    %v1939 = vpow.pop %v1938
    %v1940 = vmul.f32 %v1937, 1.442695
    %v1941 = vpow.pop %v1940
    %v1942 = vsel %vm140, %v1939, 0.0
    %v1943 = vsel %vm141, %v1941, 0.0
    %v1944 = vsel %vm244, %v1942, 0.0
    %1945 = vadd.xlane.f32.xlu0 %v1944
    %v1946 = vpop.xlane.xlu0 %1945
    %v1947 = vsel %vm244, %v1943, 0.0
    %1948 = vadd.xlane.f32.xlu0 %v1947
    %v1949 = vpop.xlane.xlu0 %1948
    %v1950 = vmax.f32 %v1946, 1e-16
    %v1951 = vmax.f32 %v1949, 1e-16
    %v1952 = vrcp.pop %v1950
    %v1953 = vmul.f32 %v1950, %v1952
    %v1954 = vsub.f32 1.0, %v1953
    %v1955 = vmul.f32 %v1952, %v1954
    %v1956 = vadd.f32 %v1952, %v1955
    %vm1957 = vweird.f32 %v1950
    %vm1958 = vweird.f32 %v1952
    %vm1959 = vmor %vm1957, %vm1958
    %v1960 = vsel %vm1959, %v1952, %v1956
    %v1961 = vand.u32 2147483647, %v1950
    %vm1962 = vcmp.eq.f32.partialorder %v1961, 8.507059e+37
    %v1963 = vand.u32 %v1950, 2147483648
    %v1964 = vor.u32 1.1754944e-38, %v1963
    %v1965 = vsel %vm1962, %v1964, %v1960
    %v1966 = vmul.f32 %v1942, %v1965
    %v1967 = vrcp.pop %v1951
    %v1968 = vmul.f32 %v1951, %v1967
    %v1969 = vsub.f32 1.0, %v1968
    %v1970 = vmul.f32 %v1967, %v1969
    %v1971 = vadd.f32 %v1967, %v1970
    %vm1972 = vweird.f32 %v1951
    %vm1973 = vweird.f32 %v1967
    %vm1974 = vmor %vm1972, %vm1973
    %v1975 = vsel %vm1974, %v1967, %v1971
    %v1976 = vand.u32 2147483647, %v1951
    %vm1977 = vcmp.eq.f32.partialorder %v1976, 8.507059e+37
    %v1978 = vand.u32 %v1951, 2147483648
    %v1979 = vor.u32 1.1754944e-38, %v1978
    %v1980 = vsel %vm1977, %v1979, %v1975
    %v1981 = vmul.f32 %v1943, %v1980
    %vm1982 = vcmp.lt.f32.partialorder %v1966, 0.03
    %vm1983 = vcmp.lt.f32.partialorder %v1981, 0.03
    %v1984 = vsel %vm1982, 0.0, %v1966
    %v1985 = vsel %vm1983, 0.0, %v1981
    %1986 = vrot.lane.b32.xlu0 %v1340, 88
    %v1987 = vpop.permute.xlu0 %1986
    %1988 = vrot.lane.b32.xlu0 %v1343, 88
    %v1989 = vpop.permute.xlu0 %1988
    %v1993 = vsel %vm244, %v1984, 0
    %v1996 = vsel %vm244, %v1985, 0
    %1998 = vmatpush.msra.mxu0 0.0
    %1999 = vmatpush.msra.mxu0 0.0
    %2000 = vmatpush.msra.mxu0 0.0
    %2001 = vmatpush.msra.mxu0 0.0
    %2002 = vmatpush.msra.mxu0 0.0
    %2003 = vmatpush.msra.mxu0 0.0
    %2004 = vmatpush.msra.mxu0 0.0
    %2005 = vmatpush.msra.mxu0 0.0
    %2006 = vmatpush.msra.mxu0 0.0
    %2007 = vmatpush.msra.mxu0 0.0
    %2008 = vmatpush.msra.mxu0 0.0
    %2009 = vmatpush.msra.mxu0 0.0
    %2010 = vmatpush.msra.mxu0 0.0
    %2011 = vmatpush.msra.mxu0 0.0
    %2012 = vmatpush.msra.mxu0 %v1989
    %2013 = vmatpush.msra.mxu0 %v1987
    %2014 = vmatmul.f32.gmra.mxu0 %v1993
    %v2015 = vpop.f32.mrf.mxu0
    %v2016 = vadd.f32 0.0, %v2015
    %2017 = vmatmul.f32.gmra.mxu0 %v1996
    %v2018 = vpop.f32.mrf.mxu0
    %v2019 = vadd.f32 0.0, %v2018
    %2020 = vdwg.mxu0
    %v2021 = vadd.f32 %v1907, %v2016
    %v2022 = vadd.f32 %v1908, %v2019
    %2023 = vset.pattern.permute.xlu0 6
    %2024 = vperm.xlu0 %2023, %v1292
    %v2025 = vpop.permute.xlu0 %2024
    %2027 = vset.pattern.permute.xlu0 6
    %2028 = vperm.xlu0 %2027, %v1295
    %v2029 = vpop.permute.xlu0 %2028
    %v2031 = vperm.slane %v1319, 6
    %v2032 = vadd.f32 %v2025, %v2031
    %v2033 = vadd.f32 %v2029, %v2031
    %vm2034 = vcmp.gt.f32.partialorder %v2032, 0.0
    %vm2035 = vcmp.gt.f32.partialorder %v2033, 0.0
    %v2036 = vmul.f32 %v2032, 0.2
    %v2037 = vmul.f32 %v2033, 0.2
    %v2038 = vsel %vm2034, %v2032, %v2036
    %v2039 = vsel %vm2035, %v2033, %v2037
    %v2040 = vmul.f32 %v2038, 0.2940141
    %v2041 = vmul.f32 %v2039, 0.2940141
    %v2042 = vsel %vm140, %v2040, -1e+30
    %v2043 = vsel %vm141, %v2041, -1e+30
    %v2044 = vsel %vm244, %v2042, -inf
    %2045 = vmax.xlane.f32.xlu0 %v2044
    %v2046 = vpop.xlane.xlu0 %2045
    %v2047 = vsel %vm244, %v2043, -inf
    %2048 = vmax.xlane.f32.xlu0 %v2047
    %v2049 = vpop.xlane.xlu0 %2048
    %v2050 = vsub.f32 %v2042, %v2046
    %v2051 = vsub.f32 %v2043, %v2049
    %v2052 = vmul.f32 %v2050, 1.442695
    %v2053 = vpow.pop %v2052
    %v2054 = vmul.f32 %v2051, 1.442695
    %v2055 = vpow.pop %v2054
    %v2056 = vsel %vm140, %v2053, 0.0
    %v2057 = vsel %vm141, %v2055, 0.0
    %v2058 = vsel %vm244, %v2056, 0.0
    %2059 = vadd.xlane.f32.xlu0 %v2058
    %v2060 = vpop.xlane.xlu0 %2059
    %v2061 = vsel %vm244, %v2057, 0.0
    %2062 = vadd.xlane.f32.xlu0 %v2061
    %v2063 = vpop.xlane.xlu0 %2062
    %v2064 = vmax.f32 %v2060, 1e-16
    %v2065 = vmax.f32 %v2063, 1e-16
    %v2066 = vrcp.pop %v2064
    %v2067 = vmul.f32 %v2064, %v2066
    %v2068 = vsub.f32 1.0, %v2067
    %v2069 = vmul.f32 %v2066, %v2068
    %v2070 = vadd.f32 %v2066, %v2069
    %vm2071 = vweird.f32 %v2064
    %vm2072 = vweird.f32 %v2066
    %vm2073 = vmor %vm2071, %vm2072
    %v2074 = vsel %vm2073, %v2066, %v2070
    %v2075 = vand.u32 2147483647, %v2064
    %vm2076 = vcmp.eq.f32.partialorder %v2075, 8.507059e+37
    %v2077 = vand.u32 %v2064, 2147483648
    %v2078 = vor.u32 1.1754944e-38, %v2077
    %v2079 = vsel %vm2076, %v2078, %v2074
    %v2080 = vmul.f32 %v2056, %v2079
    %v2081 = vrcp.pop %v2065
    %v2082 = vmul.f32 %v2065, %v2081
    %v2083 = vsub.f32 1.0, %v2082
    %v2084 = vmul.f32 %v2081, %v2083
    %v2085 = vadd.f32 %v2081, %v2084
    %vm2086 = vweird.f32 %v2065
    %vm2087 = vweird.f32 %v2081
    %vm2088 = vmor %vm2086, %vm2087
    %v2089 = vsel %vm2088, %v2081, %v2085
    %v2090 = vand.u32 2147483647, %v2065
    %vm2091 = vcmp.eq.f32.partialorder %v2090, 8.507059e+37
    %v2092 = vand.u32 %v2065, 2147483648
    %v2093 = vor.u32 1.1754944e-38, %v2092
    %v2094 = vsel %vm2091, %v2093, %v2089
    %v2095 = vmul.f32 %v2057, %v2094
    %vm2096 = vcmp.lt.f32.partialorder %v2080, 0.03
    %vm2097 = vcmp.lt.f32.partialorder %v2095, 0.03
    %v2098 = vsel %vm2096, 0.0, %v2080
    %v2099 = vsel %vm2097, 0.0, %v2095
    %2100 = vrot.lane.b32.xlu0 %v1340, 80
    %v2101 = vpop.permute.xlu0 %2100
    %2102 = vrot.lane.b32.xlu0 %v1343, 80
    %v2103 = vpop.permute.xlu0 %2102
    %v2107 = vsel %vm244, %v2098, 0
    %v2110 = vsel %vm244, %v2099, 0
    %2112 = vmatpush.msra.mxu0 0.0
    %2113 = vmatpush.msra.mxu0 0.0
    %2114 = vmatpush.msra.mxu0 0.0
    %2115 = vmatpush.msra.mxu0 0.0
    %2116 = vmatpush.msra.mxu0 0.0
    %2117 = vmatpush.msra.mxu0 0.0
    %2118 = vmatpush.msra.mxu0 0.0
    %2119 = vmatpush.msra.mxu0 0.0
    %2120 = vmatpush.msra.mxu0 0.0
    %2121 = vmatpush.msra.mxu0 0.0
    %2122 = vmatpush.msra.mxu0 0.0
    %2123 = vmatpush.msra.mxu0 0.0
    %2124 = vmatpush.msra.mxu0 0.0
    %2125 = vmatpush.msra.mxu0 0.0
    %2126 = vmatpush.msra.mxu0 %v2103
    %2127 = vmatpush.msra.mxu0 %v2101
    %2128 = vmatmul.f32.gmra.mxu0 %v2107
    %v2129 = vpop.f32.mrf.mxu0
    %v2130 = vadd.f32 0.0, %v2129
    %2131 = vmatmul.f32.gmra.mxu0 %v2110
    %v2132 = vpop.f32.mrf.mxu0
    %v2133 = vadd.f32 0.0, %v2132
    %2134 = vdwg.mxu0
    %v2135 = vadd.f32 %v2021, %v2130
    %v2136 = vadd.f32 %v2022, %v2133
    %2137 = vset.pattern.permute.xlu0 7
    %2138 = vperm.xlu0 %2137, %v1292
    %v2139 = vpop.permute.xlu0 %2138
    %2141 = vset.pattern.permute.xlu0 7
    %2142 = vperm.xlu0 %2141, %v1295
    %v2143 = vpop.permute.xlu0 %2142
    %v2145 = vperm.slane %v1319, 7
    %v2146 = vadd.f32 %v2139, %v2145
    %v2147 = vadd.f32 %v2143, %v2145
    %vm2148 = vcmp.gt.f32.partialorder %v2146, 0.0
    %vm2149 = vcmp.gt.f32.partialorder %v2147, 0.0
    %v2150 = vmul.f32 %v2146, 0.2
    %v2151 = vmul.f32 %v2147, 0.2
    %v2152 = vsel %vm2148, %v2146, %v2150
    %v2153 = vsel %vm2149, %v2147, %v2151
    %v2154 = vmul.f32 %v2152, 0.2940141
    %v2155 = vmul.f32 %v2153, 0.2940141
    %v2156 = vsel %vm140, %v2154, -1e+30
    %v2157 = vsel %vm141, %v2155, -1e+30
    %v2158 = vsel %vm244, %v2156, -inf
    %2159 = vmax.xlane.f32.xlu0 %v2158
    %v2160 = vpop.xlane.xlu0 %2159
    %v2161 = vsel %vm244, %v2157, -inf
    %2162 = vmax.xlane.f32.xlu0 %v2161
    %v2163 = vpop.xlane.xlu0 %2162
    %v2164 = vsub.f32 %v2156, %v2160
    %v2165 = vsub.f32 %v2157, %v2163
    %v2166 = vmul.f32 %v2164, 1.442695
    %v2167 = vpow.pop %v2166
    %v2168 = vmul.f32 %v2165, 1.442695
    %v2169 = vpow.pop %v2168
    %v2170 = vsel %vm140, %v2167, 0.0
    %v2171 = vsel %vm141, %v2169, 0.0
    %v2172 = vsel %vm244, %v2170, 0.0
    %2173 = vadd.xlane.f32.xlu0 %v2172
    %v2174 = vpop.xlane.xlu0 %2173
    %v2175 = vsel %vm244, %v2171, 0.0
    %2176 = vadd.xlane.f32.xlu0 %v2175
    %v2177 = vpop.xlane.xlu0 %2176
    %v2178 = vmax.f32 %v2174, 1e-16
    %v2179 = vmax.f32 %v2177, 1e-16
    %v2180 = vrcp.pop %v2178
    %v2181 = vmul.f32 %v2178, %v2180
    %v2182 = vsub.f32 1.0, %v2181
    %v2183 = vmul.f32 %v2180, %v2182
    %v2184 = vadd.f32 %v2180, %v2183
    %vm2185 = vweird.f32 %v2178
    %vm2186 = vweird.f32 %v2180
    %vm2187 = vmor %vm2185, %vm2186
    %v2188 = vsel %vm2187, %v2180, %v2184
    %v2189 = vand.u32 2147483647, %v2178
    %vm2190 = vcmp.eq.f32.partialorder %v2189, 8.507059e+37
    %v2191 = vand.u32 %v2178, 2147483648
    %v2192 = vor.u32 1.1754944e-38, %v2191
    %v2193 = vsel %vm2190, %v2192, %v2188
    %v2194 = vmul.f32 %v2170, %v2193
    %v2195 = vrcp.pop %v2179
    %v2196 = vmul.f32 %v2179, %v2195
    %v2197 = vsub.f32 1.0, %v2196
    %v2198 = vmul.f32 %v2195, %v2197
    %v2199 = vadd.f32 %v2195, %v2198
    %vm2200 = vweird.f32 %v2179
    %vm2201 = vweird.f32 %v2195
    %vm2202 = vmor %vm2200, %vm2201
    %v2203 = vsel %vm2202, %v2195, %v2199
    %v2204 = vand.u32 2147483647, %v2179
    %vm2205 = vcmp.eq.f32.partialorder %v2204, 8.507059e+37
    %v2206 = vand.u32 %v2179, 2147483648
    %v2207 = vor.u32 1.1754944e-38, %v2206
    %v2208 = vsel %vm2205, %v2207, %v2203
    %v2209 = vmul.f32 %v2171, %v2208
    %vm2210 = vcmp.lt.f32.partialorder %v2194, 0.03
    %vm2211 = vcmp.lt.f32.partialorder %v2209, 0.03
    %v2212 = vsel %vm2210, 0.0, %v2194
    %v2213 = vsel %vm2211, 0.0, %v2209
    %2214 = vrot.lane.b32.xlu0 %v1340, 72
    %v2215 = vpop.permute.xlu0 %2214
    %2216 = vrot.lane.b32.xlu0 %v1343, 72
    %v2217 = vpop.permute.xlu0 %2216
    %v2221 = vsel %vm244, %v2212, 0
    %v2224 = vsel %vm244, %v2213, 0
    %2226 = vmatpush.msra.mxu0 0.0
    %2227 = vmatpush.msra.mxu0 0.0
    %2228 = vmatpush.msra.mxu0 0.0
    %2229 = vmatpush.msra.mxu0 0.0
    %2230 = vmatpush.msra.mxu0 0.0
    %2231 = vmatpush.msra.mxu0 0.0
    %2232 = vmatpush.msra.mxu0 0.0
    %2233 = vmatpush.msra.mxu0 0.0
    %2234 = vmatpush.msra.mxu0 0.0
    %2235 = vmatpush.msra.mxu0 0.0
    %2236 = vmatpush.msra.mxu0 0.0
    %2237 = vmatpush.msra.mxu0 0.0
    %2238 = vmatpush.msra.mxu0 0.0
    %2239 = vmatpush.msra.mxu0 0.0
    %2240 = vmatpush.msra.mxu0 %v2217
    %2241 = vmatpush.msra.mxu0 %v2215
    %2242 = vmatmul.f32.gmra.mxu0 %v2221
    %v2243 = vpop.f32.mrf.mxu0
    %v2244 = vadd.f32 0.0, %v2243
    %2245 = vmatmul.f32.gmra.mxu0 %v2224
    %v2246 = vpop.f32.mrf.mxu0
    %v2247 = vadd.f32 0.0, %v2246
    %2248 = vdwg.mxu0
    %v2249 = vadd.f32 %v2135, %v2244
    %v2250 = vadd.f32 %v2136, %v2247
    %v2251 = vld [vmem:[%s11 + $0x2] sm:$0x1]
    %v2252 = vperm.slane %v2251, 0
    %v2253 = vadd.f32 %v2249, %v2252
    %v2254 = vadd.f32 %v2250, %v2252
    %vm2255 = vcmp.gt.f32.partialorder %v2253, 0.0
    %vm2256 = vcmp.gt.f32.partialorder %v2254, 0.0
    %v2257 = vmul.f32 %v2253, 0.01
    %v2258 = vmul.f32 %v2254, 0.01
    %v2259 = vsel %vm2255, %v2253, %v2257
    %v2260 = vsel %vm2256, %v2254, %v2258
    %v2261 = vadd.f32 %v2259, %v136
    %v2262 = vadd.f32 %v2260, %v137
    %v2263 = vsel %vm143, %v2261, 0.0
    %v2264 = vsel %vm143, %v2262, 0.0
    %v2265 = vadd.f32 %v2263, %v2264
    %v2266 = vrot.slane %v2265, 4
    %v2267 = vadd.f32 %v2265, %v2266
    %v2268 = vrot.slane %v2267, 2
    %v2269 = vadd.f32 %v2267, %v2268
    %v2270 = vrot.slane %v2269, 1
    %v2271 = vadd.f32 %v2269, %v2270
    %v2272 = vmul.f32 %v2271, %v1155
    %v2273 = vmul.f32 %v2261, %v2261
    %v2274 = vmul.f32 %v2262, %v2262
    %v2275 = vsel %vm143, %v2273, 0.0
    %v2276 = vsel %vm143, %v2274, 0.0
    %v2277 = vadd.f32 %v2275, %v2276
    %v2278 = vrot.slane %v2277, 4
    %v2279 = vadd.f32 %v2277, %v2278
    %v2280 = vrot.slane %v2279, 2
    %v2281 = vadd.f32 %v2279, %v2280
    %v2282 = vrot.slane %v2281, 1
    %v2283 = vadd.f32 %v2281, %v2282
    %v2284 = vmul.f32 %v2283, %v1155
    %v2285 = vmul.f32 %v2272, %v2272
    %v2286 = vsub.f32 %v2284, %v2285
    %v2287 = vmax.f32 %v2286, 0.0
    %v2288 = vsub.f32 %v2261, %v2272
    %v2289 = vsub.f32 %v2262, %v2272
    %v2290 = vadd.f32 %v2287, 1e-05
    %v2291 = vrsqrt.pop %v2290
    %v2292 = vmul.f32 %v2291, %v2290
    %v2293 = vmul.f32 %v2292, %v2291
    %v2294 = vmul.f32 0.5, %v2293
    %v2295 = vsub.f32 1.5, %v2294
    %v2296 = vmul.f32 %v2291, %v2295
    %vm2297 = vweird.f32 %v2290
    %vm2298 = vweird.f32 %v2291
    %vm2299 = vmor %vm2297, %vm2298
    %v2300 = vsel %vm2299, %v2291, %v2296
    %v2301 = vmul.f32 %v2288, %v2300
    %v2302 = vmul.f32 %v2289, %v2300
    %v2303 = vld [vmem:[#allocation12] sm:$0xff]
    %v2304 = vld [vmem:[%s11 + $0x3] sm:$0x1]
    %v2305 = vperm.slane %v2304, 0
    %v2307 = vsel %vm143, %v2301, 0
    %v2310 = vsel %vm143, %v2302, 0
    %2312 = vmatpush.msra.mxu0 0.0
    %2313 = vmatpush.msra.mxu0 0.0
    %2314 = vmatpush.msra.mxu0 0.0
    %2315 = vmatpush.msra.mxu0 0.0
    %2316 = vmatpush.msra.mxu0 0.0
    %2317 = vmatpush.msra.mxu0 0.0
    %2318 = vmatpush.msra.mxu0 0.0
    %2319 = vmatpush.msra.mxu0 0.0
    %2320 = vmatpush.msra.mxu0 0.0
    %2321 = vmatpush.msra.mxu0 0.0
    %2322 = vmatpush.msra.mxu0 0.0
    %2323 = vmatpush.msra.mxu0 0.0
    %2324 = vmatpush.msra.mxu0 0.0
    %2325 = vmatpush.msra.mxu0 0.0
    %2326 = vmatpush.msra.mxu0 0.0
    %2327 = vmatpush.msra.mxu0 %v2303
    %2328 = vmatmul.f32.gmra.mxu0 %v2307
    %v2329 = vpop.f32.mrf.mxu0
    %v2330 = vadd.f32 %v2305, %v2329
    %2331 = vmatmul.f32.gmra.mxu0 %v2310
    %v2332 = vpop.f32.mrf.mxu0
    %v2333 = vadd.f32 %v2305, %v2332
    %2334 = vdwg.mxu0
    %vm2335 = vcmp.gt.f32.partialorder %v2330, 0.0
    %vm2336 = vcmp.gt.f32.partialorder %v2333, 0.0
    %v2337 = vmul.f32 %v2330, 0.01
    %v2338 = vmul.f32 %v2333, 0.01
    %v2339 = vsel %vm2335, %v2330, %v2337
    %v2340 = vsel %vm2336, %v2333, %v2338
    %v2341 = vadd.f32 %v2339, %v136
    %v2342 = vadd.f32 %v2340, %v137
    %v2343 = vsel %vm143, %v2341, 0.0
    %v2344 = vsel %vm143, %v2342, 0.0
    %v2345 = vadd.f32 %v2343, %v2344
    %v2346 = vrot.slane %v2345, 4
    %v2347 = vadd.f32 %v2345, %v2346
    %v2348 = vrot.slane %v2347, 2
    %v2349 = vadd.f32 %v2347, %v2348
    %v2350 = vrot.slane %v2349, 1
    %v2351 = vadd.f32 %v2349, %v2350
    %v2352 = vmul.f32 %v2351, %v1155
    %v2353 = vmul.f32 %v2341, %v2341
    %v2354 = vmul.f32 %v2342, %v2342
    %v2355 = vsel %vm143, %v2353, 0.0
    %v2356 = vsel %vm143, %v2354, 0.0
    %v2357 = vadd.f32 %v2355, %v2356
    %v2358 = vrot.slane %v2357, 4
    %v2359 = vadd.f32 %v2357, %v2358
    %v2360 = vrot.slane %v2359, 2
    %v2361 = vadd.f32 %v2359, %v2360
    %v2362 = vrot.slane %v2361, 1
    %v2363 = vadd.f32 %v2361, %v2362
    %v2364 = vmul.f32 %v2363, %v1155
    %v2365 = vmul.f32 %v2352, %v2352
    %v2366 = vsub.f32 %v2364, %v2365
    %v2367 = vmax.f32 %v2366, 0.0
    %v2368 = vsub.f32 %v2341, %v2352
    %v2369 = vsub.f32 %v2342, %v2352
    %v2370 = vadd.f32 %v2367, 1e-05
    %v2371 = vrsqrt.pop %v2370
    %v2372 = vmul.f32 %v2371, %v2370
    %v2373 = vmul.f32 %v2372, %v2371
    %v2374 = vmul.f32 0.5, %v2373
    %v2375 = vsub.f32 1.5, %v2374
    %v2376 = vmul.f32 %v2371, %v2375
    %vm2377 = vweird.f32 %v2370
    %vm2378 = vweird.f32 %v2371
    %vm2379 = vmor %vm2377, %vm2378
    %v2380 = vsel %vm2379, %v2371, %v2376
    %v2381 = vmul.f32 %v2368, %v2380
    %v2382 = vmul.f32 %v2369, %v2380
    %v2383 = vld [vmem:[%s10] sm:$0xff]
    %v2384 = vld [vmem:[%s11 + $0x4] sm:$0x1]
    %v2385 = vperm.slane %v2384, 0
    %v2387 = vsel %vm143, %v2381, 0
    %v2390 = vsel %vm143, %v2382, 0
    %2392 = vmatpush.msra.mxu0 0.0
    %2393 = vmatpush.msra.mxu0 0.0
    %2394 = vmatpush.msra.mxu0 0.0
    %2395 = vmatpush.msra.mxu0 0.0
    %2396 = vmatpush.msra.mxu0 0.0
    %2397 = vmatpush.msra.mxu0 0.0
    %2398 = vmatpush.msra.mxu0 0.0
    %2399 = vmatpush.msra.mxu0 0.0
    %2400 = vmatpush.msra.mxu0 0.0
    %2401 = vmatpush.msra.mxu0 0.0
    %2402 = vmatpush.msra.mxu0 0.0
    %2403 = vmatpush.msra.mxu0 0.0
    %2404 = vmatpush.msra.mxu0 0.0
    %2405 = vmatpush.msra.mxu0 0.0
    %2406 = vmatpush.msra.mxu0 0.0
    %2407 = vmatpush.msra.mxu0 %v2383
    %2408 = vmatmul.f32.gmra.mxu0 %v2387
    %v2409 = vpop.f32.mrf.mxu0
    %v2410 = vadd.f32 %v2385, %v2409
    %2411 = vmatmul.f32.gmra.mxu0 %v2390
    %v2412 = vpop.f32.mrf.mxu0
    %v2413 = vadd.f32 %v2385, %v2412
    %2414 = vdwg.mxu0
    %vm2415 = vcmask 7168
    %2416 = vst.msk [vmem:[%s12] sm:$0xff] %vm2415, %v2410
    %2417 = vst.msk [vmem:[%s12 + $0x8] sm:$0xff] %vm2415, %v2413
    // Predicated region
    $region78: #{tpu_custom_call.1} parent=1 // pred_check
      _
    $region79: #{tpu_custom_call.1} parent=1 // pred_check_branch
      %2419 = sbr.rel (0) target = $region81
    $region80: #{tpu_custom_call.1} parent=1 // pred_region
      _
    $region81: #{tpu_custom_call.1} parent=1 // pred_fallthru
      _
    // Predicated region
    $region82: #{tpu_custom_call.1} parent=1 // pred_check
      _
    $region83: #{tpu_custom_call.1} parent=1 // pred_check_branch
      %2421 = sbr.rel (0) target = $region85
    $region84: #{tpu_custom_call.1} parent=1 // pred_region
      _
    $region85: #{tpu_custom_call.1} parent=1 // pred_fallthru
      _
    %2422 = vsyncpa [#allocation3], 1
    %2423 = vsyncpa [#allocation5], 1
    %2424 = vsyncpa [#allocation8], 1
    %2425 = vsyncpa [#allocation11], 1

</llo_original>
